<compile_context>
chip_gen: v6e
topology: v6e:2x2x1
jax: 0.10.0
libtpu: 0.0.40
codegen_flags: <defaults>
</compile_context>

<pallas_src>
import jax
import jax.numpy as jnp
from jax.experimental import pallas as pl
from jax.experimental.pallas import tpu as pltpu

EPS = 1e-5


def make_kernel(H, W):
    Wp = W + 2                 # padded width
    HWp = H * Wp               # flattened output rows (incl. 2 garbage cols per row)
    inv_count = 1.0 / (H * W)  # number of valid pixels for BN stats (N == 1)

    def kernel(x_ref, w_ref, gamma_ref, beta_ref, o_ref, acc_ref):
        # x_ref:     ((H+3)*Wp, Cg)  bf16  flattened, padded input for this group
        # w_ref:     (9, Cg, Cg)     bf16  taps in kh*3+kw order
        # gamma_ref: (1, Cg)         f32
        # beta_ref:  (1, Cg)         f32
        # o_ref:     (HWp, Cg)       f32   flattened output (garbage cols dropped in glue)
        # acc_ref:   (HWp, Cg)       f32   VMEM accumulator scratch

        # ---- grouped 3x3 conv as 9 MXU matmuls, accumulated in VMEM ----
        for t in range(9):
            kh, kw = divmod(t, 3)
            patch = x_ref[pl.ds(kh * Wp + kw, HWp), :]                  # (HWp, Cg)
            contrib = jnp.dot(patch, w_ref[t],
                              preferred_element_type=jnp.float32)
            if t == 0:
                acc_ref[...] = contrib
            else:
                acc_ref[...] += contrib

        acc = acc_ref[...]                                              # (HWp, Cg) f32

        # ---- one-pass BN batch stats over the H*W valid rows ----
        row = jax.lax.broadcasted_iota(jnp.int32, (HWp, 1), 0)
        valid = (row % Wp) < W                                          # mask garbage cols
        masked = jnp.where(valid, acc, 0.0)
        s = jnp.sum(masked, axis=0, keepdims=True)                      # (1, Cg)
        sq = jnp.sum(masked * acc, axis=0, keepdims=True)               # (1, Cg)
        mean = s * inv_count
        var = jnp.maximum(sq * inv_count - mean * mean, 0.0)            # biased variance
        inv_std = jax.lax.rsqrt(var + EPS)

        # ---- fused affine + ReLU ----
        scale = gamma_ref[...] * inv_std                                # (1, Cg)
        shift = beta_ref[...] - mean * scale                            # (1, Cg)
        o_ref[...] = jnp.maximum(acc * scale + shift, 0.0).astype(o_ref.dtype)

    return kernel


def conv_bn_relu(x_nchw, w_oihw, gamma, beta, groups=7):
    N, C, H, W = x_nchw.shape
    assert N == 1, "kernel specializes BN batch stats for N=1"
    Cg = C // groups
    Wp = W + 2
    HWp = H * Wp
    Hp = H + 3  # +1 top pad, +2 bottom pad (extra row keeps flattened tap slices in-bounds)

    # ---- glue: layout transforms in plain JAX (I/O contract stays NCHW) ----
    # input: NCHW -> (groups, H, W, Cg), cast bf16, pad, flatten spatial
    xg = x_nchw[0].reshape(groups, Cg, H, W).transpose(0, 2, 3, 1)
    xg = xg.astype(jnp.bfloat16)
    xg = jnp.pad(xg, ((0, 0), (1, 2), (1, 1), (0, 0)))                  # (g, H+3, Wp, Cg)
    xg = xg.reshape(groups, Hp * Wp, Cg)

    # weight: torch (O, I_g, kh, kw) -> (groups, kh*kw, I_g, O_g), cast bf16
    wg = w_oihw.reshape(groups, Cg, Cg, 3, 3)                           # (g, co, ci, kh, kw)
    wg = wg.transpose(0, 3, 4, 2, 1).reshape(groups, 9, Cg, Cg)         # (g, 9, ci, co)
    wg = wg.astype(jnp.bfloat16)

    gamma_g = gamma.reshape(groups, 1, Cg).astype(jnp.float32)
    beta_g = beta.reshape(groups, 1, Cg).astype(jnp.float32)

    out = pl.pallas_call(
        make_kernel(H, W),
        out_shape=jax.ShapeDtypeStruct((groups, HWp, Cg), jnp.float32),
        grid_spec=pltpu.PrefetchScalarGridSpec(
            num_scalar_prefetch=0,
            grid=(groups,),
            in_specs=[
                pl.BlockSpec((None, Hp * Wp, Cg), lambda g: (g, 0, 0)),
                pl.BlockSpec((None, 9, Cg, Cg), lambda g: (g, 0, 0, 0)),
                pl.BlockSpec((None, 1, Cg), lambda g: (g, 0, 0)),
                pl.BlockSpec((None, 1, Cg), lambda g: (g, 0, 0)),
            ],
            out_specs=pl.BlockSpec((None, HWp, Cg), lambda g: (g, 0, 0)),
            scratch_shapes=[pltpu.VMEM((HWp, Cg), jnp.float32)],
        ),
        compiler_params=pltpu.CompilerParams(
            dimension_semantics=("parallel",)),
    )(xg, wg, gamma_g, beta_g)

    # drop the 2 garbage columns per row, back to NCHW
    out = out.reshape(groups, H, Wp, Cg)[:, :, :W, :]                   # (g, H, W, Cg)
    out = out.transpose(0, 3, 1, 2).reshape(1, C, H, W)
    return out


def reference(x_nchw, w_oihw, gamma, beta, groups=7):
    y = jax.lax.conv_general_dilated(
        x_nchw, w_oihw, window_strides=(1, 1), padding=((1, 1), (1, 1)),
        dimension_numbers=("NCHW", "OIHW", "NCHW"),
        feature_group_count=groups)
    mean = y.mean(axis=(0, 2, 3), keepdims=True)
    var = ((y - mean) ** 2).mean(axis=(0, 2, 3), keepdims=True)
    yn = (y - mean) * jax.lax.rsqrt(var + EPS)
    yn = yn * gamma.reshape(1, -1, 1, 1) + beta.reshape(1, -1, 1, 1)
    return jnp.maximum(yn, 0.0)


if __name__ == "__main__":
    N, C, H, W = 1, 896, 14, 14
    groups = 7
    Cg = C // groups

    key = jax.random.PRNGKey(0)
    kx, kw_, kg, kb = jax.random.split(key, 4)

    x = jax.random.normal(kx, (N, C, H, W), jnp.float32)
    # Conv2d weight shape: (out_channels, in_channels // groups, 3, 3)
    w = jax.random.normal(kw_, (C, Cg, 3, 3), jnp.float32) * 0.05
    gamma = 1.0 + 0.1 * jax.random.normal(kg, (C,), jnp.float32)
    beta = 0.1 * jax.random.normal(kb, (C,), jnp.float32)

    out = conv_bn_relu(x, w, gamma, beta, groups=groups)
    out = jax.block_until_ready(out)

    ref = reference(x, w, gamma, beta, groups=groups)
    assert out.shape == (N, C, H, W), out.shape
    # Kernel uses bf16 activations/weights on the MXU (K = 9*128 = 1152 contraction,
    # f32 accumulation); tolerance widened vs. the pure-f32 reference accordingly.
    max_err = float(jnp.max(jnp.abs(out - ref)))
    assert jnp.allclose(out, ref, atol=3e-2, rtol=3e-2), max_err

    print("KERNEL_OK")
</pallas_src>

<mosaic_0001>
module attributes {stable_mosaic.version = 11 : i64} {
  func.func @kernel(%arg0: i32, %arg1: memref<1x272x128xbf16, #tpu.memory_space<vmem>>, %arg2: memref<1x9x128x128xbf16, #tpu.memory_space<vmem>>, %arg3: memref<1x1x128xf32, #tpu.memory_space<vmem>>, %arg4: memref<1x1x128xf32, #tpu.memory_space<vmem>>, %arg5: memref<1x224x128xf32, #tpu.memory_space<vmem>>, %arg6: memref<224x128xf32, #tpu.memory_space<vmem>>) attributes {dimension_semantics = [#tpu.dimension_semantics<parallel>], iteration_bounds = array<i64: 7>, scalar_prefetch = 0 : i64, scratch_operands = 1 : i64, tpu.core_type = #tpu.core_type<tc>, window_params = [{transform_indices = @transform_0, window_bounds = array<i64: 1, 272, 128>}, {transform_indices = @transform_1, window_bounds = array<i64: 1, 9, 128, 128>}, {transform_indices = @transform_2, window_bounds = array<i64: 1, 1, 128>}, {transform_indices = @transform_3, window_bounds = array<i64: 1, 1, 128>}, {transform_indices = @transform_4, window_bounds = array<i64: 1, 224, 128>}]} {
    %c0 = arith.constant 0 : index
    %c0_0 = arith.constant 0 : index
    %c0_1 = arith.constant 0 : index
    %0 = vector.load %arg1[%c0, %c0_0, %c0_1] : memref<1x272x128xbf16, #tpu.memory_space<vmem>>, vector<1x224x128xbf16>
    %1 = vector.shape_cast %0 : vector<1x224x128xbf16> to vector<224x128xbf16>
    %c0_2 = arith.constant 0 : index
    %c0_3 = arith.constant 0 : index
    %c0_4 = arith.constant 0 : index
    %c0_5 = arith.constant 0 : index
    %2 = vector.load %arg2[%c0_2, %c0_3, %c0_4, %c0_5] : memref<1x9x128x128xbf16, #tpu.memory_space<vmem>>, vector<1x1x128x128xbf16>
    %3 = vector.shape_cast %2 : vector<1x1x128x128xbf16> to vector<128x128xbf16>
    %cst = arith.constant dense<0.000000e+00> : vector<224x128xf32>
    %4 = tpu.matmul %1, %3, %cst {dimension_numbers = #tpu.dot_dimension_numbers<[1], [0], [0], [1], [0, 0, 1, 1], [], []>} : vector<224x128xbf16>, vector<128x128xbf16>, vector<224x128xf32> -> vector<224x128xf32>
    %c0_6 = arith.constant 0 : index
    %c0_7 = arith.constant 0 : index
    %5 = vector.load %arg6[%c0_6, %c0_7] : memref<224x128xf32, #tpu.memory_space<vmem>>, vector<224x128xf32>
    tpu.vector_store %arg6[%c0_6, %c0_7], %4 {strides = array<i32>} : memref<224x128xf32, #tpu.memory_space<vmem>>, vector<224x128xf32>,
    %c0_8 = arith.constant 0 : index
    %c1 = arith.constant 1 : index
    %c0_9 = arith.constant 0 : index
    %6 = vector.load %arg1[%c0_8, %c1, %c0_9] : memref<1x272x128xbf16, #tpu.memory_space<vmem>>, vector<1x224x128xbf16>
    %7 = vector.shape_cast %6 : vector<1x224x128xbf16> to vector<224x128xbf16>
    %c0_10 = arith.constant 0 : index
    %c1_11 = arith.constant 1 : index
    %c0_12 = arith.constant 0 : index
    %c0_13 = arith.constant 0 : index
    %8 = vector.load %arg2[%c0_10, %c1_11, %c0_12, %c0_13] : memref<1x9x128x128xbf16, #tpu.memory_space<vmem>>, vector<1x1x128x128xbf16>
    %9 = vector.shape_cast %8 : vector<1x1x128x128xbf16> to vector<128x128xbf16>
    %cst_14 = arith.constant dense<0.000000e+00> : vector<224x128xf32>
    %10 = tpu.matmul %7, %9, %cst_14 {dimension_numbers = #tpu.dot_dimension_numbers<[1], [0], [0], [1], [0, 0, 1, 1], [], []>} : vector<224x128xbf16>, vector<128x128xbf16>, vector<224x128xf32> -> vector<224x128xf32>
    %c0_15 = arith.constant 0 : index
    %c0_16 = arith.constant 0 : index
    %11 = vector.load %arg6[%c0_15, %c0_16] : memref<224x128xf32, #tpu.memory_space<vmem>>, vector<224x128xf32>
    %12 = arith.addf %11, %10 : vector<224x128xf32>
    %c0_17 = arith.constant 0 : index
    %c0_18 = arith.constant 0 : index
    %13 = vector.load %arg6[%c0_17, %c0_18] : memref<224x128xf32, #tpu.memory_space<vmem>>, vector<224x128xf32>
    tpu.vector_store %arg6[%c0_17, %c0_18], %12 {strides = array<i32>} : memref<224x128xf32, #tpu.memory_space<vmem>>, vector<224x128xf32>,
    %c0_19 = arith.constant 0 : index
    %c2 = arith.constant 2 : index
    %c0_20 = arith.constant 0 : index
    %14 = vector.load %arg1[%c0_19, %c2, %c0_20] : memref<1x272x128xbf16, #tpu.memory_space<vmem>>, vector<1x224x128xbf16>
    %15 = vector.shape_cast %14 : vector<1x224x128xbf16> to vector<224x128xbf16>
    %c0_21 = arith.constant 0 : index
    %c2_22 = arith.constant 2 : index
    %c0_23 = arith.constant 0 : index
    %c0_24 = arith.constant 0 : index
    %16 = vector.load %arg2[%c0_21, %c2_22, %c0_23, %c0_24] : memref<1x9x128x128xbf16, #tpu.memory_space<vmem>>, vector<1x1x128x128xbf16>
    %17 = vector.shape_cast %16 : vector<1x1x128x128xbf16> to vector<128x128xbf16>
    %cst_25 = arith.constant dense<0.000000e+00> : vector<224x128xf32>
    %18 = tpu.matmul %15, %17, %cst_25 {dimension_numbers = #tpu.dot_dimension_numbers<[1], [0], [0], [1], [0, 0, 1, 1], [], []>} : vector<224x128xbf16>, vector<128x128xbf16>, vector<224x128xf32> -> vector<224x128xf32>
    %c0_26 = arith.constant 0 : index
    %c0_27 = arith.constant 0 : index
    %19 = vector.load %arg6[%c0_26, %c0_27] : memref<224x128xf32, #tpu.memory_space<vmem>>, vector<224x128xf32>
    %20 = arith.addf %19, %18 : vector<224x128xf32>
    %c0_28 = arith.constant 0 : index
    %c0_29 = arith.constant 0 : index
    %21 = vector.load %arg6[%c0_28, %c0_29] : memref<224x128xf32, #tpu.memory_space<vmem>>, vector<224x128xf32>
    tpu.vector_store %arg6[%c0_28, %c0_29], %20 {strides = array<i32>} : memref<224x128xf32, #tpu.memory_space<vmem>>, vector<224x128xf32>,
    %c0_30 = arith.constant 0 : index
    %c16 = arith.constant 16 : index
    %c0_31 = arith.constant 0 : index
    %22 = vector.load %arg1[%c0_30, %c16, %c0_31] : memref<1x272x128xbf16, #tpu.memory_space<vmem>>, vector<1x224x128xbf16>
    %23 = vector.shape_cast %22 : vector<1x224x128xbf16> to vector<224x128xbf16>
    %c0_32 = arith.constant 0 : index
    %c3 = arith.constant 3 : index
    %c0_33 = arith.constant 0 : index
    %c0_34 = arith.constant 0 : index
    %24 = vector.load %arg2[%c0_32, %c3, %c0_33, %c0_34] : memref<1x9x128x128xbf16, #tpu.memory_space<vmem>>, vector<1x1x128x128xbf16>
    %25 = vector.shape_cast %24 : vector<1x1x128x128xbf16> to vector<128x128xbf16>
    %cst_35 = arith.constant dense<0.000000e+00> : vector<224x128xf32>
    %26 = tpu.matmul %23, %25, %cst_35 {dimension_numbers = #tpu.dot_dimension_numbers<[1], [0], [0], [1], [0, 0, 1, 1], [], []>} : vector<224x128xbf16>, vector<128x128xbf16>, vector<224x128xf32> -> vector<224x128xf32>
    %c0_36 = arith.constant 0 : index
    %c0_37 = arith.constant 0 : index
    %27 = vector.load %arg6[%c0_36, %c0_37] : memref<224x128xf32, #tpu.memory_space<vmem>>, vector<224x128xf32>
    %28 = arith.addf %27, %26 : vector<224x128xf32>
    %c0_38 = arith.constant 0 : index
    %c0_39 = arith.constant 0 : index
    %29 = vector.load %arg6[%c0_38, %c0_39] : memref<224x128xf32, #tpu.memory_space<vmem>>, vector<224x128xf32>
    tpu.vector_store %arg6[%c0_38, %c0_39], %28 {strides = array<i32>} : memref<224x128xf32, #tpu.memory_space<vmem>>, vector<224x128xf32>,
    %c0_40 = arith.constant 0 : index
    %c17 = arith.constant 17 : index
    %c0_41 = arith.constant 0 : index
    %30 = vector.load %arg1[%c0_40, %c17, %c0_41] : memref<1x272x128xbf16, #tpu.memory_space<vmem>>, vector<1x224x128xbf16>
    %31 = vector.shape_cast %30 : vector<1x224x128xbf16> to vector<224x128xbf16>
    %c0_42 = arith.constant 0 : index
    %c4 = arith.constant 4 : index
    %c0_43 = arith.constant 0 : index
    %c0_44 = arith.constant 0 : index
    %32 = vector.load %arg2[%c0_42, %c4, %c0_43, %c0_44] : memref<1x9x128x128xbf16, #tpu.memory_space<vmem>>, vector<1x1x128x128xbf16>
    %33 = vector.shape_cast %32 : vector<1x1x128x128xbf16> to vector<128x128xbf16>
    %cst_45 = arith.constant dense<0.000000e+00> : vector<224x128xf32>
    %34 = tpu.matmul %31, %33, %cst_45 {dimension_numbers = #tpu.dot_dimension_numbers<[1], [0], [0], [1], [0, 0, 1, 1], [], []>} : vector<224x128xbf16>, vector<128x128xbf16>, vector<224x128xf32> -> vector<224x128xf32>
    %c0_46 = arith.constant 0 : index
    %c0_47 = arith.constant 0 : index
    %35 = vector.load %arg6[%c0_46, %c0_47] : memref<224x128xf32, #tpu.memory_space<vmem>>, vector<224x128xf32>
    %36 = arith.addf %35, %34 : vector<224x128xf32>
    %c0_48 = arith.constant 0 : index
    %c0_49 = arith.constant 0 : index
    %37 = vector.load %arg6[%c0_48, %c0_49] : memref<224x128xf32, #tpu.memory_space<vmem>>, vector<224x128xf32>
    tpu.vector_store %arg6[%c0_48, %c0_49], %36 {strides = array<i32>} : memref<224x128xf32, #tpu.memory_space<vmem>>, vector<224x128xf32>,
    %c0_50 = arith.constant 0 : index
    %c18 = arith.constant 18 : index
    %c0_51 = arith.constant 0 : index
    %38 = vector.load %arg1[%c0_50, %c18, %c0_51] : memref<1x272x128xbf16, #tpu.memory_space<vmem>>, vector<1x224x128xbf16>
    %39 = vector.shape_cast %38 : vector<1x224x128xbf16> to vector<224x128xbf16>
    %c0_52 = arith.constant 0 : index
    %c5 = arith.constant 5 : index
    %c0_53 = arith.constant 0 : index
    %c0_54 = arith.constant 0 : index
    %40 = vector.load %arg2[%c0_52, %c5, %c0_53, %c0_54] : memref<1x9x128x128xbf16, #tpu.memory_space<vmem>>, vector<1x1x128x128xbf16>
    %41 = vector.shape_cast %40 : vector<1x1x128x128xbf16> to vector<128x128xbf16>
    %cst_55 = arith.constant dense<0.000000e+00> : vector<224x128xf32>
    %42 = tpu.matmul %39, %41, %cst_55 {dimension_numbers = #tpu.dot_dimension_numbers<[1], [0], [0], [1], [0, 0, 1, 1], [], []>} : vector<224x128xbf16>, vector<128x128xbf16>, vector<224x128xf32> -> vector<224x128xf32>
    %c0_56 = arith.constant 0 : index
    %c0_57 = arith.constant 0 : index
    %43 = vector.load %arg6[%c0_56, %c0_57] : memref<224x128xf32, #tpu.memory_space<vmem>>, vector<224x128xf32>
    %44 = arith.addf %43, %42 : vector<224x128xf32>
    %c0_58 = arith.constant 0 : index
    %c0_59 = arith.constant 0 : index
    %45 = vector.load %arg6[%c0_58, %c0_59] : memref<224x128xf32, #tpu.memory_space<vmem>>, vector<224x128xf32>
    tpu.vector_store %arg6[%c0_58, %c0_59], %44 {strides = array<i32>} : memref<224x128xf32, #tpu.memory_space<vmem>>, vector<224x128xf32>,
    %c0_60 = arith.constant 0 : index
    %c32 = arith.constant 32 : index
    %c0_61 = arith.constant 0 : index
    %46 = vector.load %arg1[%c0_60, %c32, %c0_61] : memref<1x272x128xbf16, #tpu.memory_space<vmem>>, vector<1x224x128xbf16>
    %47 = vector.shape_cast %46 : vector<1x224x128xbf16> to vector<224x128xbf16>
    %c0_62 = arith.constant 0 : index
    %c6 = arith.constant 6 : index
    %c0_63 = arith.constant 0 : index
    %c0_64 = arith.constant 0 : index
    %48 = vector.load %arg2[%c0_62, %c6, %c0_63, %c0_64] : memref<1x9x128x128xbf16, #tpu.memory_space<vmem>>, vector<1x1x128x128xbf16>
    %49 = vector.shape_cast %48 : vector<1x1x128x128xbf16> to vector<128x128xbf16>
    %cst_65 = arith.constant dense<0.000000e+00> : vector<224x128xf32>
    %50 = tpu.matmul %47, %49, %cst_65 {dimension_numbers = #tpu.dot_dimension_numbers<[1], [0], [0], [1], [0, 0, 1, 1], [], []>} : vector<224x128xbf16>, vector<128x128xbf16>, vector<224x128xf32> -> vector<224x128xf32>
    %c0_66 = arith.constant 0 : index
    %c0_67 = arith.constant 0 : index
    %51 = vector.load %arg6[%c0_66, %c0_67] : memref<224x128xf32, #tpu.memory_space<vmem>>, vector<224x128xf32>
    %52 = arith.addf %51, %50 : vector<224x128xf32>
    %c0_68 = arith.constant 0 : index
    %c0_69 = arith.constant 0 : index
    %53 = vector.load %arg6[%c0_68, %c0_69] : memref<224x128xf32, #tpu.memory_space<vmem>>, vector<224x128xf32>
    tpu.vector_store %arg6[%c0_68, %c0_69], %52 {strides = array<i32>} : memref<224x128xf32, #tpu.memory_space<vmem>>, vector<224x128xf32>,
    %c0_70 = arith.constant 0 : index
    %c33 = arith.constant 33 : index
    %c0_71 = arith.constant 0 : index
    %54 = vector.load %arg1[%c0_70, %c33, %c0_71] : memref<1x272x128xbf16, #tpu.memory_space<vmem>>, vector<1x224x128xbf16>
    %55 = vector.shape_cast %54 : vector<1x224x128xbf16> to vector<224x128xbf16>
    %c0_72 = arith.constant 0 : index
    %c7 = arith.constant 7 : index
    %c0_73 = arith.constant 0 : index
    %c0_74 = arith.constant 0 : index
    %56 = vector.load %arg2[%c0_72, %c7, %c0_73, %c0_74] : memref<1x9x128x128xbf16, #tpu.memory_space<vmem>>, vector<1x1x128x128xbf16>
    %57 = vector.shape_cast %56 : vector<1x1x128x128xbf16> to vector<128x128xbf16>
    %cst_75 = arith.constant dense<0.000000e+00> : vector<224x128xf32>
    %58 = tpu.matmul %55, %57, %cst_75 {dimension_numbers = #tpu.dot_dimension_numbers<[1], [0], [0], [1], [0, 0, 1, 1], [], []>} : vector<224x128xbf16>, vector<128x128xbf16>, vector<224x128xf32> -> vector<224x128xf32>
    %c0_76 = arith.constant 0 : index
    %c0_77 = arith.constant 0 : index
    %59 = vector.load %arg6[%c0_76, %c0_77] : memref<224x128xf32, #tpu.memory_space<vmem>>, vector<224x128xf32>
    %60 = arith.addf %59, %58 : vector<224x128xf32>
    %c0_78 = arith.constant 0 : index
    %c0_79 = arith.constant 0 : index
    %61 = vector.load %arg6[%c0_78, %c0_79] : memref<224x128xf32, #tpu.memory_space<vmem>>, vector<224x128xf32>
    tpu.vector_store %arg6[%c0_78, %c0_79], %60 {strides = array<i32>} : memref<224x128xf32, #tpu.memory_space<vmem>>, vector<224x128xf32>,
    %c0_80 = arith.constant 0 : index
    %c34 = arith.constant 34 : index
    %c0_81 = arith.constant 0 : index
    %62 = vector.load %arg1[%c0_80, %c34, %c0_81] : memref<1x272x128xbf16, #tpu.memory_space<vmem>>, vector<1x224x128xbf16>
    %63 = vector.shape_cast %62 : vector<1x224x128xbf16> to vector<224x128xbf16>
    %c0_82 = arith.constant 0 : index
    %c8 = arith.constant 8 : index
    %c0_83 = arith.constant 0 : index
    %c0_84 = arith.constant 0 : index
    %64 = vector.load %arg2[%c0_82, %c8, %c0_83, %c0_84] : memref<1x9x128x128xbf16, #tpu.memory_space<vmem>>, vector<1x1x128x128xbf16>
    %65 = vector.shape_cast %64 : vector<1x1x128x128xbf16> to vector<128x128xbf16>
    %cst_85 = arith.constant dense<0.000000e+00> : vector<224x128xf32>
    %66 = tpu.matmul %63, %65, %cst_85 {dimension_numbers = #tpu.dot_dimension_numbers<[1], [0], [0], [1], [0, 0, 1, 1], [], []>} : vector<224x128xbf16>, vector<128x128xbf16>, vector<224x128xf32> -> vector<224x128xf32>
    %c0_86 = arith.constant 0 : index
    %c0_87 = arith.constant 0 : index
    %67 = vector.load %arg6[%c0_86, %c0_87] : memref<224x128xf32, #tpu.memory_space<vmem>>, vector<224x128xf32>
    %68 = arith.addf %67, %66 : vector<224x128xf32>
    %c0_88 = arith.constant 0 : index
    %c0_89 = arith.constant 0 : index
    %69 = vector.load %arg6[%c0_88, %c0_89] : memref<224x128xf32, #tpu.memory_space<vmem>>, vector<224x128xf32>
    tpu.vector_store %arg6[%c0_88, %c0_89], %68 {strides = array<i32>} : memref<224x128xf32, #tpu.memory_space<vmem>>, vector<224x128xf32>,
    %c0_90 = arith.constant 0 : index
    %c0_91 = arith.constant 0 : index
    %70 = vector.load %arg6[%c0_90, %c0_91] : memref<224x128xf32, #tpu.memory_space<vmem>>, vector<224x128xf32>
    %71 = tpu.iota {dimensions = array<i32: 0>} : vector<224x1xi32>
    %c16_i32 = arith.constant 16 : i32
    %c0_i32 = arith.constant 0 : i32
    %72 = arith.cmpi eq, %c16_i32, %c0_i32 : i32
    %c1_i32 = arith.constant 1 : i32
    %73 = arith.select %72, %c1_i32, %c16_i32 : i32
    %74 = vector.broadcast %73 : i32 to vector<224x1xi32>
    %75 = arith.remsi %71, %74 : vector<224x1xi32>
    %c0_i32_92 = arith.constant 0 : i32
    %76 = vector.broadcast %c0_i32_92 : i32 to vector<224x1xi32>
    %77 = arith.cmpi ne, %75, %76 : vector<224x1xi32>
    %c0_i32_93 = arith.constant 0 : i32
    %78 = vector.broadcast %c0_i32_93 : i32 to vector<224x1xi32>
    %79 = arith.cmpi slt, %75, %78 : vector<224x1xi32>
    %c0_i32_94 = arith.constant 0 : i32
    %80 = arith.cmpi slt, %73, %c0_i32_94 : i32
    %81 = vector.broadcast %80 : i1 to vector<224x1xi1>
    %82 = vector.broadcast %81 : vector<224x1xi1> to vector<224x1xi1>
    %83 = arith.xori %79, %82 : vector<224x1xi1>
    %84 = arith.andi %83, %77 : vector<224x1xi1>
    %85 = vector.broadcast %73 : i32 to vector<224x1xi32>
    %86 = arith.addi %75, %85 : vector<224x1xi32>
    %87 = arith.select %84, %86, %75 : vector<224x1xi1>, vector<224x1xi32>
    %c14_i32 = arith.constant 14 : i32
    %88 = vector.broadcast %c14_i32 : i32 to vector<224x1xi32>
    %89 = arith.cmpi slt, %87, %88 : vector<224x1xi32>
    %cst_95 = arith.constant 0.000000e+00 : f32
    %90 = vector.shape_cast %89 : vector<224x1xi1> to vector<224x1xi1>
    %91 = vector.broadcast %90 : vector<224x1xi1> to vector<224x128xi1>
    %92 = vector.broadcast %cst_95 : f32 to vector<224x128xf32>
    %93 = arith.select %91, %70, %92 : vector<224x128xi1>, vector<224x128xf32>
    %cst_96 = arith.constant dense<0.000000e+00> : vector<128xf32>
    %94 = vector.multi_reduction <add>, %93, %cst_96 [0] : vector<224x128xf32> to vector<128xf32>
    %95 = vector.shape_cast %94 : vector<128xf32> to vector<1x128xf32>
    %96 = arith.mulf %93, %70 : vector<224x128xf32>
    %cst_97 = arith.constant dense<0.000000e+00> : vector<128xf32>
    %97 = vector.multi_reduction <add>, %96, %cst_97 [0] : vector<224x128xf32> to vector<128xf32>
    %98 = vector.shape_cast %97 : vector<128xf32> to vector<1x128xf32>
    %cst_98 = arith.constant 0.00510204071 : f32
    %99 = vector.broadcast %cst_98 : f32 to vector<1x128xf32>
    %100 = arith.mulf %95, %99 : vector<1x128xf32>
    %cst_99 = arith.constant 0.00510204071 : f32
    %101 = vector.broadcast %cst_99 : f32 to vector<1x128xf32>
    %102 = arith.mulf %98, %101 : vector<1x128xf32>
    %103 = arith.mulf %100, %100 : vector<1x128xf32>
    %104 = arith.subf %102, %103 : vector<1x128xf32>
    %cst_100 = arith.constant 0.000000e+00 : f32
    %105 = vector.broadcast %cst_100 : f32 to vector<1x128xf32>
    %106 = arith.maximumf %104, %105 : vector<1x128xf32>
    %cst_101 = arith.constant 9.99999974E-6 : f32
    %107 = vector.broadcast %cst_101 : f32 to vector<1x128xf32>
    %108 = arith.addf %106, %107 : vector<1x128xf32>
    %109 = math.rsqrt %108 : vector<1x128xf32>
    %c0_102 = arith.constant 0 : index
    %c0_103 = arith.constant 0 : index
    %c0_104 = arith.constant 0 : index
    %110 = vector.load %arg3[%c0_102, %c0_103, %c0_104] : memref<1x1x128xf32, #tpu.memory_space<vmem>>, vector<1x1x128xf32>
    %111 = vector.shape_cast %110 : vector<1x1x128xf32> to vector<1x128xf32>
    %112 = arith.mulf %111, %109 : vector<1x128xf32>
    %c0_105 = arith.constant 0 : index
    %c0_106 = arith.constant 0 : index
    %c0_107 = arith.constant 0 : index
    %113 = vector.load %arg4[%c0_105, %c0_106, %c0_107] : memref<1x1x128xf32, #tpu.memory_space<vmem>>, vector<1x1x128xf32>
    %114 = vector.shape_cast %113 : vector<1x1x128xf32> to vector<1x128xf32>
    %115 = arith.mulf %100, %112 : vector<1x128xf32>
    %116 = arith.subf %114, %115 : vector<1x128xf32>
    %117 = vector.broadcast %112 : vector<1x128xf32> to vector<224x128xf32>
    %118 = arith.mulf %70, %117 : vector<224x128xf32>
    %119 = vector.broadcast %116 : vector<1x128xf32> to vector<224x128xf32>
    %120 = arith.addf %118, %119 : vector<224x128xf32>
    %cst_108 = arith.constant 0.000000e+00 : f32
    %121 = vector.broadcast %cst_108 : f32 to vector<224x128xf32>
    %122 = arith.maximumf %120, %121 : vector<224x128xf32>
    %c0_109 = arith.constant 0 : index
    %c0_110 = arith.constant 0 : index
    %c0_111 = arith.constant 0 : index
    %123 = vector.load %arg5[%c0_109, %c0_110, %c0_111] : memref<1x224x128xf32, #tpu.memory_space<vmem>>, vector<1x224x128xf32>
    %124 = vector.shape_cast %123 : vector<1x224x128xf32> to vector<224x128xf32>
    %125 = vector.shape_cast %122 : vector<224x128xf32> to vector<1x224x128xf32>
    tpu.vector_store %arg5[%c0_109, %c0_110, %c0_111], %125 {strides = array<i32>} : memref<1x224x128xf32, #tpu.memory_space<vmem>>, vector<1x224x128xf32>,
    return
  }
  func.func @transform_0(%arg0: i32) -> (i32, i32, i32) {
    %c0_i32 = arith.constant 0 : i32
    %c0_i32_0 = arith.constant 0 : i32
    %c0_i32_1 = arith.constant 0 : i32
    return %arg0, %c0_i32, %c0_i32_0 : i32, i32, i32
  }
  func.func @transform_1(%arg0: i32) -> (i32, i32, i32, i32) {
    %c0_i32 = arith.constant 0 : i32
    %c0_i32_0 = arith.constant 0 : i32
    %c0_i32_1 = arith.constant 0 : i32
    %c0_i32_2 = arith.constant 0 : i32
    return %arg0, %c0_i32, %c0_i32_0, %c0_i32_1 : i32, i32, i32, i32
  }
  func.func @transform_2(%arg0: i32) -> (i32, i32, i32) {
    %c0_i32 = arith.constant 0 : i32
    %c0_i32_0 = arith.constant 0 : i32
    %c0_i32_1 = arith.constant 0 : i32
    return %arg0, %c0_i32, %c0_i32_0 : i32, i32, i32
  }
  func.func @transform_3(%arg0: i32) -> (i32, i32, i32) {
    %c0_i32 = arith.constant 0 : i32
    %c0_i32_0 = arith.constant 0 : i32
    %c0_i32_1 = arith.constant 0 : i32
    return %arg0, %c0_i32, %c0_i32_0 : i32, i32, i32
  }
  func.func @transform_4(%arg0: i32) -> (i32, i32, i32) {
    %c0_i32 = arith.constant 0 : i32
    %c0_i32_0 = arith.constant 0 : i32
    %c0_i32_1 = arith.constant 0 : i32
    return %arg0, %c0_i32, %c0_i32_0 : i32, i32, i32
  }
}

</mosaic_0001>

<llo_original>
// kernel: tpu_custom_call.1
$region0: #{tpu_custom_call.1}
  #allocation0 [shape = 'u32[]', space=smem, size = 0x4, offset = 0x4, fixed_abs, tag = 'smem constant byte address 0x4 - core index']
  #allocation1 [shape = 'u32[144,128]{1,0:T(1,128)}', space=vmem, size = 0x12000, scoped, tag = 'internal scratch']
  #allocation2 [shape = 'f32[224,128]{1,0:T(8,128)}', space=vmem, size = 0x1c000, scoped, tag = 'scratch operand']
  %s0 = inlined_call_operand.hbm [shape: bf16[7,272,128], index: 0, kind: input, shape index: {}]
  %s1 = inlined_call_operand.hbm [shape: bf16[7,9,128,128], index: 1, kind: input, shape index: {}]
  %s2 = inlined_call_operand.hbm [shape: f32[7,1,128], index: 2, kind: input, shape index: {}]
  %s3 = inlined_call_operand.hbm [shape: f32[7,1,128], index: 3, kind: input, shape index: {}]
  %s4 = inlined_call_operand.hbm [shape: f32[7,224,128], index: 4, kind: output, shape index: {}]
  %s5 = sld [smem:[#allocation0]]
  $region65: #{tpu_custom_call.1} parent=0
    _
  %s7 = ssub.s32 1, %s5
  %s8 = scalar_select 0, %s7, %s5
  $region1: #{tpu_custom_call.1} parent=0
    #allocation3 [shape = 'u8[139264]{0}', space=vmem, size = 0x22000, scoped, tag = 'input window, operand 0']
    #allocation4 [shape = 's32[2]{0}', space=sflag, size = 0x8, scoped, tag = 'scoped memory for tpu_custom_call.1']
    #allocation5 [shape = 's32[2]{0}', space=sflag, size = 0x8, scoped, tag = 'scoped memory for tpu_custom_call.1']
    #allocation6 [shape = 'u8[589824]{0}', space=vmem, size = 0x90000, scoped, tag = 'input window, operand 1']
    #allocation7 [shape = 's32[2]{0}', space=sflag, size = 0x8, scoped, tag = 'scoped memory for tpu_custom_call.1']
    #allocation8 [shape = 'u8[1024]{0}', space=vmem, size = 0x400, scoped, tag = 'input window, operand 2']
    #allocation9 [shape = 'u8[1024]{0}', space=vmem, size = 0x400, scoped, tag = 'input window, operand 3']
    #allocation10 [shape = 's32[2]{0}', space=sflag, size = 0x8, scoped, tag = 'scoped memory for tpu_custom_call.1']
    #allocation11 [shape = 'u8[229376]{0}', space=vmem, size = 0x38000, scoped, tag = 'output window, operand 0']
    %9 = vsyncpa [#allocation4], 0
    %s10 = scalar_lea.sflag [#allocation4], 1
    %11 = vsyncpa %s10, 0
    %12 = vsyncpa [#allocation7], 0
    %s13 = scalar_lea.sflag [#allocation7], 1
    %14 = vsyncpa %s13, 0
    %15 = vsyncpa [#allocation10], 0
    %s16 = scalar_lea.sflag [#allocation10], 1
    %17 = vsyncpa %s16, 0
    %18 = vsyncpa [#allocation5], 0
    %s19 = scalar_lea.sflag [#allocation5], 1
    %20 = vsyncpa %s19, 0
    loop: start=0, step=1, limit=9
    $region2: #{tpu_custom_call.1} parent=1 // loop_pre_header
      _
    $region3: #{tpu_custom_call.1} parent=1 // loop_header
      %s22 = sphi 0, %s26
      %p23 = scmp.ge.s32.totalorder %s22, 9
      %s32 = sphi 0, %s34
      %s35 = sphi 0, %s32
      %s36 = sphi 0, %s35
      %s52 = sphi 0, %s36
      %s58 = sphi 0, %s60
      %s61 = sphi 0, %s58
      %s62 = sphi 0, %s61
      %s78 = sphi 0, %s62
      %s84 = sphi 0, %s86
      %s87 = sphi 0, %s84
      %s88 = sphi 0, %s87
      %s104 = sphi 0, %s88
      %s110 = sphi 0, %s112
      %s113 = sphi 0, %s110
      %s114 = sphi 0, %s113
      %s130 = sphi 0, %s114
      %s136 = sphi 0, %s138
      %s139 = sphi 0, %s136
      %s140 = sphi 0, %s139
      %s156 = sphi 0, %s140
    $region4: #{tpu_custom_call.1} parent=1 // loop_header_branch
      %25 = sbr.rel (%p23) target = $region8
    $region5: #{tpu_custom_call.1} parent=1 // loop_body
      %s27 = ssub.s32 %s22, 1
      %s28 = ssub.s32 %s22, 2
      %s29 = sadd.s32 %s22, 1
      %s30 = ssub.s32 %s22, %s29
      %p31 = scmp.eq.s32.totalorder %s30, 0
      %s33 = sadd.s32 %s32, 1
      %s34 = scalar_select %p31, %s32, %s33
      %p37 = pneg %p31
      %p38 = scmp.eq.s32.totalorder %s22, 6
      %p39 = por %p37, %p38
      %p40 = scmp.ne.s32.totalorder %s32, %s35
      %p41 = scmp.eq.s32.totalorder %s22, 0
      %p42 = por %p40, %p41
      %p43 = scmp.ne.s32.totalorder %s32, %s35
      %p44 = scmp.eq.s32.totalorder %s27, 6
      %p45 = por %p43, %p44
      %p46 = scmp.ne.s32.totalorder %s35, %s36
      %p47 = scmp.eq.s32.totalorder %s27, 0
      %p48 = por %p46, %p47
      %p49 = scmp.ne.s32.totalorder %s35, %s36
      %p50 = scmp.eq.s32.totalorder %s28, 6
      %p51 = por %p49, %p50
      %p53 = scmp.ne.s32.totalorder %s36, %s52
      %p54 = scmp.eq.s32.totalorder %s28, 0
      %p55 = por %p53, %p54
      %s56 = ssub.s32 %s22, %s29
      %p57 = scmp.eq.s32.totalorder %s56, 0
      %s59 = sadd.s32 %s58, 1
      %s60 = scalar_select %p57, %s58, %s59
      %p63 = pneg %p57
      %p64 = scmp.eq.s32.totalorder %s22, 6
      %p65 = por %p63, %p64
      %p66 = scmp.ne.s32.totalorder %s58, %s61
      %p67 = scmp.eq.s32.totalorder %s22, 0
      %p68 = por %p66, %p67
      %p69 = scmp.ne.s32.totalorder %s58, %s61
      %p70 = scmp.eq.s32.totalorder %s27, 6
      %p71 = por %p69, %p70
      %p72 = scmp.ne.s32.totalorder %s61, %s62
      %p73 = scmp.eq.s32.totalorder %s27, 0
      %p74 = por %p72, %p73
      %p75 = scmp.ne.s32.totalorder %s61, %s62
      %p76 = scmp.eq.s32.totalorder %s28, 6
      %p77 = por %p75, %p76
      %p79 = scmp.ne.s32.totalorder %s62, %s78
      %p80 = scmp.eq.s32.totalorder %s28, 0
      %p81 = por %p79, %p80
      %s82 = ssub.s32 %s22, %s29
      %p83 = scmp.eq.s32.totalorder %s82, 0
      %s85 = sadd.s32 %s84, 1
      %s86 = scalar_select %p83, %s84, %s85
      %p89 = pneg %p83
      %p90 = scmp.eq.s32.totalorder %s22, 6
      %p91 = por %p89, %p90
      %p92 = scmp.ne.s32.totalorder %s84, %s87
      %p93 = scmp.eq.s32.totalorder %s22, 0
      %p94 = por %p92, %p93
      %p95 = scmp.ne.s32.totalorder %s84, %s87
      %p96 = scmp.eq.s32.totalorder %s27, 6
      %p97 = por %p95, %p96
      %p98 = scmp.ne.s32.totalorder %s87, %s88
      %p99 = scmp.eq.s32.totalorder %s27, 0
      %p100 = por %p98, %p99
      %p101 = scmp.ne.s32.totalorder %s87, %s88
      %p102 = scmp.eq.s32.totalorder %s28, 6
      %p103 = por %p101, %p102
      %p105 = scmp.ne.s32.totalorder %s88, %s104
      %p106 = scmp.eq.s32.totalorder %s28, 0
      %p107 = por %p105, %p106
      %s108 = ssub.s32 %s22, %s29
      %p109 = scmp.eq.s32.totalorder %s108, 0
      %s111 = sadd.s32 %s110, 1
      %s112 = scalar_select %p109, %s110, %s111
      %p115 = pneg %p109
      %p116 = scmp.eq.s32.totalorder %s22, 6
      %p117 = por %p115, %p116
      %p118 = scmp.ne.s32.totalorder %s110, %s113
      %p119 = scmp.eq.s32.totalorder %s22, 0
      %p120 = por %p118, %p119
      %p121 = scmp.ne.s32.totalorder %s110, %s113
      %p122 = scmp.eq.s32.totalorder %s27, 6
      %p123 = por %p121, %p122
      %p124 = scmp.ne.s32.totalorder %s113, %s114
      %p125 = scmp.eq.s32.totalorder %s27, 0
      %p126 = por %p124, %p125
      %p127 = scmp.ne.s32.totalorder %s113, %s114
      %p128 = scmp.eq.s32.totalorder %s28, 6
      %p129 = por %p127, %p128
      %p131 = scmp.ne.s32.totalorder %s114, %s130
      %p132 = scmp.eq.s32.totalorder %s28, 0
      %p133 = por %p131, %p132
      %s134 = ssub.s32 %s22, %s29
      %p135 = scmp.eq.s32.totalorder %s134, 0
      %s137 = sadd.s32 %s136, 1
      %s138 = scalar_select %p135, %s136, %s137
      %p141 = pneg %p135
      %p142 = scmp.eq.s32.totalorder %s22, 6
      %p143 = por %p141, %p142
      %p144 = scmp.ne.s32.totalorder %s136, %s139
      %p145 = scmp.eq.s32.totalorder %s22, 0
      %p146 = por %p144, %p145
      %p147 = scmp.ne.s32.totalorder %s136, %s139
      %p148 = scmp.eq.s32.totalorder %s27, 6
      %p149 = por %p147, %p148
      %p150 = scmp.ne.s32.totalorder %s139, %s140
      %p151 = scmp.eq.s32.totalorder %s27, 0
      %p152 = por %p150, %p151
      %p153 = scmp.ne.s32.totalorder %s139, %s140
      %p154 = scmp.eq.s32.totalorder %s28, 6
      %p155 = por %p153, %p154
      %p157 = scmp.ne.s32.totalorder %s140, %s156
      %p158 = scmp.eq.s32.totalorder %s28, 0
      %p159 = por %p157, %p158
      %p160 = scmp.le.s32.totalorder 1, %s22
      %p161 = scmp.lt.s32.totalorder %s22, 8
      %p162 = pnand %p160, %p161
      %p163 = pneg %p162
      // Predicated region
      $region9: #{tpu_custom_call.1} parent=5 // pred_check
        _
      $region10: #{tpu_custom_call.1} parent=5 // pred_check_branch
        %165 = sbr.rel (%p162) target = $region12
      $region11: #{tpu_custom_call.1} parent=5 // pred_region
        %s166 = ssub.s32 %s22, 1
      $region12: #{tpu_custom_call.1} parent=5 // pred_fallthru
        _
      %p167 = scmp.lt.s32.totalorder %s22, 7
      // Predicated region
      $region13: #{tpu_custom_call.1} parent=5 // pred_check
        %p168 = pneg %p167
      $region14: #{tpu_custom_call.1} parent=5 // pred_check_branch
        %170 = sbr.rel (%p168) target = $region16
      $region15: #{tpu_custom_call.1} parent=5 // pred_region
        // Predicated region
        $region17: #{tpu_custom_call.1} parent=15 // pred_check
          %p171 = pneg %p42
        $region18: #{tpu_custom_call.1} parent=15 // pred_check_branch
          %173 = sbr.rel (%p171) target = $region20
        $region19: #{tpu_custom_call.1} parent=15 // pred_region
          %s174 = sand.u32 %s32, 1
          %s175 = scalar_lea.sflag [#allocation4], %s174
          %s176 = sand.u32 %s32, 1
          %s177 = smul.addr %s176, 136
          %s178 = scalar_lea.vmem [#allocation3], %s177
          %s180 = ssub.s32 2176, 2176
          %181 = vsyncadd %s175, %s180
          %s182 = smul.addr %s22, 34
          %s183 = smul.addr %s182, 64
          %s184 = scalar_lea.hbm %s0, %s183
          %s185 = sshll.u32 %s178, 4
          %s186 = int_to_ptr.vmem [resolvable:$true] %s185
          %191 = dma.hbm_to_vmem [thread:$0]  %s184, 2176, %s186, %s175, 64, 64, 4
        $region20: #{tpu_custom_call.1} parent=15 // pred_fallthru
          _
        // Predicated region
        $region21: #{tpu_custom_call.1} parent=15 // pred_check
          %p192 = pneg %p68
        $region22: #{tpu_custom_call.1} parent=15 // pred_check_branch
          %194 = sbr.rel (%p192) target = $region24
        $region23: #{tpu_custom_call.1} parent=15 // pred_region
          %s195 = sand.u32 %s22, 1
          %s196 = scalar_lea.sflag [#allocation7], %s195
          %s197 = sand.u32 %s58, 1
          %s198 = smul.addr %s197, 576
          %s199 = scalar_lea.vmem [#allocation6], %s198
          %s201 = ssub.s32 9216, 9216
          %202 = vsyncadd %s196, %s201
          %s203 = smul.addr %s22, 144
          %s204 = smul.addr %s203, 64
          %s205 = scalar_lea.hbm %s1, %s204
          %s206 = sshll.u32 %s199, 4
          %s207 = int_to_ptr.vmem [resolvable:$true] %s206
          %212 = dma.hbm_to_vmem [thread:$0]  %s205, 9216, %s207, %s196, 64, 64, 4
        $region24: #{tpu_custom_call.1} parent=15 // pred_fallthru
          _
        // Predicated region
        $region25: #{tpu_custom_call.1} parent=15 // pred_check
          %p213 = pneg %p94
        $region26: #{tpu_custom_call.1} parent=15 // pred_check_branch
          %215 = sbr.rel (%p213) target = $region28
        $region27: #{tpu_custom_call.1} parent=15 // pred_region
          %s216 = sand.u32 %s22, 1
          %s217 = scalar_lea.sflag [#allocation7], %s216
          %s218 = sand.u32 %s84, 1
          %s219 = scalar_lea.vmem [#allocation8], %s218
          %s221 = ssub.s32 16, 16
          %222 = vsyncadd %s217, %s221
          %s223 = smul.addr %s22, 16
          %s224 = scalar_lea.hbm %s2, %s223
          %s226 = sshll.u32 %s219, 4
          %s227 = int_to_ptr.vmem [resolvable:$true] %s226
          %229 = dma.hbm_to_vmem [thread:$0]  %s224, 16, %s227, %s217
        $region28: #{tpu_custom_call.1} parent=15 // pred_fallthru
          _
        // Predicated region
        $region29: #{tpu_custom_call.1} parent=15 // pred_check
          %p230 = pneg %p120
        $region30: #{tpu_custom_call.1} parent=15 // pred_check_branch
          %232 = sbr.rel (%p230) target = $region32
        $region31: #{tpu_custom_call.1} parent=15 // pred_region
          %s233 = sand.u32 %s110, 1
          %s234 = scalar_lea.sflag [#allocation10], %s233
          %s235 = sand.u32 %s110, 1
          %s236 = scalar_lea.vmem [#allocation9], %s235
          %s238 = ssub.s32 16, 16
          %239 = vsyncadd %s234, %s238
          %s240 = smul.addr %s22, 16
          %s241 = scalar_lea.hbm %s3, %s240
          %s243 = sshll.u32 %s236, 4
          %s244 = int_to_ptr.vmem [resolvable:$true] %s243
          %246 = dma.hbm_to_vmem [thread:$0]  %s241, 16, %s244, %s234
        $region32: #{tpu_custom_call.1} parent=15 // pred_fallthru
          _
      $region16: #{tpu_custom_call.1} parent=5 // pred_fallthru
        _
      %p247 = scmp.le.s32.totalorder 1, %s22
      %p248 = scmp.lt.s32.totalorder %s22, 8
      %p249 = pnand %p247, %p248
      %p250 = pneg %p249
      // Predicated region
      $region33: #{tpu_custom_call.1} parent=5 // pred_check
        _
      $region34: #{tpu_custom_call.1} parent=5 // pred_check_branch
        %252 = sbr.rel (%p249) target = $region36
      $region35: #{tpu_custom_call.1} parent=5 // pred_region
        %s253 = ssub.s32 %s22, 1
        %s254 = sand.u32 %s35, 1
        %s255 = scalar_lea.sflag [#allocation4], %s254
        %s256 = sand.u32 %s35, 1
        %s257 = smul.addr %s256, 136
        %s258 = scalar_lea.vmem [#allocation3], %s257
        // Predicated region
        $region37: #{tpu_custom_call.1} parent=35 // pred_check
          %p259 = pneg %p48
        $region38: #{tpu_custom_call.1} parent=35 // pred_check_branch
          %261 = sbr.rel (%p259) target = $region40
        $region39: #{tpu_custom_call.1} parent=35 // pred_region
          %262 = dma.done %s255, 2176
        $region40: #{tpu_custom_call.1} parent=35 // pred_fallthru
          _
        %s263 = sand.u32 %s27, 1
        %s264 = scalar_lea.sflag [#allocation7], %s263
        %s265 = sand.u32 %s61, 1
        %s266 = smul.addr %s265, 576
        %s267 = scalar_lea.vmem [#allocation6], %s266
        // Predicated region
        $region41: #{tpu_custom_call.1} parent=35 // pred_check
          %p268 = pneg %p74
        $region42: #{tpu_custom_call.1} parent=35 // pred_check_branch
          %270 = sbr.rel (%p268) target = $region44
        $region43: #{tpu_custom_call.1} parent=35 // pred_region
          %271 = dma.done %s264, 9216
        $region44: #{tpu_custom_call.1} parent=35 // pred_fallthru
          _
        %s272 = sand.u32 %s27, 1
        %s273 = scalar_lea.sflag [#allocation7], %s272
        %s274 = sand.u32 %s87, 1
        %s275 = scalar_lea.vmem [#allocation8], %s274
        // Predicated region
        $region45: #{tpu_custom_call.1} parent=35 // pred_check
          %p276 = pneg %p100
        $region46: #{tpu_custom_call.1} parent=35 // pred_check_branch
          %278 = sbr.rel (%p276) target = $region48
        $region47: #{tpu_custom_call.1} parent=35 // pred_region
          %279 = dma.done %s273, 16
        $region48: #{tpu_custom_call.1} parent=35 // pred_fallthru
          _
        %s280 = sand.u32 %s113, 1
        %s281 = scalar_lea.sflag [#allocation10], %s280
        %s282 = sand.u32 %s113, 1
        %s283 = scalar_lea.vmem [#allocation9], %s282
        // Predicated region
        $region49: #{tpu_custom_call.1} parent=35 // pred_check
          %p284 = pneg %p126
        $region50: #{tpu_custom_call.1} parent=35 // pred_check_branch
          %286 = sbr.rel (%p284) target = $region52
        $region51: #{tpu_custom_call.1} parent=35 // pred_region
          %287 = dma.done %s281, 16
        $region52: #{tpu_custom_call.1} parent=35 // pred_fallthru
          _
        %s288 = sand.u32 %s35, 1
        %s289 = scalar_lea.sflag [#allocation4], %s288
        %s290 = sand.u32 %s35, 1
        %s291 = smul.addr %s290, 136
        %s292 = scalar_lea.vmem [#allocation3], %s291
        %p293 = pneg %p48
        %p294 = pneg %p45
        %s295 = sand.u32 %s27, 1
        %s296 = scalar_lea.sflag [#allocation7], %s295
        %s297 = sand.u32 %s61, 1
        %s298 = smul.addr %s297, 576
        %s299 = scalar_lea.vmem [#allocation6], %s298
        %p300 = pneg %p74
        %p301 = pneg %p71
        %s302 = sand.u32 %s27, 1
        %s303 = scalar_lea.sflag [#allocation7], %s302
        %s304 = sand.u32 %s87, 1
        %s305 = scalar_lea.vmem [#allocation8], %s304
        %p306 = pneg %p100
        %p307 = pneg %p97
        %s308 = sand.u32 %s113, 1
        %s309 = scalar_lea.sflag [#allocation10], %s308
        %s310 = sand.u32 %s113, 1
        %s311 = scalar_lea.vmem [#allocation9], %s310
        %p312 = pneg %p126
        %p313 = pneg %p123
        %p314 = pneg %p152
        %p315 = pneg %p149
        %s316 = sand.u32 %s139, 1
        %s317 = scalar_lea.sflag [#allocation5], %s316
        %s318 = sand.u32 %s139, 1
        %s319 = smul.addr %s318, 224
        %s320 = scalar_lea.vmem [#allocation11], %s319
        %v322 = vld [vmem:[%s258] sm:$0xf]
        %v323 = vld [vmem:[%s258 + $0x4] sm:$0xf]
        %v324 = vld [vmem:[%s258 + $0x8] sm:$0xf]
        %v325 = vld [vmem:[%s258 + $0xc] sm:$0xf]
        %v326 = vld [vmem:[%s258 + $0x10] sm:$0xf]
        %v327 = vld [vmem:[%s258 + $0x14] sm:$0xf]
        %v328 = vld [vmem:[%s258 + $0x18] sm:$0xf]
        %v329 = vld [vmem:[%s258 + $0x1c] sm:$0xf]
        %v330 = vld [vmem:[%s258 + $0x20] sm:$0xf]
        %v331 = vld [vmem:[%s258 + $0x24] sm:$0xf]
        %v332 = vld [vmem:[%s258 + $0x28] sm:$0xf]
        %v333 = vld [vmem:[%s258 + $0x2c] sm:$0xf]
        %v334 = vld [vmem:[%s258 + $0x30] sm:$0xf]
        %v335 = vld [vmem:[%s258 + $0x34] sm:$0xf]
        %v336 = vld [vmem:[%s258 + $0x38] sm:$0xf]
        %v337 = vld [vmem:[%s258 + $0x3c] sm:$0xf]
        %v338 = vld [vmem:[%s258 + $0x40] sm:$0xf]
        %v339 = vld [vmem:[%s258 + $0x44] sm:$0xf]
        %v340 = vld [vmem:[%s258 + $0x48] sm:$0xf]
        %v341 = vld [vmem:[%s258 + $0x4c] sm:$0xf]
        %v342 = vld [vmem:[%s258 + $0x50] sm:$0xf]
        %v343 = vld [vmem:[%s258 + $0x54] sm:$0xf]
        %v344 = vld [vmem:[%s258 + $0x58] sm:$0xf]
        %v345 = vld [vmem:[%s258 + $0x5c] sm:$0xf]
        %v346 = vld [vmem:[%s258 + $0x60] sm:$0xf]
        %v347 = vld [vmem:[%s258 + $0x64] sm:$0xf]
        %v348 = vld [vmem:[%s258 + $0x68] sm:$0xf]
        %v349 = vld [vmem:[%s258 + $0x6c] sm:$0xf]
        %v350 = vld [vmem:[%s267] sm:$0xf]
        %v351 = vld [vmem:[%s267 + $0x4] sm:$0xf]
        %v352 = vld [vmem:[%s267 + $0x8] sm:$0xf]
        %v353 = vld [vmem:[%s267 + $0xc] sm:$0xf]
        %v354 = vld [vmem:[%s267 + $0x10] sm:$0xf]
        %v355 = vld [vmem:[%s267 + $0x14] sm:$0xf]
        %v356 = vld [vmem:[%s267 + $0x18] sm:$0xf]
        %v357 = vld [vmem:[%s267 + $0x1c] sm:$0xf]
        %v358 = vld [vmem:[%s267 + $0x20] sm:$0xf]
        %v359 = vld [vmem:[%s267 + $0x24] sm:$0xf]
        %v360 = vld [vmem:[%s267 + $0x28] sm:$0xf]
        %v361 = vld [vmem:[%s267 + $0x2c] sm:$0xf]
        %v362 = vld [vmem:[%s267 + $0x30] sm:$0xf]
        %v363 = vld [vmem:[%s267 + $0x34] sm:$0xf]
        %v364 = vld [vmem:[%s267 + $0x38] sm:$0xf]
        %v365 = vld [vmem:[%s267 + $0x3c] sm:$0xf]
        %v394 = vunpack.c.l.b16 %v322
        %v395 = vunpack.c.l.b16 %v323
        %v396 = vunpack.c.l.b16 %v324
        %v397 = vunpack.c.l.b16 %v325
        %v398 = vunpack.c.l.b16 %v326
        %v399 = vunpack.c.l.b16 %v327
        %v400 = vunpack.c.l.b16 %v328
        %v401 = vunpack.c.l.b16 %v329
        %v402 = vunpack.c.l.b16 %v330
        %v403 = vunpack.c.l.b16 %v331
        %v404 = vunpack.c.l.b16 %v332
        %v405 = vunpack.c.l.b16 %v333
        %v406 = vunpack.c.l.b16 %v334
        %v407 = vunpack.c.l.b16 %v335
        %v408 = vunpack.c.l.b16 %v336
        %v409 = vunpack.c.l.b16 %v337
        %v410 = vunpack.c.l.b16 %v338
        %v411 = vunpack.c.l.b16 %v339
        %v412 = vunpack.c.l.b16 %v340
        %v413 = vunpack.c.l.b16 %v341
        %v414 = vunpack.c.l.b16 %v342
        %v415 = vunpack.c.l.b16 %v343
        %v416 = vunpack.c.l.b16 %v344
        %v417 = vunpack.c.l.b16 %v345
        %v418 = vunpack.c.l.b16 %v346
        %v419 = vunpack.c.l.b16 %v347
        %v420 = vunpack.c.l.b16 %v348
        %v421 = vunpack.c.l.b16 %v349
        %v422 = vpack.c.b16 %v395, %v394
        %v423 = vpack.c.b16 %v397, %v396
        %v424 = vpack.c.b16 %v399, %v398
        %v425 = vpack.c.b16 %v401, %v400
        %v426 = vpack.c.b16 %v403, %v402
        %v427 = vpack.c.b16 %v405, %v404
        %v428 = vpack.c.b16 %v407, %v406
        %v429 = vpack.c.b16 %v409, %v408
        %v430 = vpack.c.b16 %v411, %v410
        %v431 = vpack.c.b16 %v413, %v412
        %v432 = vpack.c.b16 %v415, %v414
        %v433 = vpack.c.b16 %v417, %v416
        %v434 = vpack.c.b16 %v419, %v418
        %v435 = vpack.c.b16 %v421, %v420
        %v466 = vunpack.c.l.b16 %v350
        %v467 = vunpack.c.l.b16 %v351
        %v468 = vunpack.c.l.b16 %v352
        %v469 = vunpack.c.l.b16 %v353
        %v470 = vunpack.c.l.b16 %v354
        %v471 = vunpack.c.l.b16 %v355
        %v472 = vunpack.c.l.b16 %v356
        %v473 = vunpack.c.l.b16 %v357
        %v474 = vunpack.c.l.b16 %v358
        %v475 = vunpack.c.l.b16 %v359
        %v476 = vunpack.c.l.b16 %v360
        %v477 = vunpack.c.l.b16 %v361
        %v478 = vunpack.c.l.b16 %v362
        %v479 = vunpack.c.l.b16 %v363
        %v480 = vunpack.c.l.b16 %v364
        %v481 = vunpack.c.l.b16 %v365
        %v482 = vpack.c.b16 %v467, %v466
        %v483 = vpack.c.b16 %v469, %v468
        %v484 = vpack.c.b16 %v471, %v470
        %v485 = vpack.c.b16 %v473, %v472
        %v486 = vpack.c.b16 %v475, %v474
        %v487 = vpack.c.b16 %v477, %v476
        %v488 = vpack.c.b16 %v479, %v478
        %v489 = vpack.c.b16 %v481, %v480
        %498 = vmatprep.subr.bf16.mxu0 0
        %499 = vmatpush1.bf16.msra.mxu0 %v489
        %500 = vmatprep.subr.bf16.mxu0 0
        %501 = vmatpush1.bf16.msra.mxu0 %v488
        %502 = vmatprep.subr.bf16.mxu0 0
        %503 = vmatpush1.bf16.msra.mxu0 %v487
        %504 = vmatprep.subr.bf16.mxu0 0
        %505 = vmatpush1.bf16.msra.mxu0 %v486
        %506 = vmatprep.subr.bf16.mxu0 0
        %507 = vmatpush1.bf16.msra.mxu0 %v485
        %508 = vmatprep.subr.bf16.mxu0 0
        %509 = vmatpush1.bf16.msra.mxu0 %v484
        %510 = vmatprep.subr.bf16.mxu0 0
        %511 = vmatpush1.bf16.msra.mxu0 %v483
        %512 = vmatprep.subr.bf16.mxu0 0
        %513 = vmatpush1.bf16.msra.mxu0 %v482
        %514 = vmatprep.subr.bf16.mxu0 0
        %515 = vmatpush2.bf16.msra.mxu0 0
        %516 = vmatprep.subr.bf16.mxu0 0
        %517 = vmatpush2.bf16.msra.mxu0 0
        %518 = vmatprep.subr.bf16.mxu0 0
        %519 = vmatpush2.bf16.msra.mxu0 0
        %520 = vmatprep.subr.bf16.mxu0 0
        %521 = vmatpush2.bf16.msra.mxu0 0
        %522 = vmatprep.subr.bf16.mxu0 0
        %523 = vmatpush2.bf16.msra.mxu0 0
        %524 = vmatprep.subr.bf16.mxu0 0
        %525 = vmatpush2.bf16.msra.mxu0 0
        %526 = vmatprep.subr.bf16.mxu0 0
        %527 = vmatpush2.bf16.msra.mxu0 0
        %528 = vmatprep.subr.bf16.mxu0 0
        %529 = vmatpush2.bf16.msra.mxu0 0
        %530 = vmatprep.mubr.bf16.mxu0 0
        %531 = vmatmul.mubr.bf16.gmra.mxu0 %v422
        %v532 = vpop.f32.mrf.mxu0
        %v533 = vadd.f32 0.0, %v532
        %v534 = vpop.f32.mrf.mxu0
        %v535 = vpop.f32.mrf.mxu0
        %v536 = vadd.f32 0.0, %v535
        %v537 = vpop.f32.mrf.mxu0
        %538 = vmatprep.mubr.bf16.mxu0 0
        %539 = vmatmul.mubr.bf16.gmra.mxu0 %v423
        %v540 = vpop.f32.mrf.mxu0
        %v541 = vadd.f32 0.0, %v540
        %v542 = vpop.f32.mrf.mxu0
        %v543 = vpop.f32.mrf.mxu0
        %v544 = vadd.f32 0.0, %v543
        %v545 = vpop.f32.mrf.mxu0
        %546 = vmatprep.mubr.bf16.mxu0 0
        %547 = vmatmul.mubr.bf16.gmra.mxu0 %v424
        %v548 = vpop.f32.mrf.mxu0
        %v549 = vadd.f32 0.0, %v548
        %v550 = vpop.f32.mrf.mxu0
        %v551 = vpop.f32.mrf.mxu0
        %v552 = vadd.f32 0.0, %v551
        %v553 = vpop.f32.mrf.mxu0
        %554 = vmatprep.mubr.bf16.mxu0 0
        %555 = vmatmul.mubr.bf16.gmra.mxu0 %v425
        %v556 = vpop.f32.mrf.mxu0
        %v557 = vadd.f32 0.0, %v556
        %v558 = vpop.f32.mrf.mxu0
        %v559 = vpop.f32.mrf.mxu0
        %v560 = vadd.f32 0.0, %v559
        %v561 = vpop.f32.mrf.mxu0
        %562 = vmatprep.mubr.bf16.mxu0 0
        %563 = vmatmul.mubr.bf16.gmra.mxu0 %v426
        %v564 = vpop.f32.mrf.mxu0
        %v565 = vadd.f32 0.0, %v564
        %v566 = vpop.f32.mrf.mxu0
        %v567 = vpop.f32.mrf.mxu0
        %v568 = vadd.f32 0.0, %v567
        %v569 = vpop.f32.mrf.mxu0
        %570 = vmatprep.mubr.bf16.mxu0 0
        %571 = vmatmul.mubr.bf16.gmra.mxu0 %v427
        %v572 = vpop.f32.mrf.mxu0
        %v573 = vadd.f32 0.0, %v572
        %v574 = vpop.f32.mrf.mxu0
        %v575 = vpop.f32.mrf.mxu0
        %v576 = vadd.f32 0.0, %v575
        %v577 = vpop.f32.mrf.mxu0
        %578 = vmatprep.mubr.bf16.mxu0 0
        %579 = vmatmul.mubr.bf16.gmra.mxu0 %v428
        %v580 = vpop.f32.mrf.mxu0
        %v581 = vadd.f32 0.0, %v580
        %v582 = vpop.f32.mrf.mxu0
        %v583 = vpop.f32.mrf.mxu0
        %v584 = vadd.f32 0.0, %v583
        %v585 = vpop.f32.mrf.mxu0
        %586 = vmatprep.mubr.bf16.mxu0 0
        %587 = vmatmul.mubr.bf16.gmra.mxu0 %v429
        %v588 = vpop.f32.mrf.mxu0
        %v589 = vadd.f32 0.0, %v588
        %v590 = vpop.f32.mrf.mxu0
        %v591 = vpop.f32.mrf.mxu0
        %v592 = vadd.f32 0.0, %v591
        %v593 = vpop.f32.mrf.mxu0
        %594 = vmatprep.mubr.bf16.mxu0 0
        %595 = vmatmul.mubr.bf16.gmra.mxu0 %v430
        %v596 = vpop.f32.mrf.mxu0
        %v597 = vadd.f32 0.0, %v596
        %v598 = vpop.f32.mrf.mxu0
        %v599 = vpop.f32.mrf.mxu0
        %v600 = vadd.f32 0.0, %v599
        %v601 = vpop.f32.mrf.mxu0
        %602 = vmatprep.mubr.bf16.mxu0 0
        %603 = vmatmul.mubr.bf16.gmra.mxu0 %v431
        %v604 = vpop.f32.mrf.mxu0
        %v605 = vadd.f32 0.0, %v604
        %v606 = vpop.f32.mrf.mxu0
        %v607 = vpop.f32.mrf.mxu0
        %v608 = vadd.f32 0.0, %v607
        %v609 = vpop.f32.mrf.mxu0
        %610 = vmatprep.mubr.bf16.mxu0 0
        %611 = vmatmul.mubr.bf16.gmra.mxu0 %v432
        %v612 = vpop.f32.mrf.mxu0
        %v613 = vadd.f32 0.0, %v612
        %v614 = vpop.f32.mrf.mxu0
        %v615 = vpop.f32.mrf.mxu0
        %v616 = vadd.f32 0.0, %v615
        %v617 = vpop.f32.mrf.mxu0
        %618 = vmatprep.mubr.bf16.mxu0 0
        %619 = vmatmul.mubr.bf16.gmra.mxu0 %v433
        %v620 = vpop.f32.mrf.mxu0
        %v621 = vadd.f32 0.0, %v620
        %v622 = vpop.f32.mrf.mxu0
        %v623 = vpop.f32.mrf.mxu0
        %v624 = vadd.f32 0.0, %v623
        %v625 = vpop.f32.mrf.mxu0
        %626 = vmatprep.mubr.bf16.mxu0 0
        %627 = vmatmul.mubr.bf16.gmra.mxu0 %v434
        %v628 = vpop.f32.mrf.mxu0
        %v629 = vadd.f32 0.0, %v628
        %v630 = vpop.f32.mrf.mxu0
        %v631 = vpop.f32.mrf.mxu0
        %v632 = vadd.f32 0.0, %v631
        %v633 = vpop.f32.mrf.mxu0
        %634 = vmatprep.mubr.bf16.mxu0 0
        %635 = vmatmul.mubr.bf16.gmra.mxu0 %v435
        %v636 = vpop.f32.mrf.mxu0
        %v637 = vadd.f32 0.0, %v636
        %v638 = vpop.f32.mrf.mxu0
        %v639 = vpop.f32.mrf.mxu0
        %v640 = vadd.f32 0.0, %v639
        %v641 = vpop.f32.mrf.mxu0
        %642 = vdwg.mxu0
        %643 = vst [vmem:[#allocation2] sm:$0xff] %v533
        %644 = vst [vmem:[#allocation2 + $0x8] sm:$0xff] %v536
        %645 = vst [vmem:[#allocation2 + $0x10] sm:$0xff] %v541
        %646 = vst [vmem:[#allocation2 + $0x18] sm:$0xff] %v544
        %647 = vst [vmem:[#allocation2 + $0x20] sm:$0xff] %v549
        %648 = vst [vmem:[#allocation2 + $0x28] sm:$0xff] %v552
        %649 = vst [vmem:[#allocation2 + $0x30] sm:$0xff] %v557
        %650 = vst [vmem:[#allocation2 + $0x38] sm:$0xff] %v560
        %651 = vst [vmem:[#allocation2 + $0x40] sm:$0xff] %v565
        %652 = vst [vmem:[#allocation2 + $0x48] sm:$0xff] %v568
        %653 = vst [vmem:[#allocation2 + $0x50] sm:$0xff] %v573
        %654 = vst [vmem:[#allocation2 + $0x58] sm:$0xff] %v576
        %655 = vst [vmem:[#allocation2 + $0x60] sm:$0xff] %v581
        %656 = vst [vmem:[#allocation2 + $0x68] sm:$0xff] %v584
        %657 = vst [vmem:[#allocation2 + $0x70] sm:$0xff] %v589
        %658 = vst [vmem:[#allocation2 + $0x78] sm:$0xff] %v592
        %659 = vst [vmem:[#allocation2 + $0x80] sm:$0xff] %v597
        %660 = vst [vmem:[#allocation2 + $0x88] sm:$0xff] %v600
        %661 = vst [vmem:[#allocation2 + $0x90] sm:$0xff] %v605
        %662 = vst [vmem:[#allocation2 + $0x98] sm:$0xff] %v608
        %663 = vst [vmem:[#allocation2 + $0xa0] sm:$0xff] %v613
        %664 = vst [vmem:[#allocation2 + $0xa8] sm:$0xff] %v616
        %665 = vst [vmem:[#allocation2 + $0xb0] sm:$0xff] %v621
        %666 = vst [vmem:[#allocation2 + $0xb8] sm:$0xff] %v624
        %667 = vst [vmem:[#allocation2 + $0xc0] sm:$0xff] %v629
        %668 = vst [vmem:[#allocation2 + $0xc8] sm:$0xff] %v632
        %669 = vst [vmem:[#allocation2 + $0xd0] sm:$0xff] %v637
        %670 = vst [vmem:[#allocation2 + $0xd8] sm:$0xff] %v640
        %v671 = vld [vmem:[%s258] sm:$0xf]
        %v672 = vld [vmem:[%s258 + $0x4] sm:$0xf]
        %v673 = vld [vmem:[%s258 + $0x8] sm:$0xf]
        %v674 = vld [vmem:[%s258 + $0xc] sm:$0xf]
        %v675 = vld [vmem:[%s258 + $0x10] sm:$0xf]
        %v676 = vld [vmem:[%s258 + $0x14] sm:$0xf]
        %v677 = vld [vmem:[%s258 + $0x18] sm:$0xf]
        %v678 = vld [vmem:[%s258 + $0x1c] sm:$0xf]
        %v679 = vld [vmem:[%s258 + $0x20] sm:$0xf]
        %v680 = vld [vmem:[%s258 + $0x24] sm:$0xf]
        %v681 = vld [vmem:[%s258 + $0x28] sm:$0xf]
        %v682 = vld [vmem:[%s258 + $0x2c] sm:$0xf]
        %v683 = vld [vmem:[%s258 + $0x30] sm:$0xf]
        %v684 = vld [vmem:[%s258 + $0x34] sm:$0xf]
        %v685 = vld [vmem:[%s258 + $0x38] sm:$0xf]
        %v686 = vld [vmem:[%s258 + $0x3c] sm:$0xf]
        %v687 = vld [vmem:[%s258 + $0x40] sm:$0xf]
        %v688 = vld [vmem:[%s258 + $0x44] sm:$0xf]
        %v689 = vld [vmem:[%s258 + $0x48] sm:$0xf]
        %v690 = vld [vmem:[%s258 + $0x4c] sm:$0xf]
        %v691 = vld [vmem:[%s258 + $0x50] sm:$0xf]
        %v692 = vld [vmem:[%s258 + $0x54] sm:$0xf]
        %v693 = vld [vmem:[%s258 + $0x58] sm:$0xf]
        %v694 = vld [vmem:[%s258 + $0x5c] sm:$0xf]
        %v695 = vld [vmem:[%s258 + $0x60] sm:$0xf]
        %v696 = vld [vmem:[%s258 + $0x64] sm:$0xf]
        %v697 = vld [vmem:[%s258 + $0x68] sm:$0xf]
        %v698 = vld [vmem:[%s258 + $0x6c] sm:$0xf]
        %v699 = vld [vmem:[%s258 + $0x70] sm:$0x1]
        %s700 = scalar_lea.vmem %s267, 64 [#allocation6]
        %v701 = vld [vmem:[%s700] sm:$0xf]
        %v702 = vld [vmem:[%s700 + $0x4] sm:$0xf]
        %v703 = vld [vmem:[%s700 + $0x8] sm:$0xf]
        %v704 = vld [vmem:[%s700 + $0xc] sm:$0xf]
        %v705 = vld [vmem:[%s700 + $0x10] sm:$0xf]
        %v706 = vld [vmem:[%s700 + $0x14] sm:$0xf]
        %v707 = vld [vmem:[%s700 + $0x18] sm:$0xf]
        %v708 = vld [vmem:[%s700 + $0x1c] sm:$0xf]
        %v709 = vld [vmem:[%s700 + $0x20] sm:$0xf]
        %v710 = vld [vmem:[%s700 + $0x24] sm:$0xf]
        %v711 = vld [vmem:[%s700 + $0x28] sm:$0xf]
        %v712 = vld [vmem:[%s700 + $0x2c] sm:$0xf]
        %v713 = vld [vmem:[%s700 + $0x30] sm:$0xf]
        %v714 = vld [vmem:[%s700 + $0x34] sm:$0xf]
        %v715 = vld [vmem:[%s700 + $0x38] sm:$0xf]
        %v716 = vld [vmem:[%s700 + $0x3c] sm:$0xf]
        %v746 = vunpack.c.l.b16 %v671
        %v747 = vunpack.c.l.b16 %v672
        %v748 = vunpack.c.l.b16 %v673
        %v749 = vunpack.c.l.b16 %v674
        %v750 = vunpack.c.l.b16 %v675
        %v751 = vunpack.c.l.b16 %v676
        %v752 = vunpack.c.l.b16 %v677
        %v753 = vunpack.c.l.b16 %v678
        %v754 = vunpack.c.l.b16 %v679
        %v755 = vunpack.c.l.b16 %v680
        %v756 = vunpack.c.l.b16 %v681
        %v757 = vunpack.c.l.b16 %v682
        %v758 = vunpack.c.l.b16 %v683
        %v759 = vunpack.c.l.b16 %v684
        %v760 = vunpack.c.l.b16 %v685
        %v761 = vunpack.c.l.b16 %v686
        %v762 = vunpack.c.l.b16 %v687
        %v763 = vunpack.c.l.b16 %v688
        %v764 = vunpack.c.l.b16 %v689
        %v765 = vunpack.c.l.b16 %v690
        %v766 = vunpack.c.l.b16 %v691
        %v767 = vunpack.c.l.b16 %v692
        %v768 = vunpack.c.l.b16 %v693
        %v769 = vunpack.c.l.b16 %v694
        %v770 = vunpack.c.l.b16 %v695
        %v771 = vunpack.c.l.b16 %v696
        %v772 = vunpack.c.l.b16 %v697
        %v773 = vunpack.c.l.b16 %v698
        %v774 = vunpack.c.l.b16 %v699
        %v775 = vpack.c.b16 %v747, %v746
        %v776 = vpack.c.b16 %v749, %v748
        %v777 = vpack.c.b16 %v751, %v750
        %v778 = vpack.c.b16 %v753, %v752
        %v779 = vpack.c.b16 %v755, %v754
        %v780 = vpack.c.b16 %v757, %v756
        %v781 = vpack.c.b16 %v759, %v758
        %v782 = vpack.c.b16 %v761, %v760
        %v783 = vpack.c.b16 %v763, %v762
        %v784 = vpack.c.b16 %v765, %v764
        %v785 = vpack.c.b16 %v767, %v766
        %v786 = vpack.c.b16 %v769, %v768
        %v787 = vpack.c.b16 %v771, %v770
        %v788 = vpack.c.b16 %v773, %v772
        %v789 = vpack.c.b16 %v774, %v774
        %vm790 = vsmask.f32 7424
        %v792 = vshrl.u32 %v775, 16
        %v794 = vshll.u32 %v775, 16
        %v796 = vrot.slane %v794, 1
        %v797 = vor.u32 %v792, %v796
        %v799 = vshll.u32 %v776, 16
        %v801 = vrot.slane %v799, 1
        %v802 = vsel %vm790, %v797, %v801
        %v803 = vshrl.u32 %v776, 16
        %v805 = vor.u32 %v803, %v801
        %v807 = vshll.u32 %v777, 16
        %v809 = vrot.slane %v807, 1
        %v810 = vsel %vm790, %v805, %v809
        %v811 = vshrl.u32 %v777, 16
        %v813 = vor.u32 %v811, %v809
        %v815 = vshll.u32 %v778, 16
        %v817 = vrot.slane %v815, 1
        %v818 = vsel %vm790, %v813, %v817
        %v819 = vshrl.u32 %v778, 16
        %v821 = vor.u32 %v819, %v817
        %v823 = vshll.u32 %v779, 16
        %v825 = vrot.slane %v823, 1
        %v826 = vsel %vm790, %v821, %v825
        %v827 = vshrl.u32 %v779, 16
        %v829 = vor.u32 %v827, %v825
        %v831 = vshll.u32 %v780, 16
        %v833 = vrot.slane %v831, 1
        %v834 = vsel %vm790, %v829, %v833
        %v835 = vshrl.u32 %v780, 16
        %v837 = vor.u32 %v835, %v833
        %v839 = vshll.u32 %v781, 16
        %v841 = vrot.slane %v839, 1
        %v842 = vsel %vm790, %v837, %v841
        %v843 = vshrl.u32 %v781, 16
        %v845 = vor.u32 %v843, %v841
        %v847 = vshll.u32 %v782, 16
        %v849 = vrot.slane %v847, 1
        %v850 = vsel %vm790, %v845, %v849
        %v851 = vshrl.u32 %v782, 16
        %v853 = vor.u32 %v851, %v849
        %v855 = vshll.u32 %v783, 16
        %v857 = vrot.slane %v855, 1
        %v858 = vsel %vm790, %v853, %v857
        %v859 = vshrl.u32 %v783, 16
        %v861 = vor.u32 %v859, %v857
        %v863 = vshll.u32 %v784, 16
        %v865 = vrot.slane %v863, 1
        %v866 = vsel %vm790, %v861, %v865
        %v867 = vshrl.u32 %v784, 16
        %v869 = vor.u32 %v867, %v865
        %v871 = vshll.u32 %v785, 16
        %v873 = vrot.slane %v871, 1
        %v874 = vsel %vm790, %v869, %v873
        %v875 = vshrl.u32 %v785, 16
        %v877 = vor.u32 %v875, %v873
        %v879 = vshll.u32 %v786, 16
        %v881 = vrot.slane %v879, 1
        %v882 = vsel %vm790, %v877, %v881
        %v883 = vshrl.u32 %v786, 16
        %v885 = vor.u32 %v883, %v881
        %v887 = vshll.u32 %v787, 16
        %v889 = vrot.slane %v887, 1
        %v890 = vsel %vm790, %v885, %v889
        %v891 = vshrl.u32 %v787, 16
        %v893 = vor.u32 %v891, %v889
        %v895 = vshll.u32 %v788, 16
        %v897 = vrot.slane %v895, 1
        %v898 = vsel %vm790, %v893, %v897
        %v899 = vshrl.u32 %v788, 16
        %v901 = vor.u32 %v899, %v897
        %v903 = vshll.u32 %v789, 16
        %v905 = vrot.slane %v903, 1
        %v906 = vsel %vm790, %v901, %v905
        %v937 = vunpack.c.l.b16 %v701
        %v938 = vunpack.c.l.b16 %v702
        %v939 = vunpack.c.l.b16 %v703
        %v940 = vunpack.c.l.b16 %v704
        %v941 = vunpack.c.l.b16 %v705
        %v942 = vunpack.c.l.b16 %v706
        %v943 = vunpack.c.l.b16 %v707
        %v944 = vunpack.c.l.b16 %v708
        %v945 = vunpack.c.l.b16 %v709
        %v946 = vunpack.c.l.b16 %v710
        %v947 = vunpack.c.l.b16 %v711
        %v948 = vunpack.c.l.b16 %v712
        %v949 = vunpack.c.l.b16 %v713
        %v950 = vunpack.c.l.b16 %v714
        %v951 = vunpack.c.l.b16 %v715
        %v952 = vunpack.c.l.b16 %v716
        %v953 = vpack.c.b16 %v938, %v937
        %v954 = vpack.c.b16 %v940, %v939
        %v955 = vpack.c.b16 %v942, %v941
        %v956 = vpack.c.b16 %v944, %v943
        %v957 = vpack.c.b16 %v946, %v945
        %v958 = vpack.c.b16 %v948, %v947
        %v959 = vpack.c.b16 %v950, %v949
        %v960 = vpack.c.b16 %v952, %v951
        %969 = vmatprep.subr.bf16.mxu0 0
        %970 = vmatpush1.bf16.msra.mxu0 %v960
        %971 = vmatprep.subr.bf16.mxu0 0
        %972 = vmatpush1.bf16.msra.mxu0 %v959
        %973 = vmatprep.subr.bf16.mxu0 0
        %974 = vmatpush1.bf16.msra.mxu0 %v958
        %975 = vmatprep.subr.bf16.mxu0 0
        %976 = vmatpush1.bf16.msra.mxu0 %v957
        %977 = vmatprep.subr.bf16.mxu0 0
        %978 = vmatpush1.bf16.msra.mxu0 %v956
        %979 = vmatprep.subr.bf16.mxu0 0
        %980 = vmatpush1.bf16.msra.mxu0 %v955
        %981 = vmatprep.subr.bf16.mxu0 0
        %982 = vmatpush1.bf16.msra.mxu0 %v954
        %983 = vmatprep.subr.bf16.mxu0 0
        %984 = vmatpush1.bf16.msra.mxu0 %v953
        %985 = vmatprep.subr.bf16.mxu0 0
        %986 = vmatpush2.bf16.msra.mxu0 0
        %987 = vmatprep.subr.bf16.mxu0 0
        %988 = vmatpush2.bf16.msra.mxu0 0
        %989 = vmatprep.subr.bf16.mxu0 0
        %990 = vmatpush2.bf16.msra.mxu0 0
        %991 = vmatprep.subr.bf16.mxu0 0
        %992 = vmatpush2.bf16.msra.mxu0 0
        %993 = vmatprep.subr.bf16.mxu0 0
        %994 = vmatpush2.bf16.msra.mxu0 0
        %995 = vmatprep.subr.bf16.mxu0 0
        %996 = vmatpush2.bf16.msra.mxu0 0
        %997 = vmatprep.subr.bf16.mxu0 0
        %998 = vmatpush2.bf16.msra.mxu0 0
        %999 = vmatprep.subr.bf16.mxu0 0
        %1000 = vmatpush2.bf16.msra.mxu0 0
        %1001 = vmatprep.mubr.bf16.mxu0 0
        %1002 = vmatmul.mubr.bf16.gmra.mxu0 %v802
        %v1003 = vpop.f32.mrf.mxu0
        %v1004 = vadd.f32 0.0, %v1003
        %v1005 = vpop.f32.mrf.mxu0
        %v1006 = vpop.f32.mrf.mxu0
        %v1007 = vadd.f32 0.0, %v1006
        %v1008 = vpop.f32.mrf.mxu0
        %1009 = vmatprep.mubr.bf16.mxu0 0
        %1010 = vmatmul.mubr.bf16.gmra.mxu0 %v810
        %v1011 = vpop.f32.mrf.mxu0
        %v1012 = vadd.f32 0.0, %v1011
        %v1013 = vpop.f32.mrf.mxu0
        %v1014 = vpop.f32.mrf.mxu0
        %v1015 = vadd.f32 0.0, %v1014
        %v1016 = vpop.f32.mrf.mxu0
        %1017 = vmatprep.mubr.bf16.mxu0 0
        %1018 = vmatmul.mubr.bf16.gmra.mxu0 %v818
        %v1019 = vpop.f32.mrf.mxu0
        %v1020 = vadd.f32 0.0, %v1019
        %v1021 = vpop.f32.mrf.mxu0
        %v1022 = vpop.f32.mrf.mxu0
        %v1023 = vadd.f32 0.0, %v1022
        %v1024 = vpop.f32.mrf.mxu0
        %1025 = vmatprep.mubr.bf16.mxu0 0
        %1026 = vmatmul.mubr.bf16.gmra.mxu0 %v826
        %v1027 = vpop.f32.mrf.mxu0
        %v1028 = vadd.f32 0.0, %v1027
        %v1029 = vpop.f32.mrf.mxu0
        %v1030 = vpop.f32.mrf.mxu0
        %v1031 = vadd.f32 0.0, %v1030
        %v1032 = vpop.f32.mrf.mxu0
        %1033 = vmatprep.mubr.bf16.mxu0 0
        %1034 = vmatmul.mubr.bf16.gmra.mxu0 %v834
        %v1035 = vpop.f32.mrf.mxu0
        %v1036 = vadd.f32 0.0, %v1035
        %v1037 = vpop.f32.mrf.mxu0
        %v1038 = vpop.f32.mrf.mxu0
        %v1039 = vadd.f32 0.0, %v1038
        %v1040 = vpop.f32.mrf.mxu0
        %1041 = vmatprep.mubr.bf16.mxu0 0
        %1042 = vmatmul.mubr.bf16.gmra.mxu0 %v842
        %v1043 = vpop.f32.mrf.mxu0
        %v1044 = vadd.f32 0.0, %v1043
        %v1045 = vpop.f32.mrf.mxu0
        %v1046 = vpop.f32.mrf.mxu0
        %v1047 = vadd.f32 0.0, %v1046
        %v1048 = vpop.f32.mrf.mxu0
        %1049 = vmatprep.mubr.bf16.mxu0 0
        %1050 = vmatmul.mubr.bf16.gmra.mxu0 %v850
        %v1051 = vpop.f32.mrf.mxu0
        %v1052 = vadd.f32 0.0, %v1051
        %v1053 = vpop.f32.mrf.mxu0
        %v1054 = vpop.f32.mrf.mxu0
        %v1055 = vadd.f32 0.0, %v1054
        %v1056 = vpop.f32.mrf.mxu0
        %1057 = vmatprep.mubr.bf16.mxu0 0
        %1058 = vmatmul.mubr.bf16.gmra.mxu0 %v858
        %v1059 = vpop.f32.mrf.mxu0
        %v1060 = vadd.f32 0.0, %v1059
        %v1061 = vpop.f32.mrf.mxu0
        %v1062 = vpop.f32.mrf.mxu0
        %v1063 = vadd.f32 0.0, %v1062
        %v1064 = vpop.f32.mrf.mxu0
        %1065 = vmatprep.mubr.bf16.mxu0 0
        %1066 = vmatmul.mubr.bf16.gmra.mxu0 %v866
        %v1067 = vpop.f32.mrf.mxu0
        %v1068 = vadd.f32 0.0, %v1067
        %v1069 = vpop.f32.mrf.mxu0
        %v1070 = vpop.f32.mrf.mxu0
        %v1071 = vadd.f32 0.0, %v1070
        %v1072 = vpop.f32.mrf.mxu0
        %1073 = vmatprep.mubr.bf16.mxu0 0
        %1074 = vmatmul.mubr.bf16.gmra.mxu0 %v874
        %v1075 = vpop.f32.mrf.mxu0
        %v1076 = vadd.f32 0.0, %v1075
        %v1077 = vpop.f32.mrf.mxu0
        %v1078 = vpop.f32.mrf.mxu0
        %v1079 = vadd.f32 0.0, %v1078
        %v1080 = vpop.f32.mrf.mxu0
        %1081 = vmatprep.mubr.bf16.mxu0 0
        %1082 = vmatmul.mubr.bf16.gmra.mxu0 %v882
        %v1083 = vpop.f32.mrf.mxu0
        %v1084 = vadd.f32 0.0, %v1083
        %v1085 = vpop.f32.mrf.mxu0
        %v1086 = vpop.f32.mrf.mxu0
        %v1087 = vadd.f32 0.0, %v1086
        %v1088 = vpop.f32.mrf.mxu0
        %1089 = vmatprep.mubr.bf16.mxu0 0
        %1090 = vmatmul.mubr.bf16.gmra.mxu0 %v890
        %v1091 = vpop.f32.mrf.mxu0
        %v1092 = vadd.f32 0.0, %v1091
        %v1093 = vpop.f32.mrf.mxu0
        %v1094 = vpop.f32.mrf.mxu0
        %v1095 = vadd.f32 0.0, %v1094
        %v1096 = vpop.f32.mrf.mxu0
        %1097 = vmatprep.mubr.bf16.mxu0 0
        %1098 = vmatmul.mubr.bf16.gmra.mxu0 %v898
        %v1099 = vpop.f32.mrf.mxu0
        %v1100 = vadd.f32 0.0, %v1099
        %v1101 = vpop.f32.mrf.mxu0
        %v1102 = vpop.f32.mrf.mxu0
        %v1103 = vadd.f32 0.0, %v1102
        %v1104 = vpop.f32.mrf.mxu0
        %1105 = vmatprep.mubr.bf16.mxu0 0
        %1106 = vmatmul.mubr.bf16.gmra.mxu0 %v906
        %v1107 = vpop.f32.mrf.mxu0
        %v1108 = vadd.f32 0.0, %v1107
        %v1109 = vpop.f32.mrf.mxu0
        %v1110 = vpop.f32.mrf.mxu0
        %v1111 = vadd.f32 0.0, %v1110
        %v1112 = vpop.f32.mrf.mxu0
        %1113 = vdwg.mxu0
        %v1114 = vld [vmem:[#allocation2] sm:$0xff]
        %v1115 = vld [vmem:[#allocation2 + $0x8] sm:$0xff]
        %v1116 = vld [vmem:[#allocation2 + $0x10] sm:$0xff]
        %v1117 = vld [vmem:[#allocation2 + $0x18] sm:$0xff]
        %v1118 = vld [vmem:[#allocation2 + $0x20] sm:$0xff]
        %v1119 = vld [vmem:[#allocation2 + $0x28] sm:$0xff]
        %v1120 = vld [vmem:[#allocation2 + $0x30] sm:$0xff]
        %v1121 = vld [vmem:[#allocation2 + $0x38] sm:$0xff]
        %v1122 = vld [vmem:[#allocation2 + $0x40] sm:$0xff]
        %v1123 = vld [vmem:[#allocation2 + $0x48] sm:$0xff]
        %v1124 = vld [vmem:[#allocation2 + $0x50] sm:$0xff]
        %v1125 = vld [vmem:[#allocation2 + $0x58] sm:$0xff]
        %v1126 = vld [vmem:[#allocation2 + $0x60] sm:$0xff]
        %v1127 = vld [vmem:[#allocation2 + $0x68] sm:$0xff]
        %v1128 = vld [vmem:[#allocation2 + $0x70] sm:$0xff]
        %v1129 = vld [vmem:[#allocation2 + $0x78] sm:$0xff]
        %v1130 = vld [vmem:[#allocation2 + $0x80] sm:$0xff]
        %v1131 = vld [vmem:[#allocation2 + $0x88] sm:$0xff]
        %v1132 = vld [vmem:[#allocation2 + $0x90] sm:$0xff]
        %v1133 = vld [vmem:[#allocation2 + $0x98] sm:$0xff]
        %v1134 = vld [vmem:[#allocation2 + $0xa0] sm:$0xff]
        %v1135 = vld [vmem:[#allocation2 + $0xa8] sm:$0xff]
        %v1136 = vld [vmem:[#allocation2 + $0xb0] sm:$0xff]
        %v1137 = vld [vmem:[#allocation2 + $0xb8] sm:$0xff]
        %v1138 = vld [vmem:[#allocation2 + $0xc0] sm:$0xff]
        %v1139 = vld [vmem:[#allocation2 + $0xc8] sm:$0xff]
        %v1140 = vld [vmem:[#allocation2 + $0xd0] sm:$0xff]
        %v1141 = vld [vmem:[#allocation2 + $0xd8] sm:$0xff]
        %v1142 = vadd.f32 %v1114, %v1004
        %v1143 = vadd.f32 %v1115, %v1007
        %v1144 = vadd.f32 %v1116, %v1012
        %v1145 = vadd.f32 %v1117, %v1015
        %v1146 = vadd.f32 %v1118, %v1020
        %v1147 = vadd.f32 %v1119, %v1023
        %v1148 = vadd.f32 %v1120, %v1028
        %v1149 = vadd.f32 %v1121, %v1031
        %v1150 = vadd.f32 %v1122, %v1036
        %v1151 = vadd.f32 %v1123, %v1039
        %v1152 = vadd.f32 %v1124, %v1044
        %v1153 = vadd.f32 %v1125, %v1047
        %v1154 = vadd.f32 %v1126, %v1052
        %v1155 = vadd.f32 %v1127, %v1055
        %v1156 = vadd.f32 %v1128, %v1060
        %v1157 = vadd.f32 %v1129, %v1063
        %v1158 = vadd.f32 %v1130, %v1068
        %v1159 = vadd.f32 %v1131, %v1071
        %v1160 = vadd.f32 %v1132, %v1076
        %v1161 = vadd.f32 %v1133, %v1079
        %v1162 = vadd.f32 %v1134, %v1084
        %v1163 = vadd.f32 %v1135, %v1087
        %v1164 = vadd.f32 %v1136, %v1092
        %v1165 = vadd.f32 %v1137, %v1095
        %v1166 = vadd.f32 %v1138, %v1100
        %v1167 = vadd.f32 %v1139, %v1103
        %v1168 = vadd.f32 %v1140, %v1108
        %v1169 = vadd.f32 %v1141, %v1111
        %1170 = vst [vmem:[#allocation2] sm:$0xff] %v1142
        %1171 = vst [vmem:[#allocation2 + $0x8] sm:$0xff] %v1143
        %1172 = vst [vmem:[#allocation2 + $0x10] sm:$0xff] %v1144
        %1173 = vst [vmem:[#allocation2 + $0x18] sm:$0xff] %v1145
        %1174 = vst [vmem:[#allocation2 + $0x20] sm:$0xff] %v1146
        %1175 = vst [vmem:[#allocation2 + $0x28] sm:$0xff] %v1147
        %1176 = vst [vmem:[#allocation2 + $0x30] sm:$0xff] %v1148
        %1177 = vst [vmem:[#allocation2 + $0x38] sm:$0xff] %v1149
        %1178 = vst [vmem:[#allocation2 + $0x40] sm:$0xff] %v1150
        %1179 = vst [vmem:[#allocation2 + $0x48] sm:$0xff] %v1151
        %1180 = vst [vmem:[#allocation2 + $0x50] sm:$0xff] %v1152
        %1181 = vst [vmem:[#allocation2 + $0x58] sm:$0xff] %v1153
        %1182 = vst [vmem:[#allocation2 + $0x60] sm:$0xff] %v1154
        %1183 = vst [vmem:[#allocation2 + $0x68] sm:$0xff] %v1155
        %1184 = vst [vmem:[#allocation2 + $0x70] sm:$0xff] %v1156
        %1185 = vst [vmem:[#allocation2 + $0x78] sm:$0xff] %v1157
        %1186 = vst [vmem:[#allocation2 + $0x80] sm:$0xff] %v1158
        %1187 = vst [vmem:[#allocation2 + $0x88] sm:$0xff] %v1159
        %1188 = vst [vmem:[#allocation2 + $0x90] sm:$0xff] %v1160
        %1189 = vst [vmem:[#allocation2 + $0x98] sm:$0xff] %v1161
        %1190 = vst [vmem:[#allocation2 + $0xa0] sm:$0xff] %v1162
        %1191 = vst [vmem:[#allocation2 + $0xa8] sm:$0xff] %v1163
        %1192 = vst [vmem:[#allocation2 + $0xb0] sm:$0xff] %v1164
        %1193 = vst [vmem:[#allocation2 + $0xb8] sm:$0xff] %v1165
        %1194 = vst [vmem:[#allocation2 + $0xc0] sm:$0xff] %v1166
        %1195 = vst [vmem:[#allocation2 + $0xc8] sm:$0xff] %v1167
        %1196 = vst [vmem:[#allocation2 + $0xd0] sm:$0xff] %v1168
        %1197 = vst [vmem:[#allocation2 + $0xd8] sm:$0xff] %v1169
        %v1198 = vld [vmem:[%s258] sm:$0xe]
        %v1199 = vld [vmem:[%s258 + $0x4] sm:$0xf]
        %v1200 = vld [vmem:[%s258 + $0x8] sm:$0xf]
        %v1201 = vld [vmem:[%s258 + $0xc] sm:$0xf]
        %v1202 = vld [vmem:[%s258 + $0x10] sm:$0xf]
        %v1203 = vld [vmem:[%s258 + $0x14] sm:$0xf]
        %v1204 = vld [vmem:[%s258 + $0x18] sm:$0xf]
        %v1205 = vld [vmem:[%s258 + $0x1c] sm:$0xf]
        %v1206 = vld [vmem:[%s258 + $0x20] sm:$0xf]
        %v1207 = vld [vmem:[%s258 + $0x24] sm:$0xf]
        %v1208 = vld [vmem:[%s258 + $0x28] sm:$0xf]
        %v1209 = vld [vmem:[%s258 + $0x2c] sm:$0xf]
        %v1210 = vld [vmem:[%s258 + $0x30] sm:$0xf]
        %v1211 = vld [vmem:[%s258 + $0x34] sm:$0xf]
        %v1212 = vld [vmem:[%s258 + $0x38] sm:$0xf]
        %v1213 = vld [vmem:[%s258 + $0x3c] sm:$0xf]
        %v1214 = vld [vmem:[%s258 + $0x40] sm:$0xf]
        %v1215 = vld [vmem:[%s258 + $0x44] sm:$0xf]
        %v1216 = vld [vmem:[%s258 + $0x48] sm:$0xf]
        %v1217 = vld [vmem:[%s258 + $0x4c] sm:$0xf]
        %v1218 = vld [vmem:[%s258 + $0x50] sm:$0xf]
        %v1219 = vld [vmem:[%s258 + $0x54] sm:$0xf]
        %v1220 = vld [vmem:[%s258 + $0x58] sm:$0xf]
        %v1221 = vld [vmem:[%s258 + $0x5c] sm:$0xf]
        %v1222 = vld [vmem:[%s258 + $0x60] sm:$0xf]
        %v1223 = vld [vmem:[%s258 + $0x64] sm:$0xf]
        %v1224 = vld [vmem:[%s258 + $0x68] sm:$0xf]
        %v1225 = vld [vmem:[%s258 + $0x6c] sm:$0xf]
        %v1226 = vld [vmem:[%s258 + $0x70] sm:$0x1]
        %s1227 = scalar_lea.vmem %s267, 128 [#allocation6]
        %v1228 = vld [vmem:[%s1227] sm:$0xf]
        %v1229 = vld [vmem:[%s1227 + $0x4] sm:$0xf]
        %v1230 = vld [vmem:[%s1227 + $0x8] sm:$0xf]
        %v1231 = vld [vmem:[%s1227 + $0xc] sm:$0xf]
        %v1232 = vld [vmem:[%s1227 + $0x10] sm:$0xf]
        %v1233 = vld [vmem:[%s1227 + $0x14] sm:$0xf]
        %v1234 = vld [vmem:[%s1227 + $0x18] sm:$0xf]
        %v1235 = vld [vmem:[%s1227 + $0x1c] sm:$0xf]
        %v1236 = vld [vmem:[%s1227 + $0x20] sm:$0xf]
        %v1237 = vld [vmem:[%s1227 + $0x24] sm:$0xf]
        %v1238 = vld [vmem:[%s1227 + $0x28] sm:$0xf]
        %v1239 = vld [vmem:[%s1227 + $0x2c] sm:$0xf]
        %v1240 = vld [vmem:[%s1227 + $0x30] sm:$0xf]
        %v1241 = vld [vmem:[%s1227 + $0x34] sm:$0xf]
        %v1242 = vld [vmem:[%s1227 + $0x38] sm:$0xf]
        %v1243 = vld [vmem:[%s1227 + $0x3c] sm:$0xf]
        %v1273 = vunpack.c.l.b16 %v1198
        %v1274 = vunpack.c.l.b16 %v1199
        %v1275 = vunpack.c.l.b16 %v1200
        %v1276 = vunpack.c.l.b16 %v1201
        %v1277 = vunpack.c.l.b16 %v1202
        %v1278 = vunpack.c.l.b16 %v1203
        %v1279 = vunpack.c.l.b16 %v1204
        %v1280 = vunpack.c.l.b16 %v1205
        %v1281 = vunpack.c.l.b16 %v1206
        %v1282 = vunpack.c.l.b16 %v1207
        %v1283 = vunpack.c.l.b16 %v1208
        %v1284 = vunpack.c.l.b16 %v1209
        %v1285 = vunpack.c.l.b16 %v1210
        %v1286 = vunpack.c.l.b16 %v1211
        %v1287 = vunpack.c.l.b16 %v1212
        %v1288 = vunpack.c.l.b16 %v1213
        %v1289 = vunpack.c.l.b16 %v1214
        %v1290 = vunpack.c.l.b16 %v1215
        %v1291 = vunpack.c.l.b16 %v1216
        %v1292 = vunpack.c.l.b16 %v1217
        %v1293 = vunpack.c.l.b16 %v1218
        %v1294 = vunpack.c.l.b16 %v1219
        %v1295 = vunpack.c.l.b16 %v1220
        %v1296 = vunpack.c.l.b16 %v1221
        %v1297 = vunpack.c.l.b16 %v1222
        %v1298 = vunpack.c.l.b16 %v1223
        %v1299 = vunpack.c.l.b16 %v1224
        %v1300 = vunpack.c.l.b16 %v1225
        %v1301 = vunpack.c.l.b16 %v1226
        %v1302 = vpack.c.b16 %v1274, %v1273
        %v1303 = vpack.c.b16 %v1276, %v1275
        %v1304 = vpack.c.b16 %v1278, %v1277
        %v1305 = vpack.c.b16 %v1280, %v1279
        %v1306 = vpack.c.b16 %v1282, %v1281
        %v1307 = vpack.c.b16 %v1284, %v1283
        %v1308 = vpack.c.b16 %v1286, %v1285
        %v1309 = vpack.c.b16 %v1288, %v1287
        %v1310 = vpack.c.b16 %v1290, %v1289
        %v1311 = vpack.c.b16 %v1292, %v1291
        %v1312 = vpack.c.b16 %v1294, %v1293
        %v1313 = vpack.c.b16 %v1296, %v1295
        %v1314 = vpack.c.b16 %v1298, %v1297
        %v1315 = vpack.c.b16 %v1300, %v1299
        %v1316 = vpack.c.b16 %v1301, %v1301
        %vm1317 = vcmask 1046528
        %v1318 = vrot.slane %v1302, 1
        %v1319 = vrot.slane %v1303, 1
        %v1320 = vsel %vm1317, %v1318, %v1319
        %v1321 = vrot.slane %v1304, 1
        %v1322 = vsel %vm1317, %v1319, %v1321
        %v1323 = vrot.slane %v1305, 1
        %v1324 = vsel %vm1317, %v1321, %v1323
        %v1325 = vrot.slane %v1306, 1
        %v1326 = vsel %vm1317, %v1323, %v1325
        %v1327 = vrot.slane %v1307, 1
        %v1328 = vsel %vm1317, %v1325, %v1327
        %v1329 = vrot.slane %v1308, 1
        %v1330 = vsel %vm1317, %v1327, %v1329
        %v1331 = vrot.slane %v1309, 1
        %v1332 = vsel %vm1317, %v1329, %v1331
        %v1333 = vrot.slane %v1310, 1
        %v1334 = vsel %vm1317, %v1331, %v1333
        %v1335 = vrot.slane %v1311, 1
        %v1336 = vsel %vm1317, %v1333, %v1335
        %v1337 = vrot.slane %v1312, 1
        %v1338 = vsel %vm1317, %v1335, %v1337
        %v1339 = vrot.slane %v1313, 1
        %v1340 = vsel %vm1317, %v1337, %v1339
        %v1341 = vrot.slane %v1314, 1
        %v1342 = vsel %vm1317, %v1339, %v1341
        %v1343 = vrot.slane %v1315, 1
        %v1344 = vsel %vm1317, %v1341, %v1343
        %v1345 = vrot.slane %v1316, 1
        %v1346 = vsel %vm1317, %v1343, %v1345
        %v1377 = vunpack.c.l.b16 %v1228
        %v1378 = vunpack.c.l.b16 %v1229
        %v1379 = vunpack.c.l.b16 %v1230
        %v1380 = vunpack.c.l.b16 %v1231
        %v1381 = vunpack.c.l.b16 %v1232
        %v1382 = vunpack.c.l.b16 %v1233
        %v1383 = vunpack.c.l.b16 %v1234
        %v1384 = vunpack.c.l.b16 %v1235
        %v1385 = vunpack.c.l.b16 %v1236
        %v1386 = vunpack.c.l.b16 %v1237
        %v1387 = vunpack.c.l.b16 %v1238
        %v1388 = vunpack.c.l.b16 %v1239
        %v1389 = vunpack.c.l.b16 %v1240
        %v1390 = vunpack.c.l.b16 %v1241
        %v1391 = vunpack.c.l.b16 %v1242
        %v1392 = vunpack.c.l.b16 %v1243
        %v1393 = vpack.c.b16 %v1378, %v1377
        %v1394 = vpack.c.b16 %v1380, %v1379
        %v1395 = vpack.c.b16 %v1382, %v1381
        %v1396 = vpack.c.b16 %v1384, %v1383
        %v1397 = vpack.c.b16 %v1386, %v1385
        %v1398 = vpack.c.b16 %v1388, %v1387
        %v1399 = vpack.c.b16 %v1390, %v1389
        %v1400 = vpack.c.b16 %v1392, %v1391
        %1409 = vmatprep.subr.bf16.mxu0 0
        %1410 = vmatpush1.bf16.msra.mxu0 %v1400
        %1411 = vmatprep.subr.bf16.mxu0 0
        %1412 = vmatpush1.bf16.msra.mxu0 %v1399
        %1413 = vmatprep.subr.bf16.mxu0 0
        %1414 = vmatpush1.bf16.msra.mxu0 %v1398
        %1415 = vmatprep.subr.bf16.mxu0 0
        %1416 = vmatpush1.bf16.msra.mxu0 %v1397
        %1417 = vmatprep.subr.bf16.mxu0 0
        %1418 = vmatpush1.bf16.msra.mxu0 %v1396
        %1419 = vmatprep.subr.bf16.mxu0 0
        %1420 = vmatpush1.bf16.msra.mxu0 %v1395
        %1421 = vmatprep.subr.bf16.mxu0 0
        %1422 = vmatpush1.bf16.msra.mxu0 %v1394
        %1423 = vmatprep.subr.bf16.mxu0 0
        %1424 = vmatpush1.bf16.msra.mxu0 %v1393
        %1425 = vmatprep.subr.bf16.mxu0 0
        %1426 = vmatpush2.bf16.msra.mxu0 0
        %1427 = vmatprep.subr.bf16.mxu0 0
        %1428 = vmatpush2.bf16.msra.mxu0 0
        %1429 = vmatprep.subr.bf16.mxu0 0
        %1430 = vmatpush2.bf16.msra.mxu0 0
        %1431 = vmatprep.subr.bf16.mxu0 0
        %1432 = vmatpush2.bf16.msra.mxu0 0
        %1433 = vmatprep.subr.bf16.mxu0 0
        %1434 = vmatpush2.bf16.msra.mxu0 0
        %1435 = vmatprep.subr.bf16.mxu0 0
        %1436 = vmatpush2.bf16.msra.mxu0 0
        %1437 = vmatprep.subr.bf16.mxu0 0
        %1438 = vmatpush2.bf16.msra.mxu0 0
        %1439 = vmatprep.subr.bf16.mxu0 0
        %1440 = vmatpush2.bf16.msra.mxu0 0
        %1441 = vmatprep.mubr.bf16.mxu0 0
        %1442 = vmatmul.mubr.bf16.gmra.mxu0 %v1320
        %v1443 = vpop.f32.mrf.mxu0
        %v1444 = vadd.f32 0.0, %v1443
        %v1445 = vpop.f32.mrf.mxu0
        %v1446 = vpop.f32.mrf.mxu0
        %v1447 = vadd.f32 0.0, %v1446
        %v1448 = vpop.f32.mrf.mxu0
        %1449 = vmatprep.mubr.bf16.mxu0 0
        %1450 = vmatmul.mubr.bf16.gmra.mxu0 %v1322
        %v1451 = vpop.f32.mrf.mxu0
        %v1452 = vadd.f32 0.0, %v1451
        %v1453 = vpop.f32.mrf.mxu0
        %v1454 = vpop.f32.mrf.mxu0
        %v1455 = vadd.f32 0.0, %v1454
        %v1456 = vpop.f32.mrf.mxu0
        %1457 = vmatprep.mubr.bf16.mxu0 0
        %1458 = vmatmul.mubr.bf16.gmra.mxu0 %v1324
        %v1459 = vpop.f32.mrf.mxu0
        %v1460 = vadd.f32 0.0, %v1459
        %v1461 = vpop.f32.mrf.mxu0
        %v1462 = vpop.f32.mrf.mxu0
        %v1463 = vadd.f32 0.0, %v1462
        %v1464 = vpop.f32.mrf.mxu0
        %1465 = vmatprep.mubr.bf16.mxu0 0
        %1466 = vmatmul.mubr.bf16.gmra.mxu0 %v1326
        %v1467 = vpop.f32.mrf.mxu0
        %v1468 = vadd.f32 0.0, %v1467
        %v1469 = vpop.f32.mrf.mxu0
        %v1470 = vpop.f32.mrf.mxu0
        %v1471 = vadd.f32 0.0, %v1470
        %v1472 = vpop.f32.mrf.mxu0
        %1473 = vmatprep.mubr.bf16.mxu0 0
        %1474 = vmatmul.mubr.bf16.gmra.mxu0 %v1328
        %v1475 = vpop.f32.mrf.mxu0
        %v1476 = vadd.f32 0.0, %v1475
        %v1477 = vpop.f32.mrf.mxu0
        %v1478 = vpop.f32.mrf.mxu0
        %v1479 = vadd.f32 0.0, %v1478
        %v1480 = vpop.f32.mrf.mxu0
        %1481 = vmatprep.mubr.bf16.mxu0 0
        %1482 = vmatmul.mubr.bf16.gmra.mxu0 %v1330
        %v1483 = vpop.f32.mrf.mxu0
        %v1484 = vadd.f32 0.0, %v1483
        %v1485 = vpop.f32.mrf.mxu0
        %v1486 = vpop.f32.mrf.mxu0
        %v1487 = vadd.f32 0.0, %v1486
        %v1488 = vpop.f32.mrf.mxu0
        %1489 = vmatprep.mubr.bf16.mxu0 0
        %1490 = vmatmul.mubr.bf16.gmra.mxu0 %v1332
        %v1491 = vpop.f32.mrf.mxu0
        %v1492 = vadd.f32 0.0, %v1491
        %v1493 = vpop.f32.mrf.mxu0
        %v1494 = vpop.f32.mrf.mxu0
        %v1495 = vadd.f32 0.0, %v1494
        %v1496 = vpop.f32.mrf.mxu0
        %1497 = vmatprep.mubr.bf16.mxu0 0
        %1498 = vmatmul.mubr.bf16.gmra.mxu0 %v1334
        %v1499 = vpop.f32.mrf.mxu0
        %v1500 = vadd.f32 0.0, %v1499
        %v1501 = vpop.f32.mrf.mxu0
        %v1502 = vpop.f32.mrf.mxu0
        %v1503 = vadd.f32 0.0, %v1502
        %v1504 = vpop.f32.mrf.mxu0
        %1505 = vmatprep.mubr.bf16.mxu0 0
        %1506 = vmatmul.mubr.bf16.gmra.mxu0 %v1336
        %v1507 = vpop.f32.mrf.mxu0
        %v1508 = vadd.f32 0.0, %v1507
        %v1509 = vpop.f32.mrf.mxu0
        %v1510 = vpop.f32.mrf.mxu0
        %v1511 = vadd.f32 0.0, %v1510
        %v1512 = vpop.f32.mrf.mxu0
        %1513 = vmatprep.mubr.bf16.mxu0 0
        %1514 = vmatmul.mubr.bf16.gmra.mxu0 %v1338
        %v1515 = vpop.f32.mrf.mxu0
        %v1516 = vadd.f32 0.0, %v1515
        %v1517 = vpop.f32.mrf.mxu0
        %v1518 = vpop.f32.mrf.mxu0
        %v1519 = vadd.f32 0.0, %v1518
        %v1520 = vpop.f32.mrf.mxu0
        %1521 = vmatprep.mubr.bf16.mxu0 0
        %1522 = vmatmul.mubr.bf16.gmra.mxu0 %v1340
        %v1523 = vpop.f32.mrf.mxu0
        %v1524 = vadd.f32 0.0, %v1523
        %v1525 = vpop.f32.mrf.mxu0
        %v1526 = vpop.f32.mrf.mxu0
        %v1527 = vadd.f32 0.0, %v1526
        %v1528 = vpop.f32.mrf.mxu0
        %1529 = vmatprep.mubr.bf16.mxu0 0
        %1530 = vmatmul.mubr.bf16.gmra.mxu0 %v1342
        %v1531 = vpop.f32.mrf.mxu0
        %v1532 = vadd.f32 0.0, %v1531
        %v1533 = vpop.f32.mrf.mxu0
        %v1534 = vpop.f32.mrf.mxu0
        %v1535 = vadd.f32 0.0, %v1534
        %v1536 = vpop.f32.mrf.mxu0
        %1537 = vmatprep.mubr.bf16.mxu0 0
        %1538 = vmatmul.mubr.bf16.gmra.mxu0 %v1344
        %v1539 = vpop.f32.mrf.mxu0
        %v1540 = vadd.f32 0.0, %v1539
        %v1541 = vpop.f32.mrf.mxu0
        %v1542 = vpop.f32.mrf.mxu0
        %v1543 = vadd.f32 0.0, %v1542
        %v1544 = vpop.f32.mrf.mxu0
        %1545 = vmatprep.mubr.bf16.mxu0 0
        %1546 = vmatmul.mubr.bf16.gmra.mxu0 %v1346
        %v1547 = vpop.f32.mrf.mxu0
        %v1548 = vadd.f32 0.0, %v1547
        %v1549 = vpop.f32.mrf.mxu0
        %v1550 = vpop.f32.mrf.mxu0
        %v1551 = vadd.f32 0.0, %v1550
        %v1552 = vpop.f32.mrf.mxu0
        %1553 = vdwg.mxu0
        %v1554 = vld [vmem:[#allocation2] sm:$0xff]
        %v1555 = vld [vmem:[#allocation2 + $0x8] sm:$0xff]
        %v1556 = vld [vmem:[#allocation2 + $0x10] sm:$0xff]
        %v1557 = vld [vmem:[#allocation2 + $0x18] sm:$0xff]
        %v1558 = vld [vmem:[#allocation2 + $0x20] sm:$0xff]
        %v1559 = vld [vmem:[#allocation2 + $0x28] sm:$0xff]
        %v1560 = vld [vmem:[#allocation2 + $0x30] sm:$0xff]
        %v1561 = vld [vmem:[#allocation2 + $0x38] sm:$0xff]
        %v1562 = vld [vmem:[#allocation2 + $0x40] sm:$0xff]
        %v1563 = vld [vmem:[#allocation2 + $0x48] sm:$0xff]
        %v1564 = vld [vmem:[#allocation2 + $0x50] sm:$0xff]
        %v1565 = vld [vmem:[#allocation2 + $0x58] sm:$0xff]
        %v1566 = vld [vmem:[#allocation2 + $0x60] sm:$0xff]
        %v1567 = vld [vmem:[#allocation2 + $0x68] sm:$0xff]
        %v1568 = vld [vmem:[#allocation2 + $0x70] sm:$0xff]
        %v1569 = vld [vmem:[#allocation2 + $0x78] sm:$0xff]
        %v1570 = vld [vmem:[#allocation2 + $0x80] sm:$0xff]
        %v1571 = vld [vmem:[#allocation2 + $0x88] sm:$0xff]
        %v1572 = vld [vmem:[#allocation2 + $0x90] sm:$0xff]
        %v1573 = vld [vmem:[#allocation2 + $0x98] sm:$0xff]
        %v1574 = vld [vmem:[#allocation2 + $0xa0] sm:$0xff]
        %v1575 = vld [vmem:[#allocation2 + $0xa8] sm:$0xff]
        %v1576 = vld [vmem:[#allocation2 + $0xb0] sm:$0xff]
        %v1577 = vld [vmem:[#allocation2 + $0xb8] sm:$0xff]
        %v1578 = vld [vmem:[#allocation2 + $0xc0] sm:$0xff]
        %v1579 = vld [vmem:[#allocation2 + $0xc8] sm:$0xff]
        %v1580 = vld [vmem:[#allocation2 + $0xd0] sm:$0xff]
        %v1581 = vld [vmem:[#allocation2 + $0xd8] sm:$0xff]
        %v1582 = vadd.f32 %v1554, %v1444
        %v1583 = vadd.f32 %v1555, %v1447
        %v1584 = vadd.f32 %v1556, %v1452
        %v1585 = vadd.f32 %v1557, %v1455
        %v1586 = vadd.f32 %v1558, %v1460
        %v1587 = vadd.f32 %v1559, %v1463
        %v1588 = vadd.f32 %v1560, %v1468
        %v1589 = vadd.f32 %v1561, %v1471
        %v1590 = vadd.f32 %v1562, %v1476
        %v1591 = vadd.f32 %v1563, %v1479
        %v1592 = vadd.f32 %v1564, %v1484
        %v1593 = vadd.f32 %v1565, %v1487
        %v1594 = vadd.f32 %v1566, %v1492
        %v1595 = vadd.f32 %v1567, %v1495
        %v1596 = vadd.f32 %v1568, %v1500
        %v1597 = vadd.f32 %v1569, %v1503
        %v1598 = vadd.f32 %v1570, %v1508
        %v1599 = vadd.f32 %v1571, %v1511
        %v1600 = vadd.f32 %v1572, %v1516
        %v1601 = vadd.f32 %v1573, %v1519
        %v1602 = vadd.f32 %v1574, %v1524
        %v1603 = vadd.f32 %v1575, %v1527
        %v1604 = vadd.f32 %v1576, %v1532
        %v1605 = vadd.f32 %v1577, %v1535
        %v1606 = vadd.f32 %v1578, %v1540
        %v1607 = vadd.f32 %v1579, %v1543
        %v1608 = vadd.f32 %v1580, %v1548
        %v1609 = vadd.f32 %v1581, %v1551
        %1610 = vst [vmem:[#allocation2] sm:$0xff] %v1582
        %1611 = vst [vmem:[#allocation2 + $0x8] sm:$0xff] %v1583
        %1612 = vst [vmem:[#allocation2 + $0x10] sm:$0xff] %v1584
        %1613 = vst [vmem:[#allocation2 + $0x18] sm:$0xff] %v1585
        %1614 = vst [vmem:[#allocation2 + $0x20] sm:$0xff] %v1586
        %1615 = vst [vmem:[#allocation2 + $0x28] sm:$0xff] %v1587
        %1616 = vst [vmem:[#allocation2 + $0x30] sm:$0xff] %v1588
        %1617 = vst [vmem:[#allocation2 + $0x38] sm:$0xff] %v1589
        %1618 = vst [vmem:[#allocation2 + $0x40] sm:$0xff] %v1590
        %1619 = vst [vmem:[#allocation2 + $0x48] sm:$0xff] %v1591
        %1620 = vst [vmem:[#allocation2 + $0x50] sm:$0xff] %v1592
        %1621 = vst [vmem:[#allocation2 + $0x58] sm:$0xff] %v1593
        %1622 = vst [vmem:[#allocation2 + $0x60] sm:$0xff] %v1594
        %1623 = vst [vmem:[#allocation2 + $0x68] sm:$0xff] %v1595
        %1624 = vst [vmem:[#allocation2 + $0x70] sm:$0xff] %v1596
        %1625 = vst [vmem:[#allocation2 + $0x78] sm:$0xff] %v1597
        %1626 = vst [vmem:[#allocation2 + $0x80] sm:$0xff] %v1598
        %1627 = vst [vmem:[#allocation2 + $0x88] sm:$0xff] %v1599
        %1628 = vst [vmem:[#allocation2 + $0x90] sm:$0xff] %v1600
        %1629 = vst [vmem:[#allocation2 + $0x98] sm:$0xff] %v1601
        %1630 = vst [vmem:[#allocation2 + $0xa0] sm:$0xff] %v1602
        %1631 = vst [vmem:[#allocation2 + $0xa8] sm:$0xff] %v1603
        %1632 = vst [vmem:[#allocation2 + $0xb0] sm:$0xff] %v1604
        %1633 = vst [vmem:[#allocation2 + $0xb8] sm:$0xff] %v1605
        %1634 = vst [vmem:[#allocation2 + $0xc0] sm:$0xff] %v1606
        %1635 = vst [vmem:[#allocation2 + $0xc8] sm:$0xff] %v1607
        %1636 = vst [vmem:[#allocation2 + $0xd0] sm:$0xff] %v1608
        %1637 = vst [vmem:[#allocation2 + $0xd8] sm:$0xff] %v1609
        %v1638 = vld [vmem:[%s258 + $0x8] sm:$0xf]
        %v1639 = vld [vmem:[%s258 + $0xc] sm:$0xf]
        %v1640 = vld [vmem:[%s258 + $0x10] sm:$0xf]
        %v1641 = vld [vmem:[%s258 + $0x14] sm:$0xf]
        %v1642 = vld [vmem:[%s258 + $0x18] sm:$0xf]
        %v1643 = vld [vmem:[%s258 + $0x1c] sm:$0xf]
        %v1644 = vld [vmem:[%s258 + $0x20] sm:$0xf]
        %v1645 = vld [vmem:[%s258 + $0x24] sm:$0xf]
        %v1646 = vld [vmem:[%s258 + $0x28] sm:$0xf]
        %v1647 = vld [vmem:[%s258 + $0x2c] sm:$0xf]
        %v1648 = vld [vmem:[%s258 + $0x30] sm:$0xf]
        %v1649 = vld [vmem:[%s258 + $0x34] sm:$0xf]
        %v1650 = vld [vmem:[%s258 + $0x38] sm:$0xf]
        %v1651 = vld [vmem:[%s258 + $0x3c] sm:$0xf]
        %v1652 = vld [vmem:[%s258 + $0x40] sm:$0xf]
        %v1653 = vld [vmem:[%s258 + $0x44] sm:$0xf]
        %v1654 = vld [vmem:[%s258 + $0x48] sm:$0xf]
        %v1655 = vld [vmem:[%s258 + $0x4c] sm:$0xf]
        %v1656 = vld [vmem:[%s258 + $0x50] sm:$0xf]
        %v1657 = vld [vmem:[%s258 + $0x54] sm:$0xf]
        %v1658 = vld [vmem:[%s258 + $0x58] sm:$0xf]
        %v1659 = vld [vmem:[%s258 + $0x5c] sm:$0xf]
        %v1660 = vld [vmem:[%s258 + $0x60] sm:$0xf]
        %v1661 = vld [vmem:[%s258 + $0x64] sm:$0xf]
        %v1662 = vld [vmem:[%s258 + $0x68] sm:$0xf]
        %v1663 = vld [vmem:[%s258 + $0x6c] sm:$0xf]
        %v1664 = vld [vmem:[%s258 + $0x70] sm:$0xf]
        %v1665 = vld [vmem:[%s258 + $0x74] sm:$0xf]
        %s1666 = scalar_lea.vmem %s267, 192 [#allocation6]
        %v1667 = vld [vmem:[%s1666] sm:$0xf]
        %v1668 = vld [vmem:[%s1666 + $0x4] sm:$0xf]
        %v1669 = vld [vmem:[%s1666 + $0x8] sm:$0xf]
        %v1670 = vld [vmem:[%s1666 + $0xc] sm:$0xf]
        %v1671 = vld [vmem:[%s1666 + $0x10] sm:$0xf]
        %v1672 = vld [vmem:[%s1666 + $0x14] sm:$0xf]
        %v1673 = vld [vmem:[%s1666 + $0x18] sm:$0xf]
        %v1674 = vld [vmem:[%s1666 + $0x1c] sm:$0xf]
        %v1675 = vld [vmem:[%s1666 + $0x20] sm:$0xf]
        %v1676 = vld [vmem:[%s1666 + $0x24] sm:$0xf]
        %v1677 = vld [vmem:[%s1666 + $0x28] sm:$0xf]
        %v1678 = vld [vmem:[%s1666 + $0x2c] sm:$0xf]
        %v1679 = vld [vmem:[%s1666 + $0x30] sm:$0xf]
        %v1680 = vld [vmem:[%s1666 + $0x34] sm:$0xf]
        %v1681 = vld [vmem:[%s1666 + $0x38] sm:$0xf]
        %v1682 = vld [vmem:[%s1666 + $0x3c] sm:$0xf]
        %v1711 = vunpack.c.l.b16 %v1638
        %v1712 = vunpack.c.l.b16 %v1639
        %v1713 = vunpack.c.l.b16 %v1640
        %v1714 = vunpack.c.l.b16 %v1641
        %v1715 = vunpack.c.l.b16 %v1642
        %v1716 = vunpack.c.l.b16 %v1643
        %v1717 = vunpack.c.l.b16 %v1644
        %v1718 = vunpack.c.l.b16 %v1645
        %v1719 = vunpack.c.l.b16 %v1646
        %v1720 = vunpack.c.l.b16 %v1647
        %v1721 = vunpack.c.l.b16 %v1648
        %v1722 = vunpack.c.l.b16 %v1649
        %v1723 = vunpack.c.l.b16 %v1650
        %v1724 = vunpack.c.l.b16 %v1651
        %v1725 = vunpack.c.l.b16 %v1652
        %v1726 = vunpack.c.l.b16 %v1653
        %v1727 = vunpack.c.l.b16 %v1654
        %v1728 = vunpack.c.l.b16 %v1655
        %v1729 = vunpack.c.l.b16 %v1656
        %v1730 = vunpack.c.l.b16 %v1657
        %v1731 = vunpack.c.l.b16 %v1658
        %v1732 = vunpack.c.l.b16 %v1659
        %v1733 = vunpack.c.l.b16 %v1660
        %v1734 = vunpack.c.l.b16 %v1661
        %v1735 = vunpack.c.l.b16 %v1662
        %v1736 = vunpack.c.l.b16 %v1663
        %v1737 = vunpack.c.l.b16 %v1664
        %v1738 = vunpack.c.l.b16 %v1665
        %v1739 = vpack.c.b16 %v1712, %v1711
        %v1740 = vpack.c.b16 %v1714, %v1713
        %v1741 = vpack.c.b16 %v1716, %v1715
        %v1742 = vpack.c.b16 %v1718, %v1717
        %v1743 = vpack.c.b16 %v1720, %v1719
        %v1744 = vpack.c.b16 %v1722, %v1721
        %v1745 = vpack.c.b16 %v1724, %v1723
        %v1746 = vpack.c.b16 %v1726, %v1725
        %v1747 = vpack.c.b16 %v1728, %v1727
        %v1748 = vpack.c.b16 %v1730, %v1729
        %v1749 = vpack.c.b16 %v1732, %v1731
        %v1750 = vpack.c.b16 %v1734, %v1733
        %v1751 = vpack.c.b16 %v1736, %v1735
        %v1752 = vpack.c.b16 %v1738, %v1737
        %v1783 = vunpack.c.l.b16 %v1667
        %v1784 = vunpack.c.l.b16 %v1668
        %v1785 = vunpack.c.l.b16 %v1669
        %v1786 = vunpack.c.l.b16 %v1670
        %v1787 = vunpack.c.l.b16 %v1671
        %v1788 = vunpack.c.l.b16 %v1672
        %v1789 = vunpack.c.l.b16 %v1673
        %v1790 = vunpack.c.l.b16 %v1674
        %v1791 = vunpack.c.l.b16 %v1675
        %v1792 = vunpack.c.l.b16 %v1676
        %v1793 = vunpack.c.l.b16 %v1677
        %v1794 = vunpack.c.l.b16 %v1678
        %v1795 = vunpack.c.l.b16 %v1679
        %v1796 = vunpack.c.l.b16 %v1680
        %v1797 = vunpack.c.l.b16 %v1681
        %v1798 = vunpack.c.l.b16 %v1682
        %v1799 = vpack.c.b16 %v1784, %v1783
        %v1800 = vpack.c.b16 %v1786, %v1785
        %v1801 = vpack.c.b16 %v1788, %v1787
        %v1802 = vpack.c.b16 %v1790, %v1789
        %v1803 = vpack.c.b16 %v1792, %v1791
        %v1804 = vpack.c.b16 %v1794, %v1793
        %v1805 = vpack.c.b16 %v1796, %v1795
        %v1806 = vpack.c.b16 %v1798, %v1797
        %1815 = vmatprep.subr.bf16.mxu0 0
        %1816 = vmatpush1.bf16.msra.mxu0 %v1806
        %1817 = vmatprep.subr.bf16.mxu0 0
        %1818 = vmatpush1.bf16.msra.mxu0 %v1805
        %1819 = vmatprep.subr.bf16.mxu0 0
        %1820 = vmatpush1.bf16.msra.mxu0 %v1804
        %1821 = vmatprep.subr.bf16.mxu0 0
        %1822 = vmatpush1.bf16.msra.mxu0 %v1803
        %1823 = vmatprep.subr.bf16.mxu0 0
        %1824 = vmatpush1.bf16.msra.mxu0 %v1802
        %1825 = vmatprep.subr.bf16.mxu0 0
        %1826 = vmatpush1.bf16.msra.mxu0 %v1801
        %1827 = vmatprep.subr.bf16.mxu0 0
        %1828 = vmatpush1.bf16.msra.mxu0 %v1800
        %1829 = vmatprep.subr.bf16.mxu0 0
        %1830 = vmatpush1.bf16.msra.mxu0 %v1799
        %1831 = vmatprep.subr.bf16.mxu0 0
        %1832 = vmatpush2.bf16.msra.mxu0 0
        %1833 = vmatprep.subr.bf16.mxu0 0
        %1834 = vmatpush2.bf16.msra.mxu0 0
        %1835 = vmatprep.subr.bf16.mxu0 0
        %1836 = vmatpush2.bf16.msra.mxu0 0
        %1837 = vmatprep.subr.bf16.mxu0 0
        %1838 = vmatpush2.bf16.msra.mxu0 0
        %1839 = vmatprep.subr.bf16.mxu0 0
        %1840 = vmatpush2.bf16.msra.mxu0 0
        %1841 = vmatprep.subr.bf16.mxu0 0
        %1842 = vmatpush2.bf16.msra.mxu0 0
        %1843 = vmatprep.subr.bf16.mxu0 0
        %1844 = vmatpush2.bf16.msra.mxu0 0
        %1845 = vmatprep.subr.bf16.mxu0 0
        %1846 = vmatpush2.bf16.msra.mxu0 0
        %1847 = vmatprep.mubr.bf16.mxu0 0
        %1848 = vmatmul.mubr.bf16.gmra.mxu0 %v1739
        %v1849 = vpop.f32.mrf.mxu0
        %v1850 = vadd.f32 0.0, %v1849
        %v1851 = vpop.f32.mrf.mxu0
        %v1852 = vpop.f32.mrf.mxu0
        %v1853 = vadd.f32 0.0, %v1852
        %v1854 = vpop.f32.mrf.mxu0
        %1855 = vmatprep.mubr.bf16.mxu0 0
        %1856 = vmatmul.mubr.bf16.gmra.mxu0 %v1740
        %v1857 = vpop.f32.mrf.mxu0
        %v1858 = vadd.f32 0.0, %v1857
        %v1859 = vpop.f32.mrf.mxu0
        %v1860 = vpop.f32.mrf.mxu0
        %v1861 = vadd.f32 0.0, %v1860
        %v1862 = vpop.f32.mrf.mxu0
        %1863 = vmatprep.mubr.bf16.mxu0 0
        %1864 = vmatmul.mubr.bf16.gmra.mxu0 %v1741
        %v1865 = vpop.f32.mrf.mxu0
        %v1866 = vadd.f32 0.0, %v1865
        %v1867 = vpop.f32.mrf.mxu0
        %v1868 = vpop.f32.mrf.mxu0
        %v1869 = vadd.f32 0.0, %v1868
        %v1870 = vpop.f32.mrf.mxu0
        %1871 = vmatprep.mubr.bf16.mxu0 0
        %1872 = vmatmul.mubr.bf16.gmra.mxu0 %v1742
        %v1873 = vpop.f32.mrf.mxu0
        %v1874 = vadd.f32 0.0, %v1873
        %v1875 = vpop.f32.mrf.mxu0
        %v1876 = vpop.f32.mrf.mxu0
        %v1877 = vadd.f32 0.0, %v1876
        %v1878 = vpop.f32.mrf.mxu0
        %1879 = vmatprep.mubr.bf16.mxu0 0
        %1880 = vmatmul.mubr.bf16.gmra.mxu0 %v1743
        %v1881 = vpop.f32.mrf.mxu0
        %v1882 = vadd.f32 0.0, %v1881
        %v1883 = vpop.f32.mrf.mxu0
        %v1884 = vpop.f32.mrf.mxu0
        %v1885 = vadd.f32 0.0, %v1884
        %v1886 = vpop.f32.mrf.mxu0
        %1887 = vmatprep.mubr.bf16.mxu0 0
        %1888 = vmatmul.mubr.bf16.gmra.mxu0 %v1744
        %v1889 = vpop.f32.mrf.mxu0
        %v1890 = vadd.f32 0.0, %v1889
        %v1891 = vpop.f32.mrf.mxu0
        %v1892 = vpop.f32.mrf.mxu0
        %v1893 = vadd.f32 0.0, %v1892
        %v1894 = vpop.f32.mrf.mxu0
        %1895 = vmatprep.mubr.bf16.mxu0 0
        %1896 = vmatmul.mubr.bf16.gmra.mxu0 %v1745
        %v1897 = vpop.f32.mrf.mxu0
        %v1898 = vadd.f32 0.0, %v1897
        %v1899 = vpop.f32.mrf.mxu0
        %v1900 = vpop.f32.mrf.mxu0
        %v1901 = vadd.f32 0.0, %v1900
        %v1902 = vpop.f32.mrf.mxu0
        %1903 = vmatprep.mubr.bf16.mxu0 0
        %1904 = vmatmul.mubr.bf16.gmra.mxu0 %v1746
        %v1905 = vpop.f32.mrf.mxu0
        %v1906 = vadd.f32 0.0, %v1905
        %v1907 = vpop.f32.mrf.mxu0
        %v1908 = vpop.f32.mrf.mxu0
        %v1909 = vadd.f32 0.0, %v1908
        %v1910 = vpop.f32.mrf.mxu0
        %1911 = vmatprep.mubr.bf16.mxu0 0
        %1912 = vmatmul.mubr.bf16.gmra.mxu0 %v1747
        %v1913 = vpop.f32.mrf.mxu0
        %v1914 = vadd.f32 0.0, %v1913
        %v1915 = vpop.f32.mrf.mxu0
        %v1916 = vpop.f32.mrf.mxu0
        %v1917 = vadd.f32 0.0, %v1916
        %v1918 = vpop.f32.mrf.mxu0
        %1919 = vmatprep.mubr.bf16.mxu0 0
        %1920 = vmatmul.mubr.bf16.gmra.mxu0 %v1748
        %v1921 = vpop.f32.mrf.mxu0
        %v1922 = vadd.f32 0.0, %v1921
        %v1923 = vpop.f32.mrf.mxu0
        %v1924 = vpop.f32.mrf.mxu0
        %v1925 = vadd.f32 0.0, %v1924
        %v1926 = vpop.f32.mrf.mxu0
        %1927 = vmatprep.mubr.bf16.mxu0 0
        %1928 = vmatmul.mubr.bf16.gmra.mxu0 %v1749
        %v1929 = vpop.f32.mrf.mxu0
        %v1930 = vadd.f32 0.0, %v1929
        %v1931 = vpop.f32.mrf.mxu0
        %v1932 = vpop.f32.mrf.mxu0
        %v1933 = vadd.f32 0.0, %v1932
        %v1934 = vpop.f32.mrf.mxu0
        %1935 = vmatprep.mubr.bf16.mxu0 0
        %1936 = vmatmul.mubr.bf16.gmra.mxu0 %v1750
        %v1937 = vpop.f32.mrf.mxu0
        %v1938 = vadd.f32 0.0, %v1937
        %v1939 = vpop.f32.mrf.mxu0
        %v1940 = vpop.f32.mrf.mxu0
        %v1941 = vadd.f32 0.0, %v1940
        %v1942 = vpop.f32.mrf.mxu0
        %1943 = vmatprep.mubr.bf16.mxu0 0
        %1944 = vmatmul.mubr.bf16.gmra.mxu0 %v1751
        %v1945 = vpop.f32.mrf.mxu0
        %v1946 = vadd.f32 0.0, %v1945
        %v1947 = vpop.f32.mrf.mxu0
        %v1948 = vpop.f32.mrf.mxu0
        %v1949 = vadd.f32 0.0, %v1948
        %v1950 = vpop.f32.mrf.mxu0
        %1951 = vmatprep.mubr.bf16.mxu0 0
        %1952 = vmatmul.mubr.bf16.gmra.mxu0 %v1752
        %v1953 = vpop.f32.mrf.mxu0
        %v1954 = vadd.f32 0.0, %v1953
        %v1955 = vpop.f32.mrf.mxu0
        %v1956 = vpop.f32.mrf.mxu0
        %v1957 = vadd.f32 0.0, %v1956
        %v1958 = vpop.f32.mrf.mxu0
        %1959 = vdwg.mxu0
        %v1960 = vld [vmem:[#allocation2] sm:$0xff]
        %v1961 = vld [vmem:[#allocation2 + $0x8] sm:$0xff]
        %v1962 = vld [vmem:[#allocation2 + $0x10] sm:$0xff]
        %v1963 = vld [vmem:[#allocation2 + $0x18] sm:$0xff]
        %v1964 = vld [vmem:[#allocation2 + $0x20] sm:$0xff]
        %v1965 = vld [vmem:[#allocation2 + $0x28] sm:$0xff]
        %v1966 = vld [vmem:[#allocation2 + $0x30] sm:$0xff]
        %v1967 = vld [vmem:[#allocation2 + $0x38] sm:$0xff]
        %v1968 = vld [vmem:[#allocation2 + $0x40] sm:$0xff]
        %v1969 = vld [vmem:[#allocation2 + $0x48] sm:$0xff]
        %v1970 = vld [vmem:[#allocation2 + $0x50] sm:$0xff]
        %v1971 = vld [vmem:[#allocation2 + $0x58] sm:$0xff]
        %v1972 = vld [vmem:[#allocation2 + $0x60] sm:$0xff]
        %v1973 = vld [vmem:[#allocation2 + $0x68] sm:$0xff]
        %v1974 = vld [vmem:[#allocation2 + $0x70] sm:$0xff]
        %v1975 = vld [vmem:[#allocation2 + $0x78] sm:$0xff]
        %v1976 = vld [vmem:[#allocation2 + $0x80] sm:$0xff]
        %v1977 = vld [vmem:[#allocation2 + $0x88] sm:$0xff]
        %v1978 = vld [vmem:[#allocation2 + $0x90] sm:$0xff]
        %v1979 = vld [vmem:[#allocation2 + $0x98] sm:$0xff]
        %v1980 = vld [vmem:[#allocation2 + $0xa0] sm:$0xff]
        %v1981 = vld [vmem:[#allocation2 + $0xa8] sm:$0xff]
        %v1982 = vld [vmem:[#allocation2 + $0xb0] sm:$0xff]
        %v1983 = vld [vmem:[#allocation2 + $0xb8] sm:$0xff]
        %v1984 = vld [vmem:[#allocation2 + $0xc0] sm:$0xff]
        %v1985 = vld [vmem:[#allocation2 + $0xc8] sm:$0xff]
        %v1986 = vld [vmem:[#allocation2 + $0xd0] sm:$0xff]
        %v1987 = vld [vmem:[#allocation2 + $0xd8] sm:$0xff]
        %v1988 = vadd.f32 %v1960, %v1850
        %v1989 = vadd.f32 %v1961, %v1853
        %v1990 = vadd.f32 %v1962, %v1858
        %v1991 = vadd.f32 %v1963, %v1861
        %v1992 = vadd.f32 %v1964, %v1866
        %v1993 = vadd.f32 %v1965, %v1869
        %v1994 = vadd.f32 %v1966, %v1874
        %v1995 = vadd.f32 %v1967, %v1877
        %v1996 = vadd.f32 %v1968, %v1882
        %v1997 = vadd.f32 %v1969, %v1885
        %v1998 = vadd.f32 %v1970, %v1890
        %v1999 = vadd.f32 %v1971, %v1893
        %v2000 = vadd.f32 %v1972, %v1898
        %v2001 = vadd.f32 %v1973, %v1901
        %v2002 = vadd.f32 %v1974, %v1906
        %v2003 = vadd.f32 %v1975, %v1909
        %v2004 = vadd.f32 %v1976, %v1914
        %v2005 = vadd.f32 %v1977, %v1917
        %v2006 = vadd.f32 %v1978, %v1922
        %v2007 = vadd.f32 %v1979, %v1925
        %v2008 = vadd.f32 %v1980, %v1930
        %v2009 = vadd.f32 %v1981, %v1933
        %v2010 = vadd.f32 %v1982, %v1938
        %v2011 = vadd.f32 %v1983, %v1941
        %v2012 = vadd.f32 %v1984, %v1946
        %v2013 = vadd.f32 %v1985, %v1949
        %v2014 = vadd.f32 %v1986, %v1954
        %v2015 = vadd.f32 %v1987, %v1957
        %2016 = vst [vmem:[#allocation2] sm:$0xff] %v1988
        %2017 = vst [vmem:[#allocation2 + $0x8] sm:$0xff] %v1989
        %2018 = vst [vmem:[#allocation2 + $0x10] sm:$0xff] %v1990
        %2019 = vst [vmem:[#allocation2 + $0x18] sm:$0xff] %v1991
        %2020 = vst [vmem:[#allocation2 + $0x20] sm:$0xff] %v1992
        %2021 = vst [vmem:[#allocation2 + $0x28] sm:$0xff] %v1993
        %2022 = vst [vmem:[#allocation2 + $0x30] sm:$0xff] %v1994
        %2023 = vst [vmem:[#allocation2 + $0x38] sm:$0xff] %v1995
        %2024 = vst [vmem:[#allocation2 + $0x40] sm:$0xff] %v1996
        %2025 = vst [vmem:[#allocation2 + $0x48] sm:$0xff] %v1997
        %2026 = vst [vmem:[#allocation2 + $0x50] sm:$0xff] %v1998
        %2027 = vst [vmem:[#allocation2 + $0x58] sm:$0xff] %v1999
        %2028 = vst [vmem:[#allocation2 + $0x60] sm:$0xff] %v2000
        %2029 = vst [vmem:[#allocation2 + $0x68] sm:$0xff] %v2001
        %2030 = vst [vmem:[#allocation2 + $0x70] sm:$0xff] %v2002
        %2031 = vst [vmem:[#allocation2 + $0x78] sm:$0xff] %v2003
        %2032 = vst [vmem:[#allocation2 + $0x80] sm:$0xff] %v2004
        %2033 = vst [vmem:[#allocation2 + $0x88] sm:$0xff] %v2005
        %2034 = vst [vmem:[#allocation2 + $0x90] sm:$0xff] %v2006
        %2035 = vst [vmem:[#allocation2 + $0x98] sm:$0xff] %v2007
        %2036 = vst [vmem:[#allocation2 + $0xa0] sm:$0xff] %v2008
        %2037 = vst [vmem:[#allocation2 + $0xa8] sm:$0xff] %v2009
        %2038 = vst [vmem:[#allocation2 + $0xb0] sm:$0xff] %v2010
        %2039 = vst [vmem:[#allocation2 + $0xb8] sm:$0xff] %v2011
        %2040 = vst [vmem:[#allocation2 + $0xc0] sm:$0xff] %v2012
        %2041 = vst [vmem:[#allocation2 + $0xc8] sm:$0xff] %v2013
        %2042 = vst [vmem:[#allocation2 + $0xd0] sm:$0xff] %v2014
        %2043 = vst [vmem:[#allocation2 + $0xd8] sm:$0xff] %v2015
        %v2044 = vld [vmem:[%s258 + $0x8] sm:$0xf]
        %v2045 = vld [vmem:[%s258 + $0xc] sm:$0xf]
        %v2046 = vld [vmem:[%s258 + $0x10] sm:$0xf]
        %v2047 = vld [vmem:[%s258 + $0x14] sm:$0xf]
        %v2048 = vld [vmem:[%s258 + $0x18] sm:$0xf]
        %v2049 = vld [vmem:[%s258 + $0x1c] sm:$0xf]
        %v2050 = vld [vmem:[%s258 + $0x20] sm:$0xf]
        %v2051 = vld [vmem:[%s258 + $0x24] sm:$0xf]
        %v2052 = vld [vmem:[%s258 + $0x28] sm:$0xf]
        %v2053 = vld [vmem:[%s258 + $0x2c] sm:$0xf]
        %v2054 = vld [vmem:[%s258 + $0x30] sm:$0xf]
        %v2055 = vld [vmem:[%s258 + $0x34] sm:$0xf]
        %v2056 = vld [vmem:[%s258 + $0x38] sm:$0xf]
        %v2057 = vld [vmem:[%s258 + $0x3c] sm:$0xf]
        %v2058 = vld [vmem:[%s258 + $0x40] sm:$0xf]
        %v2059 = vld [vmem:[%s258 + $0x44] sm:$0xf]
        %v2060 = vld [vmem:[%s258 + $0x48] sm:$0xf]
        %v2061 = vld [vmem:[%s258 + $0x4c] sm:$0xf]
        %v2062 = vld [vmem:[%s258 + $0x50] sm:$0xf]
        %v2063 = vld [vmem:[%s258 + $0x54] sm:$0xf]
        %v2064 = vld [vmem:[%s258 + $0x58] sm:$0xf]
        %v2065 = vld [vmem:[%s258 + $0x5c] sm:$0xf]
        %v2066 = vld [vmem:[%s258 + $0x60] sm:$0xf]
        %v2067 = vld [vmem:[%s258 + $0x64] sm:$0xf]
        %v2068 = vld [vmem:[%s258 + $0x68] sm:$0xf]
        %v2069 = vld [vmem:[%s258 + $0x6c] sm:$0xf]
        %v2070 = vld [vmem:[%s258 + $0x70] sm:$0xf]
        %v2071 = vld [vmem:[%s258 + $0x74] sm:$0xf]
        %v2072 = vld [vmem:[%s258 + $0x78] sm:$0x1]
        %s2073 = scalar_lea.vmem %s267, 256 [#allocation6]
        %v2074 = vld [vmem:[%s2073] sm:$0xf]
        %v2075 = vld [vmem:[%s2073 + $0x4] sm:$0xf]
        %v2076 = vld [vmem:[%s2073 + $0x8] sm:$0xf]
        %v2077 = vld [vmem:[%s2073 + $0xc] sm:$0xf]
        %v2078 = vld [vmem:[%s2073 + $0x10] sm:$0xf]
        %v2079 = vld [vmem:[%s2073 + $0x14] sm:$0xf]
        %v2080 = vld [vmem:[%s2073 + $0x18] sm:$0xf]
        %v2081 = vld [vmem:[%s2073 + $0x1c] sm:$0xf]
        %v2082 = vld [vmem:[%s2073 + $0x20] sm:$0xf]
        %v2083 = vld [vmem:[%s2073 + $0x24] sm:$0xf]
        %v2084 = vld [vmem:[%s2073 + $0x28] sm:$0xf]
        %v2085 = vld [vmem:[%s2073 + $0x2c] sm:$0xf]
        %v2086 = vld [vmem:[%s2073 + $0x30] sm:$0xf]
        %v2087 = vld [vmem:[%s2073 + $0x34] sm:$0xf]
        %v2088 = vld [vmem:[%s2073 + $0x38] sm:$0xf]
        %v2089 = vld [vmem:[%s2073 + $0x3c] sm:$0xf]
        %v2119 = vunpack.c.l.b16 %v2044
        %v2120 = vunpack.c.l.b16 %v2045
        %v2121 = vunpack.c.l.b16 %v2046
        %v2122 = vunpack.c.l.b16 %v2047
        %v2123 = vunpack.c.l.b16 %v2048
        %v2124 = vunpack.c.l.b16 %v2049
        %v2125 = vunpack.c.l.b16 %v2050
        %v2126 = vunpack.c.l.b16 %v2051
        %v2127 = vunpack.c.l.b16 %v2052
        %v2128 = vunpack.c.l.b16 %v2053
        %v2129 = vunpack.c.l.b16 %v2054
        %v2130 = vunpack.c.l.b16 %v2055
        %v2131 = vunpack.c.l.b16 %v2056
        %v2132 = vunpack.c.l.b16 %v2057
        %v2133 = vunpack.c.l.b16 %v2058
        %v2134 = vunpack.c.l.b16 %v2059
        %v2135 = vunpack.c.l.b16 %v2060
        %v2136 = vunpack.c.l.b16 %v2061
        %v2137 = vunpack.c.l.b16 %v2062
        %v2138 = vunpack.c.l.b16 %v2063
        %v2139 = vunpack.c.l.b16 %v2064
        %v2140 = vunpack.c.l.b16 %v2065
        %v2141 = vunpack.c.l.b16 %v2066
        %v2142 = vunpack.c.l.b16 %v2067
        %v2143 = vunpack.c.l.b16 %v2068
        %v2144 = vunpack.c.l.b16 %v2069
        %v2145 = vunpack.c.l.b16 %v2070
        %v2146 = vunpack.c.l.b16 %v2071
        %v2147 = vunpack.c.l.b16 %v2072
        %v2148 = vpack.c.b16 %v2120, %v2119
        %v2149 = vpack.c.b16 %v2122, %v2121
        %v2150 = vpack.c.b16 %v2124, %v2123
        %v2151 = vpack.c.b16 %v2126, %v2125
        %v2152 = vpack.c.b16 %v2128, %v2127
        %v2153 = vpack.c.b16 %v2130, %v2129
        %v2154 = vpack.c.b16 %v2132, %v2131
        %v2155 = vpack.c.b16 %v2134, %v2133
        %v2156 = vpack.c.b16 %v2136, %v2135
        %v2157 = vpack.c.b16 %v2138, %v2137
        %v2158 = vpack.c.b16 %v2140, %v2139
        %v2159 = vpack.c.b16 %v2142, %v2141
        %v2160 = vpack.c.b16 %v2144, %v2143
        %v2161 = vpack.c.b16 %v2146, %v2145
        %v2162 = vpack.c.b16 %v2147, %v2147
        %v2164 = vshrl.u32 %v2148, 16
        %v2166 = vshll.u32 %v2148, 16
        %v2168 = vrot.slane %v2166, 1
        %v2169 = vor.u32 %v2164, %v2168
        %v2171 = vshll.u32 %v2149, 16
        %v2173 = vrot.slane %v2171, 1
        %v2174 = vsel %vm790, %v2169, %v2173
        %v2175 = vshrl.u32 %v2149, 16
        %v2177 = vor.u32 %v2175, %v2173
        %v2179 = vshll.u32 %v2150, 16
        %v2181 = vrot.slane %v2179, 1
        %v2182 = vsel %vm790, %v2177, %v2181
        %v2183 = vshrl.u32 %v2150, 16
        %v2185 = vor.u32 %v2183, %v2181
        %v2187 = vshll.u32 %v2151, 16
        %v2189 = vrot.slane %v2187, 1
        %v2190 = vsel %vm790, %v2185, %v2189
        %v2191 = vshrl.u32 %v2151, 16
        %v2193 = vor.u32 %v2191, %v2189
        %v2195 = vshll.u32 %v2152, 16
        %v2197 = vrot.slane %v2195, 1
        %v2198 = vsel %vm790, %v2193, %v2197
        %v2199 = vshrl.u32 %v2152, 16
        %v2201 = vor.u32 %v2199, %v2197
        %v2203 = vshll.u32 %v2153, 16
        %v2205 = vrot.slane %v2203, 1
        %v2206 = vsel %vm790, %v2201, %v2205
        %v2207 = vshrl.u32 %v2153, 16
        %v2209 = vor.u32 %v2207, %v2205
        %v2211 = vshll.u32 %v2154, 16
        %v2213 = vrot.slane %v2211, 1
        %v2214 = vsel %vm790, %v2209, %v2213
        %v2215 = vshrl.u32 %v2154, 16
        %v2217 = vor.u32 %v2215, %v2213
        %v2219 = vshll.u32 %v2155, 16
        %v2221 = vrot.slane %v2219, 1
        %v2222 = vsel %vm790, %v2217, %v2221
        %v2223 = vshrl.u32 %v2155, 16
        %v2225 = vor.u32 %v2223, %v2221
        %v2227 = vshll.u32 %v2156, 16
        %v2229 = vrot.slane %v2227, 1
        %v2230 = vsel %vm790, %v2225, %v2229
        %v2231 = vshrl.u32 %v2156, 16
        %v2233 = vor.u32 %v2231, %v2229
        %v2235 = vshll.u32 %v2157, 16
        %v2237 = vrot.slane %v2235, 1
        %v2238 = vsel %vm790, %v2233, %v2237
        %v2239 = vshrl.u32 %v2157, 16
        %v2241 = vor.u32 %v2239, %v2237
        %v2243 = vshll.u32 %v2158, 16
        %v2245 = vrot.slane %v2243, 1
        %v2246 = vsel %vm790, %v2241, %v2245
        %v2247 = vshrl.u32 %v2158, 16
        %v2249 = vor.u32 %v2247, %v2245
        %v2251 = vshll.u32 %v2159, 16
        %v2253 = vrot.slane %v2251, 1
        %v2254 = vsel %vm790, %v2249, %v2253
        %v2255 = vshrl.u32 %v2159, 16
        %v2257 = vor.u32 %v2255, %v2253
        %v2259 = vshll.u32 %v2160, 16
        %v2261 = vrot.slane %v2259, 1
        %v2262 = vsel %vm790, %v2257, %v2261
        %v2263 = vshrl.u32 %v2160, 16
        %v2265 = vor.u32 %v2263, %v2261
        %v2267 = vshll.u32 %v2161, 16
        %v2269 = vrot.slane %v2267, 1
        %v2270 = vsel %vm790, %v2265, %v2269
        %v2271 = vshrl.u32 %v2161, 16
        %v2273 = vor.u32 %v2271, %v2269
        %v2275 = vshll.u32 %v2162, 16
        %v2277 = vrot.slane %v2275, 1
        %v2278 = vsel %vm790, %v2273, %v2277
        %v2309 = vunpack.c.l.b16 %v2074
        %v2310 = vunpack.c.l.b16 %v2075
        %v2311 = vunpack.c.l.b16 %v2076
        %v2312 = vunpack.c.l.b16 %v2077
        %v2313 = vunpack.c.l.b16 %v2078
        %v2314 = vunpack.c.l.b16 %v2079
        %v2315 = vunpack.c.l.b16 %v2080
        %v2316 = vunpack.c.l.b16 %v2081
        %v2317 = vunpack.c.l.b16 %v2082
        %v2318 = vunpack.c.l.b16 %v2083
        %v2319 = vunpack.c.l.b16 %v2084
        %v2320 = vunpack.c.l.b16 %v2085
        %v2321 = vunpack.c.l.b16 %v2086
        %v2322 = vunpack.c.l.b16 %v2087
        %v2323 = vunpack.c.l.b16 %v2088
        %v2324 = vunpack.c.l.b16 %v2089
        %v2325 = vpack.c.b16 %v2310, %v2309
        %v2326 = vpack.c.b16 %v2312, %v2311
        %v2327 = vpack.c.b16 %v2314, %v2313
        %v2328 = vpack.c.b16 %v2316, %v2315
        %v2329 = vpack.c.b16 %v2318, %v2317
        %v2330 = vpack.c.b16 %v2320, %v2319
        %v2331 = vpack.c.b16 %v2322, %v2321
        %v2332 = vpack.c.b16 %v2324, %v2323
        %2341 = vmatprep.subr.bf16.mxu0 0
        %2342 = vmatpush1.bf16.msra.mxu0 %v2332
        %2343 = vmatprep.subr.bf16.mxu0 0
        %2344 = vmatpush1.bf16.msra.mxu0 %v2331
        %2345 = vmatprep.subr.bf16.mxu0 0
        %2346 = vmatpush1.bf16.msra.mxu0 %v2330
        %2347 = vmatprep.subr.bf16.mxu0 0
        %2348 = vmatpush1.bf16.msra.mxu0 %v2329
        %2349 = vmatprep.subr.bf16.mxu0 0
        %2350 = vmatpush1.bf16.msra.mxu0 %v2328
        %2351 = vmatprep.subr.bf16.mxu0 0
        %2352 = vmatpush1.bf16.msra.mxu0 %v2327
        %2353 = vmatprep.subr.bf16.mxu0 0
        %2354 = vmatpush1.bf16.msra.mxu0 %v2326
        %2355 = vmatprep.subr.bf16.mxu0 0
        %2356 = vmatpush1.bf16.msra.mxu0 %v2325
        %2357 = vmatprep.subr.bf16.mxu0 0
        %2358 = vmatpush2.bf16.msra.mxu0 0
        %2359 = vmatprep.subr.bf16.mxu0 0
        %2360 = vmatpush2.bf16.msra.mxu0 0
        %2361 = vmatprep.subr.bf16.mxu0 0
        %2362 = vmatpush2.bf16.msra.mxu0 0
        %2363 = vmatprep.subr.bf16.mxu0 0
        %2364 = vmatpush2.bf16.msra.mxu0 0
        %2365 = vmatprep.subr.bf16.mxu0 0
        %2366 = vmatpush2.bf16.msra.mxu0 0
        %2367 = vmatprep.subr.bf16.mxu0 0
        %2368 = vmatpush2.bf16.msra.mxu0 0
        %2369 = vmatprep.subr.bf16.mxu0 0
        %2370 = vmatpush2.bf16.msra.mxu0 0
        %2371 = vmatprep.subr.bf16.mxu0 0
        %2372 = vmatpush2.bf16.msra.mxu0 0
        %2373 = vmatprep.mubr.bf16.mxu0 0
        %2374 = vmatmul.mubr.bf16.gmra.mxu0 %v2174
        %v2375 = vpop.f32.mrf.mxu0
        %v2376 = vadd.f32 0.0, %v2375
        %v2377 = vpop.f32.mrf.mxu0
        %v2378 = vpop.f32.mrf.mxu0
        %v2379 = vadd.f32 0.0, %v2378
        %v2380 = vpop.f32.mrf.mxu0
        %2381 = vmatprep.mubr.bf16.mxu0 0
        %2382 = vmatmul.mubr.bf16.gmra.mxu0 %v2182
        %v2383 = vpop.f32.mrf.mxu0
        %v2384 = vadd.f32 0.0, %v2383
        %v2385 = vpop.f32.mrf.mxu0
        %v2386 = vpop.f32.mrf.mxu0
        %v2387 = vadd.f32 0.0, %v2386
        %v2388 = vpop.f32.mrf.mxu0
        %2389 = vmatprep.mubr.bf16.mxu0 0
        %2390 = vmatmul.mubr.bf16.gmra.mxu0 %v2190
        %v2391 = vpop.f32.mrf.mxu0
        %v2392 = vadd.f32 0.0, %v2391
        %v2393 = vpop.f32.mrf.mxu0
        %v2394 = vpop.f32.mrf.mxu0
        %v2395 = vadd.f32 0.0, %v2394
        %v2396 = vpop.f32.mrf.mxu0
        %2397 = vmatprep.mubr.bf16.mxu0 0
        %2398 = vmatmul.mubr.bf16.gmra.mxu0 %v2198
        %v2399 = vpop.f32.mrf.mxu0
        %v2400 = vadd.f32 0.0, %v2399
        %v2401 = vpop.f32.mrf.mxu0
        %v2402 = vpop.f32.mrf.mxu0
        %v2403 = vadd.f32 0.0, %v2402
        %v2404 = vpop.f32.mrf.mxu0
        %2405 = vmatprep.mubr.bf16.mxu0 0
        %2406 = vmatmul.mubr.bf16.gmra.mxu0 %v2206
        %v2407 = vpop.f32.mrf.mxu0
        %v2408 = vadd.f32 0.0, %v2407
        %v2409 = vpop.f32.mrf.mxu0
        %v2410 = vpop.f32.mrf.mxu0
        %v2411 = vadd.f32 0.0, %v2410
        %v2412 = vpop.f32.mrf.mxu0
        %2413 = vmatprep.mubr.bf16.mxu0 0
        %2414 = vmatmul.mubr.bf16.gmra.mxu0 %v2214
        %v2415 = vpop.f32.mrf.mxu0
        %v2416 = vadd.f32 0.0, %v2415
        %v2417 = vpop.f32.mrf.mxu0
        %v2418 = vpop.f32.mrf.mxu0
        %v2419 = vadd.f32 0.0, %v2418
        %v2420 = vpop.f32.mrf.mxu0
        %2421 = vmatprep.mubr.bf16.mxu0 0
        %2422 = vmatmul.mubr.bf16.gmra.mxu0 %v2222
        %v2423 = vpop.f32.mrf.mxu0
        %v2424 = vadd.f32 0.0, %v2423
        %v2425 = vpop.f32.mrf.mxu0
        %v2426 = vpop.f32.mrf.mxu0
        %v2427 = vadd.f32 0.0, %v2426
        %v2428 = vpop.f32.mrf.mxu0
        %2429 = vmatprep.mubr.bf16.mxu0 0
        %2430 = vmatmul.mubr.bf16.gmra.mxu0 %v2230
        %v2431 = vpop.f32.mrf.mxu0
        %v2432 = vadd.f32 0.0, %v2431
        %v2433 = vpop.f32.mrf.mxu0
        %v2434 = vpop.f32.mrf.mxu0
        %v2435 = vadd.f32 0.0, %v2434
        %v2436 = vpop.f32.mrf.mxu0
        %2437 = vmatprep.mubr.bf16.mxu0 0
        %2438 = vmatmul.mubr.bf16.gmra.mxu0 %v2238
        %v2439 = vpop.f32.mrf.mxu0
        %v2440 = vadd.f32 0.0, %v2439
        %v2441 = vpop.f32.mrf.mxu0
        %v2442 = vpop.f32.mrf.mxu0
        %v2443 = vadd.f32 0.0, %v2442
        %v2444 = vpop.f32.mrf.mxu0
        %2445 = vmatprep.mubr.bf16.mxu0 0
        %2446 = vmatmul.mubr.bf16.gmra.mxu0 %v2246
        %v2447 = vpop.f32.mrf.mxu0
        %v2448 = vadd.f32 0.0, %v2447
        %v2449 = vpop.f32.mrf.mxu0
        %v2450 = vpop.f32.mrf.mxu0
        %v2451 = vadd.f32 0.0, %v2450
        %v2452 = vpop.f32.mrf.mxu0
        %2453 = vmatprep.mubr.bf16.mxu0 0
        %2454 = vmatmul.mubr.bf16.gmra.mxu0 %v2254
        %v2455 = vpop.f32.mrf.mxu0
        %v2456 = vadd.f32 0.0, %v2455
        %v2457 = vpop.f32.mrf.mxu0
        %v2458 = vpop.f32.mrf.mxu0
        %v2459 = vadd.f32 0.0, %v2458
        %v2460 = vpop.f32.mrf.mxu0
        %2461 = vmatprep.mubr.bf16.mxu0 0
        %2462 = vmatmul.mubr.bf16.gmra.mxu0 %v2262
        %v2463 = vpop.f32.mrf.mxu0
        %v2464 = vadd.f32 0.0, %v2463
        %v2465 = vpop.f32.mrf.mxu0
        %v2466 = vpop.f32.mrf.mxu0
        %v2467 = vadd.f32 0.0, %v2466
        %v2468 = vpop.f32.mrf.mxu0
        %2469 = vmatprep.mubr.bf16.mxu0 0
        %2470 = vmatmul.mubr.bf16.gmra.mxu0 %v2270
        %v2471 = vpop.f32.mrf.mxu0
        %v2472 = vadd.f32 0.0, %v2471
        %v2473 = vpop.f32.mrf.mxu0
        %v2474 = vpop.f32.mrf.mxu0
        %v2475 = vadd.f32 0.0, %v2474
        %v2476 = vpop.f32.mrf.mxu0
        %2477 = vmatprep.mubr.bf16.mxu0 0
        %2478 = vmatmul.mubr.bf16.gmra.mxu0 %v2278
        %v2479 = vpop.f32.mrf.mxu0
        %v2480 = vadd.f32 0.0, %v2479
        %v2481 = vpop.f32.mrf.mxu0
        %v2482 = vpop.f32.mrf.mxu0
        %v2483 = vadd.f32 0.0, %v2482
        %v2484 = vpop.f32.mrf.mxu0
        %2485 = vdwg.mxu0
        %v2486 = vld [vmem:[#allocation2] sm:$0xff]
        %v2487 = vld [vmem:[#allocation2 + $0x8] sm:$0xff]
        %v2488 = vld [vmem:[#allocation2 + $0x10] sm:$0xff]
        %v2489 = vld [vmem:[#allocation2 + $0x18] sm:$0xff]
        %v2490 = vld [vmem:[#allocation2 + $0x20] sm:$0xff]
        %v2491 = vld [vmem:[#allocation2 + $0x28] sm:$0xff]
        %v2492 = vld [vmem:[#allocation2 + $0x30] sm:$0xff]
        %v2493 = vld [vmem:[#allocation2 + $0x38] sm:$0xff]
        %v2494 = vld [vmem:[#allocation2 + $0x40] sm:$0xff]
        %v2495 = vld [vmem:[#allocation2 + $0x48] sm:$0xff]
        %v2496 = vld [vmem:[#allocation2 + $0x50] sm:$0xff]
        %v2497 = vld [vmem:[#allocation2 + $0x58] sm:$0xff]
        %v2498 = vld [vmem:[#allocation2 + $0x60] sm:$0xff]
        %v2499 = vld [vmem:[#allocation2 + $0x68] sm:$0xff]
        %v2500 = vld [vmem:[#allocation2 + $0x70] sm:$0xff]
        %v2501 = vld [vmem:[#allocation2 + $0x78] sm:$0xff]
        %v2502 = vld [vmem:[#allocation2 + $0x80] sm:$0xff]
        %v2503 = vld [vmem:[#allocation2 + $0x88] sm:$0xff]
        %v2504 = vld [vmem:[#allocation2 + $0x90] sm:$0xff]
        %v2505 = vld [vmem:[#allocation2 + $0x98] sm:$0xff]
        %v2506 = vld [vmem:[#allocation2 + $0xa0] sm:$0xff]
        %v2507 = vld [vmem:[#allocation2 + $0xa8] sm:$0xff]
        %v2508 = vld [vmem:[#allocation2 + $0xb0] sm:$0xff]
        %v2509 = vld [vmem:[#allocation2 + $0xb8] sm:$0xff]
        %v2510 = vld [vmem:[#allocation2 + $0xc0] sm:$0xff]
        %v2511 = vld [vmem:[#allocation2 + $0xc8] sm:$0xff]
        %v2512 = vld [vmem:[#allocation2 + $0xd0] sm:$0xff]
        %v2513 = vld [vmem:[#allocation2 + $0xd8] sm:$0xff]
        %v2514 = vadd.f32 %v2486, %v2376
        %v2515 = vadd.f32 %v2487, %v2379
        %v2516 = vadd.f32 %v2488, %v2384
        %v2517 = vadd.f32 %v2489, %v2387
        %v2518 = vadd.f32 %v2490, %v2392
        %v2519 = vadd.f32 %v2491, %v2395
        %v2520 = vadd.f32 %v2492, %v2400
        %v2521 = vadd.f32 %v2493, %v2403
        %v2522 = vadd.f32 %v2494, %v2408
        %v2523 = vadd.f32 %v2495, %v2411
        %v2524 = vadd.f32 %v2496, %v2416
        %v2525 = vadd.f32 %v2497, %v2419
        %v2526 = vadd.f32 %v2498, %v2424
        %v2527 = vadd.f32 %v2499, %v2427
        %v2528 = vadd.f32 %v2500, %v2432
        %v2529 = vadd.f32 %v2501, %v2435
        %v2530 = vadd.f32 %v2502, %v2440
        %v2531 = vadd.f32 %v2503, %v2443
        %v2532 = vadd.f32 %v2504, %v2448
        %v2533 = vadd.f32 %v2505, %v2451
        %v2534 = vadd.f32 %v2506, %v2456
        %v2535 = vadd.f32 %v2507, %v2459
        %v2536 = vadd.f32 %v2508, %v2464
        %v2537 = vadd.f32 %v2509, %v2467
        %v2538 = vadd.f32 %v2510, %v2472
        %v2539 = vadd.f32 %v2511, %v2475
        %v2540 = vadd.f32 %v2512, %v2480
        %v2541 = vadd.f32 %v2513, %v2483
        %2542 = vst [vmem:[#allocation2] sm:$0xff] %v2514
        %2543 = vst [vmem:[#allocation2 + $0x8] sm:$0xff] %v2515
        %2544 = vst [vmem:[#allocation2 + $0x10] sm:$0xff] %v2516
        %2545 = vst [vmem:[#allocation2 + $0x18] sm:$0xff] %v2517
        %2546 = vst [vmem:[#allocation2 + $0x20] sm:$0xff] %v2518
        %2547 = vst [vmem:[#allocation2 + $0x28] sm:$0xff] %v2519
        %2548 = vst [vmem:[#allocation2 + $0x30] sm:$0xff] %v2520
        %2549 = vst [vmem:[#allocation2 + $0x38] sm:$0xff] %v2521
        %2550 = vst [vmem:[#allocation2 + $0x40] sm:$0xff] %v2522
        %2551 = vst [vmem:[#allocation2 + $0x48] sm:$0xff] %v2523
        %2552 = vst [vmem:[#allocation2 + $0x50] sm:$0xff] %v2524
        %2553 = vst [vmem:[#allocation2 + $0x58] sm:$0xff] %v2525
        %2554 = vst [vmem:[#allocation2 + $0x60] sm:$0xff] %v2526
        %2555 = vst [vmem:[#allocation2 + $0x68] sm:$0xff] %v2527
        %2556 = vst [vmem:[#allocation2 + $0x70] sm:$0xff] %v2528
        %2557 = vst [vmem:[#allocation2 + $0x78] sm:$0xff] %v2529
        %2558 = vst [vmem:[#allocation2 + $0x80] sm:$0xff] %v2530
        %2559 = vst [vmem:[#allocation2 + $0x88] sm:$0xff] %v2531
        %2560 = vst [vmem:[#allocation2 + $0x90] sm:$0xff] %v2532
        %2561 = vst [vmem:[#allocation2 + $0x98] sm:$0xff] %v2533
        %2562 = vst [vmem:[#allocation2 + $0xa0] sm:$0xff] %v2534
        %2563 = vst [vmem:[#allocation2 + $0xa8] sm:$0xff] %v2535
        %2564 = vst [vmem:[#allocation2 + $0xb0] sm:$0xff] %v2536
        %2565 = vst [vmem:[#allocation2 + $0xb8] sm:$0xff] %v2537
        %2566 = vst [vmem:[#allocation2 + $0xc0] sm:$0xff] %v2538
        %2567 = vst [vmem:[#allocation2 + $0xc8] sm:$0xff] %v2539
        %2568 = vst [vmem:[#allocation2 + $0xd0] sm:$0xff] %v2540
        %2569 = vst [vmem:[#allocation2 + $0xd8] sm:$0xff] %v2541
        %v2570 = vld [vmem:[%s258 + $0x8] sm:$0xe]
        %v2571 = vld [vmem:[%s258 + $0xc] sm:$0xf]
        %v2572 = vld [vmem:[%s258 + $0x10] sm:$0xf]
        %v2573 = vld [vmem:[%s258 + $0x14] sm:$0xf]
        %v2574 = vld [vmem:[%s258 + $0x18] sm:$0xf]
        %v2575 = vld [vmem:[%s258 + $0x1c] sm:$0xf]
        %v2576 = vld [vmem:[%s258 + $0x20] sm:$0xf]
        %v2577 = vld [vmem:[%s258 + $0x24] sm:$0xf]
        %v2578 = vld [vmem:[%s258 + $0x28] sm:$0xf]
        %v2579 = vld [vmem:[%s258 + $0x2c] sm:$0xf]
        %v2580 = vld [vmem:[%s258 + $0x30] sm:$0xf]
        %v2581 = vld [vmem:[%s258 + $0x34] sm:$0xf]
        %v2582 = vld [vmem:[%s258 + $0x38] sm:$0xf]
        %v2583 = vld [vmem:[%s258 + $0x3c] sm:$0xf]
        %v2584 = vld [vmem:[%s258 + $0x40] sm:$0xf]
        %v2585 = vld [vmem:[%s258 + $0x44] sm:$0xf]
        %v2586 = vld [vmem:[%s258 + $0x48] sm:$0xf]
        %v2587 = vld [vmem:[%s258 + $0x4c] sm:$0xf]
        %v2588 = vld [vmem:[%s258 + $0x50] sm:$0xf]
        %v2589 = vld [vmem:[%s258 + $0x54] sm:$0xf]
        %v2590 = vld [vmem:[%s258 + $0x58] sm:$0xf]
        %v2591 = vld [vmem:[%s258 + $0x5c] sm:$0xf]
        %v2592 = vld [vmem:[%s258 + $0x60] sm:$0xf]
        %v2593 = vld [vmem:[%s258 + $0x64] sm:$0xf]
        %v2594 = vld [vmem:[%s258 + $0x68] sm:$0xf]
        %v2595 = vld [vmem:[%s258 + $0x6c] sm:$0xf]
        %v2596 = vld [vmem:[%s258 + $0x70] sm:$0xf]
        %v2597 = vld [vmem:[%s258 + $0x74] sm:$0xf]
        %v2598 = vld [vmem:[%s258 + $0x78] sm:$0x1]
        %s2599 = scalar_lea.vmem %s267, 320 [#allocation6]
        %v2600 = vld [vmem:[%s2599] sm:$0xf]
        %v2601 = vld [vmem:[%s2599 + $0x4] sm:$0xf]
        %v2602 = vld [vmem:[%s2599 + $0x8] sm:$0xf]
        %v2603 = vld [vmem:[%s2599 + $0xc] sm:$0xf]
        %v2604 = vld [vmem:[%s2599 + $0x10] sm:$0xf]
        %v2605 = vld [vmem:[%s2599 + $0x14] sm:$0xf]
        %v2606 = vld [vmem:[%s2599 + $0x18] sm:$0xf]
        %v2607 = vld [vmem:[%s2599 + $0x1c] sm:$0xf]
        %v2608 = vld [vmem:[%s2599 + $0x20] sm:$0xf]
        %v2609 = vld [vmem:[%s2599 + $0x24] sm:$0xf]
        %v2610 = vld [vmem:[%s2599 + $0x28] sm:$0xf]
        %v2611 = vld [vmem:[%s2599 + $0x2c] sm:$0xf]
        %v2612 = vld [vmem:[%s2599 + $0x30] sm:$0xf]
        %v2613 = vld [vmem:[%s2599 + $0x34] sm:$0xf]
        %v2614 = vld [vmem:[%s2599 + $0x38] sm:$0xf]
        %v2615 = vld [vmem:[%s2599 + $0x3c] sm:$0xf]
        %v2645 = vunpack.c.l.b16 %v2570
        %v2646 = vunpack.c.l.b16 %v2571
        %v2647 = vunpack.c.l.b16 %v2572
        %v2648 = vunpack.c.l.b16 %v2573
        %v2649 = vunpack.c.l.b16 %v2574
        %v2650 = vunpack.c.l.b16 %v2575
        %v2651 = vunpack.c.l.b16 %v2576
        %v2652 = vunpack.c.l.b16 %v2577
        %v2653 = vunpack.c.l.b16 %v2578
        %v2654 = vunpack.c.l.b16 %v2579
        %v2655 = vunpack.c.l.b16 %v2580
        %v2656 = vunpack.c.l.b16 %v2581
        %v2657 = vunpack.c.l.b16 %v2582
        %v2658 = vunpack.c.l.b16 %v2583
        %v2659 = vunpack.c.l.b16 %v2584
        %v2660 = vunpack.c.l.b16 %v2585
        %v2661 = vunpack.c.l.b16 %v2586
        %v2662 = vunpack.c.l.b16 %v2587
        %v2663 = vunpack.c.l.b16 %v2588
        %v2664 = vunpack.c.l.b16 %v2589
        %v2665 = vunpack.c.l.b16 %v2590
        %v2666 = vunpack.c.l.b16 %v2591
        %v2667 = vunpack.c.l.b16 %v2592
        %v2668 = vunpack.c.l.b16 %v2593
        %v2669 = vunpack.c.l.b16 %v2594
        %v2670 = vunpack.c.l.b16 %v2595
        %v2671 = vunpack.c.l.b16 %v2596
        %v2672 = vunpack.c.l.b16 %v2597
        %v2673 = vunpack.c.l.b16 %v2598
        %v2674 = vpack.c.b16 %v2646, %v2645
        %v2675 = vpack.c.b16 %v2648, %v2647
        %v2676 = vpack.c.b16 %v2650, %v2649
        %v2677 = vpack.c.b16 %v2652, %v2651
        %v2678 = vpack.c.b16 %v2654, %v2653
        %v2679 = vpack.c.b16 %v2656, %v2655
        %v2680 = vpack.c.b16 %v2658, %v2657
        %v2681 = vpack.c.b16 %v2660, %v2659
        %v2682 = vpack.c.b16 %v2662, %v2661
        %v2683 = vpack.c.b16 %v2664, %v2663
        %v2684 = vpack.c.b16 %v2666, %v2665
        %v2685 = vpack.c.b16 %v2668, %v2667
        %v2686 = vpack.c.b16 %v2670, %v2669
        %v2687 = vpack.c.b16 %v2672, %v2671
        %v2688 = vpack.c.b16 %v2673, %v2673
        %v2689 = vrot.slane %v2674, 1
        %v2690 = vrot.slane %v2675, 1
        %v2691 = vsel %vm1317, %v2689, %v2690
        %v2692 = vrot.slane %v2676, 1
        %v2693 = vsel %vm1317, %v2690, %v2692
        %v2694 = vrot.slane %v2677, 1
        %v2695 = vsel %vm1317, %v2692, %v2694
        %v2696 = vrot.slane %v2678, 1
        %v2697 = vsel %vm1317, %v2694, %v2696
        %v2698 = vrot.slane %v2679, 1
        %v2699 = vsel %vm1317, %v2696, %v2698
        %v2700 = vrot.slane %v2680, 1
        %v2701 = vsel %vm1317, %v2698, %v2700
        %v2702 = vrot.slane %v2681, 1
        %v2703 = vsel %vm1317, %v2700, %v2702
        %v2704 = vrot.slane %v2682, 1
        %v2705 = vsel %vm1317, %v2702, %v2704
        %v2706 = vrot.slane %v2683, 1
        %v2707 = vsel %vm1317, %v2704, %v2706
        %v2708 = vrot.slane %v2684, 1
        %v2709 = vsel %vm1317, %v2706, %v2708
        %v2710 = vrot.slane %v2685, 1
        %v2711 = vsel %vm1317, %v2708, %v2710
        %v2712 = vrot.slane %v2686, 1
        %v2713 = vsel %vm1317, %v2710, %v2712
        %v2714 = vrot.slane %v2687, 1
        %v2715 = vsel %vm1317, %v2712, %v2714
        %v2716 = vrot.slane %v2688, 1
        %v2717 = vsel %vm1317, %v2714, %v2716
        %v2748 = vunpack.c.l.b16 %v2600
        %v2749 = vunpack.c.l.b16 %v2601
        %v2750 = vunpack.c.l.b16 %v2602
        %v2751 = vunpack.c.l.b16 %v2603
        %v2752 = vunpack.c.l.b16 %v2604
        %v2753 = vunpack.c.l.b16 %v2605
        %v2754 = vunpack.c.l.b16 %v2606
        %v2755 = vunpack.c.l.b16 %v2607
        %v2756 = vunpack.c.l.b16 %v2608
        %v2757 = vunpack.c.l.b16 %v2609
        %v2758 = vunpack.c.l.b16 %v2610
        %v2759 = vunpack.c.l.b16 %v2611
        %v2760 = vunpack.c.l.b16 %v2612
        %v2761 = vunpack.c.l.b16 %v2613
        %v2762 = vunpack.c.l.b16 %v2614
        %v2763 = vunpack.c.l.b16 %v2615
        %v2764 = vpack.c.b16 %v2749, %v2748
        %v2765 = vpack.c.b16 %v2751, %v2750
        %v2766 = vpack.c.b16 %v2753, %v2752
        %v2767 = vpack.c.b16 %v2755, %v2754
        %v2768 = vpack.c.b16 %v2757, %v2756
        %v2769 = vpack.c.b16 %v2759, %v2758
        %v2770 = vpack.c.b16 %v2761, %v2760
        %v2771 = vpack.c.b16 %v2763, %v2762
        %2780 = vmatprep.subr.bf16.mxu0 0
        %2781 = vmatpush1.bf16.msra.mxu0 %v2771
        %2782 = vmatprep.subr.bf16.mxu0 0
        %2783 = vmatpush1.bf16.msra.mxu0 %v2770
        %2784 = vmatprep.subr.bf16.mxu0 0
        %2785 = vmatpush1.bf16.msra.mxu0 %v2769
        %2786 = vmatprep.subr.bf16.mxu0 0
        %2787 = vmatpush1.bf16.msra.mxu0 %v2768
        %2788 = vmatprep.subr.bf16.mxu0 0
        %2789 = vmatpush1.bf16.msra.mxu0 %v2767
        %2790 = vmatprep.subr.bf16.mxu0 0
        %2791 = vmatpush1.bf16.msra.mxu0 %v2766
        %2792 = vmatprep.subr.bf16.mxu0 0
        %2793 = vmatpush1.bf16.msra.mxu0 %v2765
        %2794 = vmatprep.subr.bf16.mxu0 0
        %2795 = vmatpush1.bf16.msra.mxu0 %v2764
        %2796 = vmatprep.subr.bf16.mxu0 0
        %2797 = vmatpush2.bf16.msra.mxu0 0
        %2798 = vmatprep.subr.bf16.mxu0 0
        %2799 = vmatpush2.bf16.msra.mxu0 0
        %2800 = vmatprep.subr.bf16.mxu0 0
        %2801 = vmatpush2.bf16.msra.mxu0 0
        %2802 = vmatprep.subr.bf16.mxu0 0
        %2803 = vmatpush2.bf16.msra.mxu0 0
        %2804 = vmatprep.subr.bf16.mxu0 0
        %2805 = vmatpush2.bf16.msra.mxu0 0
        %2806 = vmatprep.subr.bf16.mxu0 0
        %2807 = vmatpush2.bf16.msra.mxu0 0
        %2808 = vmatprep.subr.bf16.mxu0 0
        %2809 = vmatpush2.bf16.msra.mxu0 0
        %2810 = vmatprep.subr.bf16.mxu0 0
        %2811 = vmatpush2.bf16.msra.mxu0 0
        %2812 = vmatprep.mubr.bf16.mxu0 0
        %2813 = vmatmul.mubr.bf16.gmra.mxu0 %v2691
        %v2814 = vpop.f32.mrf.mxu0
        %v2815 = vadd.f32 0.0, %v2814
        %v2816 = vpop.f32.mrf.mxu0
        %v2817 = vpop.f32.mrf.mxu0
        %v2818 = vadd.f32 0.0, %v2817
        %v2819 = vpop.f32.mrf.mxu0
        %2820 = vmatprep.mubr.bf16.mxu0 0
        %2821 = vmatmul.mubr.bf16.gmra.mxu0 %v2693
        %v2822 = vpop.f32.mrf.mxu0
        %v2823 = vadd.f32 0.0, %v2822
        %v2824 = vpop.f32.mrf.mxu0
        %v2825 = vpop.f32.mrf.mxu0
        %v2826 = vadd.f32 0.0, %v2825
        %v2827 = vpop.f32.mrf.mxu0
        %2828 = vmatprep.mubr.bf16.mxu0 0
        %2829 = vmatmul.mubr.bf16.gmra.mxu0 %v2695
        %v2830 = vpop.f32.mrf.mxu0
        %v2831 = vadd.f32 0.0, %v2830
        %v2832 = vpop.f32.mrf.mxu0
        %v2833 = vpop.f32.mrf.mxu0
        %v2834 = vadd.f32 0.0, %v2833
        %v2835 = vpop.f32.mrf.mxu0
        %2836 = vmatprep.mubr.bf16.mxu0 0
        %2837 = vmatmul.mubr.bf16.gmra.mxu0 %v2697
        %v2838 = vpop.f32.mrf.mxu0
        %v2839 = vadd.f32 0.0, %v2838
        %v2840 = vpop.f32.mrf.mxu0
        %v2841 = vpop.f32.mrf.mxu0
        %v2842 = vadd.f32 0.0, %v2841
        %v2843 = vpop.f32.mrf.mxu0
        %2844 = vmatprep.mubr.bf16.mxu0 0
        %2845 = vmatmul.mubr.bf16.gmra.mxu0 %v2699
        %v2846 = vpop.f32.mrf.mxu0
        %v2847 = vadd.f32 0.0, %v2846
        %v2848 = vpop.f32.mrf.mxu0
        %v2849 = vpop.f32.mrf.mxu0
        %v2850 = vadd.f32 0.0, %v2849
        %v2851 = vpop.f32.mrf.mxu0
        %2852 = vmatprep.mubr.bf16.mxu0 0
        %2853 = vmatmul.mubr.bf16.gmra.mxu0 %v2701
        %v2854 = vpop.f32.mrf.mxu0
        %v2855 = vadd.f32 0.0, %v2854
        %v2856 = vpop.f32.mrf.mxu0
        %v2857 = vpop.f32.mrf.mxu0
        %v2858 = vadd.f32 0.0, %v2857
        %v2859 = vpop.f32.mrf.mxu0
        %2860 = vmatprep.mubr.bf16.mxu0 0
        %2861 = vmatmul.mubr.bf16.gmra.mxu0 %v2703
        %v2862 = vpop.f32.mrf.mxu0
        %v2863 = vadd.f32 0.0, %v2862
        %v2864 = vpop.f32.mrf.mxu0
        %v2865 = vpop.f32.mrf.mxu0
        %v2866 = vadd.f32 0.0, %v2865
        %v2867 = vpop.f32.mrf.mxu0
        %2868 = vmatprep.mubr.bf16.mxu0 0
        %2869 = vmatmul.mubr.bf16.gmra.mxu0 %v2705
        %v2870 = vpop.f32.mrf.mxu0
        %v2871 = vadd.f32 0.0, %v2870
        %v2872 = vpop.f32.mrf.mxu0
        %v2873 = vpop.f32.mrf.mxu0
        %v2874 = vadd.f32 0.0, %v2873
        %v2875 = vpop.f32.mrf.mxu0
        %2876 = vmatprep.mubr.bf16.mxu0 0
        %2877 = vmatmul.mubr.bf16.gmra.mxu0 %v2707
        %v2878 = vpop.f32.mrf.mxu0
        %v2879 = vadd.f32 0.0, %v2878
        %v2880 = vpop.f32.mrf.mxu0
        %v2881 = vpop.f32.mrf.mxu0
        %v2882 = vadd.f32 0.0, %v2881
        %v2883 = vpop.f32.mrf.mxu0
        %2884 = vmatprep.mubr.bf16.mxu0 0
        %2885 = vmatmul.mubr.bf16.gmra.mxu0 %v2709
        %v2886 = vpop.f32.mrf.mxu0
        %v2887 = vadd.f32 0.0, %v2886
        %v2888 = vpop.f32.mrf.mxu0
        %v2889 = vpop.f32.mrf.mxu0
        %v2890 = vadd.f32 0.0, %v2889
        %v2891 = vpop.f32.mrf.mxu0
        %2892 = vmatprep.mubr.bf16.mxu0 0
        %2893 = vmatmul.mubr.bf16.gmra.mxu0 %v2711
        %v2894 = vpop.f32.mrf.mxu0
        %v2895 = vadd.f32 0.0, %v2894
        %v2896 = vpop.f32.mrf.mxu0
        %v2897 = vpop.f32.mrf.mxu0
        %v2898 = vadd.f32 0.0, %v2897
        %v2899 = vpop.f32.mrf.mxu0
        %2900 = vmatprep.mubr.bf16.mxu0 0
        %2901 = vmatmul.mubr.bf16.gmra.mxu0 %v2713
        %v2902 = vpop.f32.mrf.mxu0
        %v2903 = vadd.f32 0.0, %v2902
        %v2904 = vpop.f32.mrf.mxu0
        %v2905 = vpop.f32.mrf.mxu0
        %v2906 = vadd.f32 0.0, %v2905
        %v2907 = vpop.f32.mrf.mxu0
        %2908 = vmatprep.mubr.bf16.mxu0 0
        %2909 = vmatmul.mubr.bf16.gmra.mxu0 %v2715
        %v2910 = vpop.f32.mrf.mxu0
        %v2911 = vadd.f32 0.0, %v2910
        %v2912 = vpop.f32.mrf.mxu0
        %v2913 = vpop.f32.mrf.mxu0
        %v2914 = vadd.f32 0.0, %v2913
        %v2915 = vpop.f32.mrf.mxu0
        %2916 = vmatprep.mubr.bf16.mxu0 0
        %2917 = vmatmul.mubr.bf16.gmra.mxu0 %v2717
        %v2918 = vpop.f32.mrf.mxu0
        %v2919 = vadd.f32 0.0, %v2918
        %v2920 = vpop.f32.mrf.mxu0
        %v2921 = vpop.f32.mrf.mxu0
        %v2922 = vadd.f32 0.0, %v2921
        %v2923 = vpop.f32.mrf.mxu0
        %2924 = vdwg.mxu0
        %v2925 = vld [vmem:[#allocation2] sm:$0xff]
        %v2926 = vld [vmem:[#allocation2 + $0x8] sm:$0xff]
        %v2927 = vld [vmem:[#allocation2 + $0x10] sm:$0xff]
        %v2928 = vld [vmem:[#allocation2 + $0x18] sm:$0xff]
        %v2929 = vld [vmem:[#allocation2 + $0x20] sm:$0xff]
        %v2930 = vld [vmem:[#allocation2 + $0x28] sm:$0xff]
        %v2931 = vld [vmem:[#allocation2 + $0x30] sm:$0xff]
        %v2932 = vld [vmem:[#allocation2 + $0x38] sm:$0xff]
        %v2933 = vld [vmem:[#allocation2 + $0x40] sm:$0xff]
        %v2934 = vld [vmem:[#allocation2 + $0x48] sm:$0xff]
        %v2935 = vld [vmem:[#allocation2 + $0x50] sm:$0xff]
        %v2936 = vld [vmem:[#allocation2 + $0x58] sm:$0xff]
        %v2937 = vld [vmem:[#allocation2 + $0x60] sm:$0xff]
        %v2938 = vld [vmem:[#allocation2 + $0x68] sm:$0xff]
        %v2939 = vld [vmem:[#allocation2 + $0x70] sm:$0xff]
        %v2940 = vld [vmem:[#allocation2 + $0x78] sm:$0xff]
        %v2941 = vld [vmem:[#allocation2 + $0x80] sm:$0xff]
        %v2942 = vld [vmem:[#allocation2 + $0x88] sm:$0xff]
        %v2943 = vld [vmem:[#allocation2 + $0x90] sm:$0xff]
        %v2944 = vld [vmem:[#allocation2 + $0x98] sm:$0xff]
        %v2945 = vld [vmem:[#allocation2 + $0xa0] sm:$0xff]
        %v2946 = vld [vmem:[#allocation2 + $0xa8] sm:$0xff]
        %v2947 = vld [vmem:[#allocation2 + $0xb0] sm:$0xff]
        %v2948 = vld [vmem:[#allocation2 + $0xb8] sm:$0xff]
        %v2949 = vld [vmem:[#allocation2 + $0xc0] sm:$0xff]
        %v2950 = vld [vmem:[#allocation2 + $0xc8] sm:$0xff]
        %v2951 = vld [vmem:[#allocation2 + $0xd0] sm:$0xff]
        %v2952 = vld [vmem:[#allocation2 + $0xd8] sm:$0xff]
        %v2953 = vadd.f32 %v2925, %v2815
        %v2954 = vadd.f32 %v2926, %v2818
        %v2955 = vadd.f32 %v2927, %v2823
        %v2956 = vadd.f32 %v2928, %v2826
        %v2957 = vadd.f32 %v2929, %v2831
        %v2958 = vadd.f32 %v2930, %v2834
        %v2959 = vadd.f32 %v2931, %v2839
        %v2960 = vadd.f32 %v2932, %v2842
        %v2961 = vadd.f32 %v2933, %v2847
        %v2962 = vadd.f32 %v2934, %v2850
        %v2963 = vadd.f32 %v2935, %v2855
        %v2964 = vadd.f32 %v2936, %v2858
        %v2965 = vadd.f32 %v2937, %v2863
        %v2966 = vadd.f32 %v2938, %v2866
        %v2967 = vadd.f32 %v2939, %v2871
        %v2968 = vadd.f32 %v2940, %v2874
        %v2969 = vadd.f32 %v2941, %v2879
        %v2970 = vadd.f32 %v2942, %v2882
        %v2971 = vadd.f32 %v2943, %v2887
        %v2972 = vadd.f32 %v2944, %v2890
        %v2973 = vadd.f32 %v2945, %v2895
        %v2974 = vadd.f32 %v2946, %v2898
        %v2975 = vadd.f32 %v2947, %v2903
        %v2976 = vadd.f32 %v2948, %v2906
        %v2977 = vadd.f32 %v2949, %v2911
        %v2978 = vadd.f32 %v2950, %v2914
        %v2979 = vadd.f32 %v2951, %v2919
        %v2980 = vadd.f32 %v2952, %v2922
        %2981 = vst [vmem:[#allocation2] sm:$0xff] %v2953
        %2982 = vst [vmem:[#allocation2 + $0x8] sm:$0xff] %v2954
        %2983 = vst [vmem:[#allocation2 + $0x10] sm:$0xff] %v2955
        %2984 = vst [vmem:[#allocation2 + $0x18] sm:$0xff] %v2956
        %2985 = vst [vmem:[#allocation2 + $0x20] sm:$0xff] %v2957
        %2986 = vst [vmem:[#allocation2 + $0x28] sm:$0xff] %v2958
        %2987 = vst [vmem:[#allocation2 + $0x30] sm:$0xff] %v2959
        %2988 = vst [vmem:[#allocation2 + $0x38] sm:$0xff] %v2960
        %2989 = vst [vmem:[#allocation2 + $0x40] sm:$0xff] %v2961
        %2990 = vst [vmem:[#allocation2 + $0x48] sm:$0xff] %v2962
        %2991 = vst [vmem:[#allocation2 + $0x50] sm:$0xff] %v2963
        %2992 = vst [vmem:[#allocation2 + $0x58] sm:$0xff] %v2964
        %2993 = vst [vmem:[#allocation2 + $0x60] sm:$0xff] %v2965
        %2994 = vst [vmem:[#allocation2 + $0x68] sm:$0xff] %v2966
        %2995 = vst [vmem:[#allocation2 + $0x70] sm:$0xff] %v2967
        %2996 = vst [vmem:[#allocation2 + $0x78] sm:$0xff] %v2968
        %2997 = vst [vmem:[#allocation2 + $0x80] sm:$0xff] %v2969
        %2998 = vst [vmem:[#allocation2 + $0x88] sm:$0xff] %v2970
        %2999 = vst [vmem:[#allocation2 + $0x90] sm:$0xff] %v2971
        %3000 = vst [vmem:[#allocation2 + $0x98] sm:$0xff] %v2972
        %3001 = vst [vmem:[#allocation2 + $0xa0] sm:$0xff] %v2973
        %3002 = vst [vmem:[#allocation2 + $0xa8] sm:$0xff] %v2974
        %3003 = vst [vmem:[#allocation2 + $0xb0] sm:$0xff] %v2975
        %3004 = vst [vmem:[#allocation2 + $0xb8] sm:$0xff] %v2976
        %3005 = vst [vmem:[#allocation2 + $0xc0] sm:$0xff] %v2977
        %3006 = vst [vmem:[#allocation2 + $0xc8] sm:$0xff] %v2978
        %3007 = vst [vmem:[#allocation2 + $0xd0] sm:$0xff] %v2979
        %3008 = vst [vmem:[#allocation2 + $0xd8] sm:$0xff] %v2980
        %v3009 = vld [vmem:[%s258 + $0x10] sm:$0xf]
        %v3010 = vld [vmem:[%s258 + $0x14] sm:$0xf]
        %v3011 = vld [vmem:[%s258 + $0x18] sm:$0xf]
        %v3012 = vld [vmem:[%s258 + $0x1c] sm:$0xf]
        %v3013 = vld [vmem:[%s258 + $0x20] sm:$0xf]
        %v3014 = vld [vmem:[%s258 + $0x24] sm:$0xf]
        %v3015 = vld [vmem:[%s258 + $0x28] sm:$0xf]
        %v3016 = vld [vmem:[%s258 + $0x2c] sm:$0xf]
        %v3017 = vld [vmem:[%s258 + $0x30] sm:$0xf]
        %v3018 = vld [vmem:[%s258 + $0x34] sm:$0xf]
        %v3019 = vld [vmem:[%s258 + $0x38] sm:$0xf]
        %v3020 = vld [vmem:[%s258 + $0x3c] sm:$0xf]
        %v3021 = vld [vmem:[%s258 + $0x40] sm:$0xf]
        %v3022 = vld [vmem:[%s258 + $0x44] sm:$0xf]
        %v3023 = vld [vmem:[%s258 + $0x48] sm:$0xf]
        %v3024 = vld [vmem:[%s258 + $0x4c] sm:$0xf]
        %v3025 = vld [vmem:[%s258 + $0x50] sm:$0xf]
        %v3026 = vld [vmem:[%s258 + $0x54] sm:$0xf]
        %v3027 = vld [vmem:[%s258 + $0x58] sm:$0xf]
        %v3028 = vld [vmem:[%s258 + $0x5c] sm:$0xf]
        %v3029 = vld [vmem:[%s258 + $0x60] sm:$0xf]
        %v3030 = vld [vmem:[%s258 + $0x64] sm:$0xf]
        %v3031 = vld [vmem:[%s258 + $0x68] sm:$0xf]
        %v3032 = vld [vmem:[%s258 + $0x6c] sm:$0xf]
        %v3033 = vld [vmem:[%s258 + $0x70] sm:$0xf]
        %v3034 = vld [vmem:[%s258 + $0x74] sm:$0xf]
        %v3035 = vld [vmem:[%s258 + $0x78] sm:$0xf]
        %v3036 = vld [vmem:[%s258 + $0x7c] sm:$0xf]
        %s3037 = scalar_lea.vmem %s267, 384 [#allocation6]
        %v3038 = vld [vmem:[%s3037] sm:$0xf]
        %v3039 = vld [vmem:[%s3037 + $0x4] sm:$0xf]
        %v3040 = vld [vmem:[%s3037 + $0x8] sm:$0xf]
        %v3041 = vld [vmem:[%s3037 + $0xc] sm:$0xf]
        %v3042 = vld [vmem:[%s3037 + $0x10] sm:$0xf]
        %v3043 = vld [vmem:[%s3037 + $0x14] sm:$0xf]
        %v3044 = vld [vmem:[%s3037 + $0x18] sm:$0xf]
        %v3045 = vld [vmem:[%s3037 + $0x1c] sm:$0xf]
        %v3046 = vld [vmem:[%s3037 + $0x20] sm:$0xf]
        %v3047 = vld [vmem:[%s3037 + $0x24] sm:$0xf]
        %v3048 = vld [vmem:[%s3037 + $0x28] sm:$0xf]
        %v3049 = vld [vmem:[%s3037 + $0x2c] sm:$0xf]
        %v3050 = vld [vmem:[%s3037 + $0x30] sm:$0xf]
        %v3051 = vld [vmem:[%s3037 + $0x34] sm:$0xf]
        %v3052 = vld [vmem:[%s3037 + $0x38] sm:$0xf]
        %v3053 = vld [vmem:[%s3037 + $0x3c] sm:$0xf]
        %v3082 = vunpack.c.l.b16 %v3009
        %v3083 = vunpack.c.l.b16 %v3010
        %v3084 = vunpack.c.l.b16 %v3011
        %v3085 = vunpack.c.l.b16 %v3012
        %v3086 = vunpack.c.l.b16 %v3013
        %v3087 = vunpack.c.l.b16 %v3014
        %v3088 = vunpack.c.l.b16 %v3015
        %v3089 = vunpack.c.l.b16 %v3016
        %v3090 = vunpack.c.l.b16 %v3017
        %v3091 = vunpack.c.l.b16 %v3018
        %v3092 = vunpack.c.l.b16 %v3019
        %v3093 = vunpack.c.l.b16 %v3020
        %v3094 = vunpack.c.l.b16 %v3021
        %v3095 = vunpack.c.l.b16 %v3022
        %v3096 = vunpack.c.l.b16 %v3023
        %v3097 = vunpack.c.l.b16 %v3024
        %v3098 = vunpack.c.l.b16 %v3025
        %v3099 = vunpack.c.l.b16 %v3026
        %v3100 = vunpack.c.l.b16 %v3027
        %v3101 = vunpack.c.l.b16 %v3028
        %v3102 = vunpack.c.l.b16 %v3029
        %v3103 = vunpack.c.l.b16 %v3030
        %v3104 = vunpack.c.l.b16 %v3031
        %v3105 = vunpack.c.l.b16 %v3032
        %v3106 = vunpack.c.l.b16 %v3033
        %v3107 = vunpack.c.l.b16 %v3034
        %v3108 = vunpack.c.l.b16 %v3035
        %v3109 = vunpack.c.l.b16 %v3036
        %v3110 = vpack.c.b16 %v3083, %v3082
        %v3111 = vpack.c.b16 %v3085, %v3084
        %v3112 = vpack.c.b16 %v3087, %v3086
        %v3113 = vpack.c.b16 %v3089, %v3088
        %v3114 = vpack.c.b16 %v3091, %v3090
        %v3115 = vpack.c.b16 %v3093, %v3092
        %v3116 = vpack.c.b16 %v3095, %v3094
        %v3117 = vpack.c.b16 %v3097, %v3096
        %v3118 = vpack.c.b16 %v3099, %v3098
        %v3119 = vpack.c.b16 %v3101, %v3100
        %v3120 = vpack.c.b16 %v3103, %v3102
        %v3121 = vpack.c.b16 %v3105, %v3104
        %v3122 = vpack.c.b16 %v3107, %v3106
        %v3123 = vpack.c.b16 %v3109, %v3108
        %v3154 = vunpack.c.l.b16 %v3038
        %v3155 = vunpack.c.l.b16 %v3039
        %v3156 = vunpack.c.l.b16 %v3040
        %v3157 = vunpack.c.l.b16 %v3041
        %v3158 = vunpack.c.l.b16 %v3042
        %v3159 = vunpack.c.l.b16 %v3043
        %v3160 = vunpack.c.l.b16 %v3044
        %v3161 = vunpack.c.l.b16 %v3045
        %v3162 = vunpack.c.l.b16 %v3046
        %v3163 = vunpack.c.l.b16 %v3047
        %v3164 = vunpack.c.l.b16 %v3048
        %v3165 = vunpack.c.l.b16 %v3049
        %v3166 = vunpack.c.l.b16 %v3050
        %v3167 = vunpack.c.l.b16 %v3051
        %v3168 = vunpack.c.l.b16 %v3052
        %v3169 = vunpack.c.l.b16 %v3053
        %v3170 = vpack.c.b16 %v3155, %v3154
        %v3171 = vpack.c.b16 %v3157, %v3156
        %v3172 = vpack.c.b16 %v3159, %v3158
        %v3173 = vpack.c.b16 %v3161, %v3160
        %v3174 = vpack.c.b16 %v3163, %v3162
        %v3175 = vpack.c.b16 %v3165, %v3164
        %v3176 = vpack.c.b16 %v3167, %v3166
        %v3177 = vpack.c.b16 %v3169, %v3168
        %3186 = vmatprep.subr.bf16.mxu0 0
        %3187 = vmatpush1.bf16.msra.mxu0 %v3177
        %3188 = vmatprep.subr.bf16.mxu0 0
        %3189 = vmatpush1.bf16.msra.mxu0 %v3176
        %3190 = vmatprep.subr.bf16.mxu0 0
        %3191 = vmatpush1.bf16.msra.mxu0 %v3175
        %3192 = vmatprep.subr.bf16.mxu0 0
        %3193 = vmatpush1.bf16.msra.mxu0 %v3174
        %3194 = vmatprep.subr.bf16.mxu0 0
        %3195 = vmatpush1.bf16.msra.mxu0 %v3173
        %3196 = vmatprep.subr.bf16.mxu0 0
        %3197 = vmatpush1.bf16.msra.mxu0 %v3172
        %3198 = vmatprep.subr.bf16.mxu0 0
        %3199 = vmatpush1.bf16.msra.mxu0 %v3171
        %3200 = vmatprep.subr.bf16.mxu0 0
        %3201 = vmatpush1.bf16.msra.mxu0 %v3170
        %3202 = vmatprep.subr.bf16.mxu0 0
        %3203 = vmatpush2.bf16.msra.mxu0 0
        %3204 = vmatprep.subr.bf16.mxu0 0
        %3205 = vmatpush2.bf16.msra.mxu0 0
        %3206 = vmatprep.subr.bf16.mxu0 0
        %3207 = vmatpush2.bf16.msra.mxu0 0
        %3208 = vmatprep.subr.bf16.mxu0 0
        %3209 = vmatpush2.bf16.msra.mxu0 0
        %3210 = vmatprep.subr.bf16.mxu0 0
        %3211 = vmatpush2.bf16.msra.mxu0 0
        %3212 = vmatprep.subr.bf16.mxu0 0
        %3213 = vmatpush2.bf16.msra.mxu0 0
        %3214 = vmatprep.subr.bf16.mxu0 0
        %3215 = vmatpush2.bf16.msra.mxu0 0
        %3216 = vmatprep.subr.bf16.mxu0 0
        %3217 = vmatpush2.bf16.msra.mxu0 0
        %3218 = vmatprep.mubr.bf16.mxu0 0
        %3219 = vmatmul.mubr.bf16.gmra.mxu0 %v3110
        %v3220 = vpop.f32.mrf.mxu0
        %v3221 = vadd.f32 0.0, %v3220
        %v3222 = vpop.f32.mrf.mxu0
        %v3223 = vpop.f32.mrf.mxu0
        %v3224 = vadd.f32 0.0, %v3223
        %v3225 = vpop.f32.mrf.mxu0
        %3226 = vmatprep.mubr.bf16.mxu0 0
        %3227 = vmatmul.mubr.bf16.gmra.mxu0 %v3111
        %v3228 = vpop.f32.mrf.mxu0
        %v3229 = vadd.f32 0.0, %v3228
        %v3230 = vpop.f32.mrf.mxu0
        %v3231 = vpop.f32.mrf.mxu0
        %v3232 = vadd.f32 0.0, %v3231
        %v3233 = vpop.f32.mrf.mxu0
        %3234 = vmatprep.mubr.bf16.mxu0 0
        %3235 = vmatmul.mubr.bf16.gmra.mxu0 %v3112
        %v3236 = vpop.f32.mrf.mxu0
        %v3237 = vadd.f32 0.0, %v3236
        %v3238 = vpop.f32.mrf.mxu0
        %v3239 = vpop.f32.mrf.mxu0
        %v3240 = vadd.f32 0.0, %v3239
        %v3241 = vpop.f32.mrf.mxu0
        %3242 = vmatprep.mubr.bf16.mxu0 0
        %3243 = vmatmul.mubr.bf16.gmra.mxu0 %v3113
        %v3244 = vpop.f32.mrf.mxu0
        %v3245 = vadd.f32 0.0, %v3244
        %v3246 = vpop.f32.mrf.mxu0
        %v3247 = vpop.f32.mrf.mxu0
        %v3248 = vadd.f32 0.0, %v3247
        %v3249 = vpop.f32.mrf.mxu0
        %3250 = vmatprep.mubr.bf16.mxu0 0
        %3251 = vmatmul.mubr.bf16.gmra.mxu0 %v3114
        %v3252 = vpop.f32.mrf.mxu0
        %v3253 = vadd.f32 0.0, %v3252
        %v3254 = vpop.f32.mrf.mxu0
        %v3255 = vpop.f32.mrf.mxu0
        %v3256 = vadd.f32 0.0, %v3255
        %v3257 = vpop.f32.mrf.mxu0
        %3258 = vmatprep.mubr.bf16.mxu0 0
        %3259 = vmatmul.mubr.bf16.gmra.mxu0 %v3115
        %v3260 = vpop.f32.mrf.mxu0
        %v3261 = vadd.f32 0.0, %v3260
        %v3262 = vpop.f32.mrf.mxu0
        %v3263 = vpop.f32.mrf.mxu0
        %v3264 = vadd.f32 0.0, %v3263
        %v3265 = vpop.f32.mrf.mxu0
        %3266 = vmatprep.mubr.bf16.mxu0 0
        %3267 = vmatmul.mubr.bf16.gmra.mxu0 %v3116
        %v3268 = vpop.f32.mrf.mxu0
        %v3269 = vadd.f32 0.0, %v3268
        %v3270 = vpop.f32.mrf.mxu0
        %v3271 = vpop.f32.mrf.mxu0
        %v3272 = vadd.f32 0.0, %v3271
        %v3273 = vpop.f32.mrf.mxu0
        %3274 = vmatprep.mubr.bf16.mxu0 0
        %3275 = vmatmul.mubr.bf16.gmra.mxu0 %v3117
        %v3276 = vpop.f32.mrf.mxu0
        %v3277 = vadd.f32 0.0, %v3276
        %v3278 = vpop.f32.mrf.mxu0
        %v3279 = vpop.f32.mrf.mxu0
        %v3280 = vadd.f32 0.0, %v3279
        %v3281 = vpop.f32.mrf.mxu0
        %3282 = vmatprep.mubr.bf16.mxu0 0
        %3283 = vmatmul.mubr.bf16.gmra.mxu0 %v3118
        %v3284 = vpop.f32.mrf.mxu0
        %v3285 = vadd.f32 0.0, %v3284
        %v3286 = vpop.f32.mrf.mxu0
        %v3287 = vpop.f32.mrf.mxu0
        %v3288 = vadd.f32 0.0, %v3287
        %v3289 = vpop.f32.mrf.mxu0
        %3290 = vmatprep.mubr.bf16.mxu0 0
        %3291 = vmatmul.mubr.bf16.gmra.mxu0 %v3119
        %v3292 = vpop.f32.mrf.mxu0
        %v3293 = vadd.f32 0.0, %v3292
        %v3294 = vpop.f32.mrf.mxu0
        %v3295 = vpop.f32.mrf.mxu0
        %v3296 = vadd.f32 0.0, %v3295
        %v3297 = vpop.f32.mrf.mxu0
        %3298 = vmatprep.mubr.bf16.mxu0 0
        %3299 = vmatmul.mubr.bf16.gmra.mxu0 %v3120
        %v3300 = vpop.f32.mrf.mxu0
        %v3301 = vadd.f32 0.0, %v3300
        %v3302 = vpop.f32.mrf.mxu0
        %v3303 = vpop.f32.mrf.mxu0
        %v3304 = vadd.f32 0.0, %v3303
        %v3305 = vpop.f32.mrf.mxu0
        %3306 = vmatprep.mubr.bf16.mxu0 0
        %3307 = vmatmul.mubr.bf16.gmra.mxu0 %v3121
        %v3308 = vpop.f32.mrf.mxu0
        %v3309 = vadd.f32 0.0, %v3308
        %v3310 = vpop.f32.mrf.mxu0
        %v3311 = vpop.f32.mrf.mxu0
        %v3312 = vadd.f32 0.0, %v3311
        %v3313 = vpop.f32.mrf.mxu0
        %3314 = vmatprep.mubr.bf16.mxu0 0
        %3315 = vmatmul.mubr.bf16.gmra.mxu0 %v3122
        %v3316 = vpop.f32.mrf.mxu0
        %v3317 = vadd.f32 0.0, %v3316
        %v3318 = vpop.f32.mrf.mxu0
        %v3319 = vpop.f32.mrf.mxu0
        %v3320 = vadd.f32 0.0, %v3319
        %v3321 = vpop.f32.mrf.mxu0
        %3322 = vmatprep.mubr.bf16.mxu0 0
        %3323 = vmatmul.mubr.bf16.gmra.mxu0 %v3123
        %v3324 = vpop.f32.mrf.mxu0
        %v3325 = vadd.f32 0.0, %v3324
        %v3326 = vpop.f32.mrf.mxu0
        %v3327 = vpop.f32.mrf.mxu0
        %v3328 = vadd.f32 0.0, %v3327
        %v3329 = vpop.f32.mrf.mxu0
        %3330 = vdwg.mxu0
        %v3331 = vld [vmem:[#allocation2] sm:$0xff]
        %v3332 = vld [vmem:[#allocation2 + $0x8] sm:$0xff]
        %v3333 = vld [vmem:[#allocation2 + $0x10] sm:$0xff]
        %v3334 = vld [vmem:[#allocation2 + $0x18] sm:$0xff]
        %v3335 = vld [vmem:[#allocation2 + $0x20] sm:$0xff]
        %v3336 = vld [vmem:[#allocation2 + $0x28] sm:$0xff]
        %v3337 = vld [vmem:[#allocation2 + $0x30] sm:$0xff]
        %v3338 = vld [vmem:[#allocation2 + $0x38] sm:$0xff]
        %v3339 = vld [vmem:[#allocation2 + $0x40] sm:$0xff]
        %v3340 = vld [vmem:[#allocation2 + $0x48] sm:$0xff]
        %v3341 = vld [vmem:[#allocation2 + $0x50] sm:$0xff]
        %v3342 = vld [vmem:[#allocation2 + $0x58] sm:$0xff]
        %v3343 = vld [vmem:[#allocation2 + $0x60] sm:$0xff]
        %v3344 = vld [vmem:[#allocation2 + $0x68] sm:$0xff]
        %v3345 = vld [vmem:[#allocation2 + $0x70] sm:$0xff]
        %v3346 = vld [vmem:[#allocation2 + $0x78] sm:$0xff]
        %v3347 = vld [vmem:[#allocation2 + $0x80] sm:$0xff]
        %v3348 = vld [vmem:[#allocation2 + $0x88] sm:$0xff]
        %v3349 = vld [vmem:[#allocation2 + $0x90] sm:$0xff]
        %v3350 = vld [vmem:[#allocation2 + $0x98] sm:$0xff]
        %v3351 = vld [vmem:[#allocation2 + $0xa0] sm:$0xff]
        %v3352 = vld [vmem:[#allocation2 + $0xa8] sm:$0xff]
        %v3353 = vld [vmem:[#allocation2 + $0xb0] sm:$0xff]
        %v3354 = vld [vmem:[#allocation2 + $0xb8] sm:$0xff]
        %v3355 = vld [vmem:[#allocation2 + $0xc0] sm:$0xff]
        %v3356 = vld [vmem:[#allocation2 + $0xc8] sm:$0xff]
        %v3357 = vld [vmem:[#allocation2 + $0xd0] sm:$0xff]
        %v3358 = vld [vmem:[#allocation2 + $0xd8] sm:$0xff]
        %v3359 = vadd.f32 %v3331, %v3221
        %v3360 = vadd.f32 %v3332, %v3224
        %v3361 = vadd.f32 %v3333, %v3229
        %v3362 = vadd.f32 %v3334, %v3232
        %v3363 = vadd.f32 %v3335, %v3237
        %v3364 = vadd.f32 %v3336, %v3240
        %v3365 = vadd.f32 %v3337, %v3245
        %v3366 = vadd.f32 %v3338, %v3248
        %v3367 = vadd.f32 %v3339, %v3253
        %v3368 = vadd.f32 %v3340, %v3256
        %v3369 = vadd.f32 %v3341, %v3261
        %v3370 = vadd.f32 %v3342, %v3264
        %v3371 = vadd.f32 %v3343, %v3269
        %v3372 = vadd.f32 %v3344, %v3272
        %v3373 = vadd.f32 %v3345, %v3277
        %v3374 = vadd.f32 %v3346, %v3280
        %v3375 = vadd.f32 %v3347, %v3285
        %v3376 = vadd.f32 %v3348, %v3288
        %v3377 = vadd.f32 %v3349, %v3293
        %v3378 = vadd.f32 %v3350, %v3296
        %v3379 = vadd.f32 %v3351, %v3301
        %v3380 = vadd.f32 %v3352, %v3304
        %v3381 = vadd.f32 %v3353, %v3309
        %v3382 = vadd.f32 %v3354, %v3312
        %v3383 = vadd.f32 %v3355, %v3317
        %v3384 = vadd.f32 %v3356, %v3320
        %v3385 = vadd.f32 %v3357, %v3325
        %v3386 = vadd.f32 %v3358, %v3328
        %3387 = vst [vmem:[#allocation2] sm:$0xff] %v3359
        %3388 = vst [vmem:[#allocation2 + $0x8] sm:$0xff] %v3360
        %3389 = vst [vmem:[#allocation2 + $0x10] sm:$0xff] %v3361
        %3390 = vst [vmem:[#allocation2 + $0x18] sm:$0xff] %v3362
        %3391 = vst [vmem:[#allocation2 + $0x20] sm:$0xff] %v3363
        %3392 = vst [vmem:[#allocation2 + $0x28] sm:$0xff] %v3364
        %3393 = vst [vmem:[#allocation2 + $0x30] sm:$0xff] %v3365
        %3394 = vst [vmem:[#allocation2 + $0x38] sm:$0xff] %v3366
        %3395 = vst [vmem:[#allocation2 + $0x40] sm:$0xff] %v3367
        %3396 = vst [vmem:[#allocation2 + $0x48] sm:$0xff] %v3368
        %3397 = vst [vmem:[#allocation2 + $0x50] sm:$0xff] %v3369
        %3398 = vst [vmem:[#allocation2 + $0x58] sm:$0xff] %v3370
        %3399 = vst [vmem:[#allocation2 + $0x60] sm:$0xff] %v3371
        %3400 = vst [vmem:[#allocation2 + $0x68] sm:$0xff] %v3372
        %3401 = vst [vmem:[#allocation2 + $0x70] sm:$0xff] %v3373
        %3402 = vst [vmem:[#allocation2 + $0x78] sm:$0xff] %v3374
        %3403 = vst [vmem:[#allocation2 + $0x80] sm:$0xff] %v3375
        %3404 = vst [vmem:[#allocation2 + $0x88] sm:$0xff] %v3376
        %3405 = vst [vmem:[#allocation2 + $0x90] sm:$0xff] %v3377
        %3406 = vst [vmem:[#allocation2 + $0x98] sm:$0xff] %v3378
        %3407 = vst [vmem:[#allocation2 + $0xa0] sm:$0xff] %v3379
        %3408 = vst [vmem:[#allocation2 + $0xa8] sm:$0xff] %v3380
        %3409 = vst [vmem:[#allocation2 + $0xb0] sm:$0xff] %v3381
        %3410 = vst [vmem:[#allocation2 + $0xb8] sm:$0xff] %v3382
        %3411 = vst [vmem:[#allocation2 + $0xc0] sm:$0xff] %v3383
        %3412 = vst [vmem:[#allocation2 + $0xc8] sm:$0xff] %v3384
        %3413 = vst [vmem:[#allocation2 + $0xd0] sm:$0xff] %v3385
        %3414 = vst [vmem:[#allocation2 + $0xd8] sm:$0xff] %v3386
        %v3415 = vld [vmem:[%s258 + $0x10] sm:$0xf]
        %v3416 = vld [vmem:[%s258 + $0x14] sm:$0xf]
        %v3417 = vld [vmem:[%s258 + $0x18] sm:$0xf]
        %v3418 = vld [vmem:[%s258 + $0x1c] sm:$0xf]
        %v3419 = vld [vmem:[%s258 + $0x20] sm:$0xf]
        %v3420 = vld [vmem:[%s258 + $0x24] sm:$0xf]
        %v3421 = vld [vmem:[%s258 + $0x28] sm:$0xf]
        %v3422 = vld [vmem:[%s258 + $0x2c] sm:$0xf]
        %v3423 = vld [vmem:[%s258 + $0x30] sm:$0xf]
        %v3424 = vld [vmem:[%s258 + $0x34] sm:$0xf]
        %v3425 = vld [vmem:[%s258 + $0x38] sm:$0xf]
        %v3426 = vld [vmem:[%s258 + $0x3c] sm:$0xf]
        %v3427 = vld [vmem:[%s258 + $0x40] sm:$0xf]
        %v3428 = vld [vmem:[%s258 + $0x44] sm:$0xf]
        %v3429 = vld [vmem:[%s258 + $0x48] sm:$0xf]
        %v3430 = vld [vmem:[%s258 + $0x4c] sm:$0xf]
        %v3431 = vld [vmem:[%s258 + $0x50] sm:$0xf]
        %v3432 = vld [vmem:[%s258 + $0x54] sm:$0xf]
        %v3433 = vld [vmem:[%s258 + $0x58] sm:$0xf]
        %v3434 = vld [vmem:[%s258 + $0x5c] sm:$0xf]
        %v3435 = vld [vmem:[%s258 + $0x60] sm:$0xf]
        %v3436 = vld [vmem:[%s258 + $0x64] sm:$0xf]
        %v3437 = vld [vmem:[%s258 + $0x68] sm:$0xf]
        %v3438 = vld [vmem:[%s258 + $0x6c] sm:$0xf]
        %v3439 = vld [vmem:[%s258 + $0x70] sm:$0xf]
        %v3440 = vld [vmem:[%s258 + $0x74] sm:$0xf]
        %v3441 = vld [vmem:[%s258 + $0x78] sm:$0xf]
        %v3442 = vld [vmem:[%s258 + $0x7c] sm:$0xf]
        %v3443 = vld [vmem:[%s258 + $0x80] sm:$0x1]
        %s3444 = scalar_lea.vmem %s267, 448 [#allocation6]
        %v3445 = vld [vmem:[%s3444] sm:$0xf]
        %v3446 = vld [vmem:[%s3444 + $0x4] sm:$0xf]
        %v3447 = vld [vmem:[%s3444 + $0x8] sm:$0xf]
        %v3448 = vld [vmem:[%s3444 + $0xc] sm:$0xf]
        %v3449 = vld [vmem:[%s3444 + $0x10] sm:$0xf]
        %v3450 = vld [vmem:[%s3444 + $0x14] sm:$0xf]
        %v3451 = vld [vmem:[%s3444 + $0x18] sm:$0xf]
        %v3452 = vld [vmem:[%s3444 + $0x1c] sm:$0xf]
        %v3453 = vld [vmem:[%s3444 + $0x20] sm:$0xf]
        %v3454 = vld [vmem:[%s3444 + $0x24] sm:$0xf]
        %v3455 = vld [vmem:[%s3444 + $0x28] sm:$0xf]
        %v3456 = vld [vmem:[%s3444 + $0x2c] sm:$0xf]
        %v3457 = vld [vmem:[%s3444 + $0x30] sm:$0xf]
        %v3458 = vld [vmem:[%s3444 + $0x34] sm:$0xf]
        %v3459 = vld [vmem:[%s3444 + $0x38] sm:$0xf]
        %v3460 = vld [vmem:[%s3444 + $0x3c] sm:$0xf]
        %v3490 = vunpack.c.l.b16 %v3415
        %v3491 = vunpack.c.l.b16 %v3416
        %v3492 = vunpack.c.l.b16 %v3417
        %v3493 = vunpack.c.l.b16 %v3418
        %v3494 = vunpack.c.l.b16 %v3419
        %v3495 = vunpack.c.l.b16 %v3420
        %v3496 = vunpack.c.l.b16 %v3421
        %v3497 = vunpack.c.l.b16 %v3422
        %v3498 = vunpack.c.l.b16 %v3423
        %v3499 = vunpack.c.l.b16 %v3424
        %v3500 = vunpack.c.l.b16 %v3425
        %v3501 = vunpack.c.l.b16 %v3426
        %v3502 = vunpack.c.l.b16 %v3427
        %v3503 = vunpack.c.l.b16 %v3428
        %v3504 = vunpack.c.l.b16 %v3429
        %v3505 = vunpack.c.l.b16 %v3430
        %v3506 = vunpack.c.l.b16 %v3431
        %v3507 = vunpack.c.l.b16 %v3432
        %v3508 = vunpack.c.l.b16 %v3433
        %v3509 = vunpack.c.l.b16 %v3434
        %v3510 = vunpack.c.l.b16 %v3435
        %v3511 = vunpack.c.l.b16 %v3436
        %v3512 = vunpack.c.l.b16 %v3437
        %v3513 = vunpack.c.l.b16 %v3438
        %v3514 = vunpack.c.l.b16 %v3439
        %v3515 = vunpack.c.l.b16 %v3440
        %v3516 = vunpack.c.l.b16 %v3441
        %v3517 = vunpack.c.l.b16 %v3442
        %v3518 = vunpack.c.l.b16 %v3443
        %v3519 = vpack.c.b16 %v3491, %v3490
        %v3520 = vpack.c.b16 %v3493, %v3492
        %v3521 = vpack.c.b16 %v3495, %v3494
        %v3522 = vpack.c.b16 %v3497, %v3496
        %v3523 = vpack.c.b16 %v3499, %v3498
        %v3524 = vpack.c.b16 %v3501, %v3500
        %v3525 = vpack.c.b16 %v3503, %v3502
        %v3526 = vpack.c.b16 %v3505, %v3504
        %v3527 = vpack.c.b16 %v3507, %v3506
        %v3528 = vpack.c.b16 %v3509, %v3508
        %v3529 = vpack.c.b16 %v3511, %v3510
        %v3530 = vpack.c.b16 %v3513, %v3512
        %v3531 = vpack.c.b16 %v3515, %v3514
        %v3532 = vpack.c.b16 %v3517, %v3516
        %v3533 = vpack.c.b16 %v3518, %v3518
        %v3535 = vshrl.u32 %v3519, 16
        %v3537 = vshll.u32 %v3519, 16
        %v3539 = vrot.slane %v3537, 1
        %v3540 = vor.u32 %v3535, %v3539
        %v3542 = vshll.u32 %v3520, 16
        %v3544 = vrot.slane %v3542, 1
        %v3545 = vsel %vm790, %v3540, %v3544
        %v3546 = vshrl.u32 %v3520, 16
        %v3548 = vor.u32 %v3546, %v3544
        %v3550 = vshll.u32 %v3521, 16
        %v3552 = vrot.slane %v3550, 1
        %v3553 = vsel %vm790, %v3548, %v3552
        %v3554 = vshrl.u32 %v3521, 16
        %v3556 = vor.u32 %v3554, %v3552
        %v3558 = vshll.u32 %v3522, 16
        %v3560 = vrot.slane %v3558, 1
        %v3561 = vsel %vm790, %v3556, %v3560
        %v3562 = vshrl.u32 %v3522, 16
        %v3564 = vor.u32 %v3562, %v3560
        %v3566 = vshll.u32 %v3523, 16
        %v3568 = vrot.slane %v3566, 1
        %v3569 = vsel %vm790, %v3564, %v3568
        %v3570 = vshrl.u32 %v3523, 16
        %v3572 = vor.u32 %v3570, %v3568
        %v3574 = vshll.u32 %v3524, 16
        %v3576 = vrot.slane %v3574, 1
        %v3577 = vsel %vm790, %v3572, %v3576
        %v3578 = vshrl.u32 %v3524, 16
        %v3580 = vor.u32 %v3578, %v3576
        %v3582 = vshll.u32 %v3525, 16
        %v3584 = vrot.slane %v3582, 1
        %v3585 = vsel %vm790, %v3580, %v3584
        %v3586 = vshrl.u32 %v3525, 16
        %v3588 = vor.u32 %v3586, %v3584
        %v3590 = vshll.u32 %v3526, 16
        %v3592 = vrot.slane %v3590, 1
        %v3593 = vsel %vm790, %v3588, %v3592
        %v3594 = vshrl.u32 %v3526, 16
        %v3596 = vor.u32 %v3594, %v3592
        %v3598 = vshll.u32 %v3527, 16
        %v3600 = vrot.slane %v3598, 1
        %v3601 = vsel %vm790, %v3596, %v3600
        %v3602 = vshrl.u32 %v3527, 16
        %v3604 = vor.u32 %v3602, %v3600
        %v3606 = vshll.u32 %v3528, 16
        %v3608 = vrot.slane %v3606, 1
        %v3609 = vsel %vm790, %v3604, %v3608
        %v3610 = vshrl.u32 %v3528, 16
        %v3612 = vor.u32 %v3610, %v3608
        %v3614 = vshll.u32 %v3529, 16
        %v3616 = vrot.slane %v3614, 1
        %v3617 = vsel %vm790, %v3612, %v3616
        %v3618 = vshrl.u32 %v3529, 16
        %v3620 = vor.u32 %v3618, %v3616
        %v3622 = vshll.u32 %v3530, 16
        %v3624 = vrot.slane %v3622, 1
        %v3625 = vsel %vm790, %v3620, %v3624
        %v3626 = vshrl.u32 %v3530, 16
        %v3628 = vor.u32 %v3626, %v3624
        %v3630 = vshll.u32 %v3531, 16
        %v3632 = vrot.slane %v3630, 1
        %v3633 = vsel %vm790, %v3628, %v3632
        %v3634 = vshrl.u32 %v3531, 16
        %v3636 = vor.u32 %v3634, %v3632
        %v3638 = vshll.u32 %v3532, 16
        %v3640 = vrot.slane %v3638, 1
        %v3641 = vsel %vm790, %v3636, %v3640
        %v3642 = vshrl.u32 %v3532, 16
        %v3644 = vor.u32 %v3642, %v3640
        %v3646 = vshll.u32 %v3533, 16
        %v3648 = vrot.slane %v3646, 1
        %v3649 = vsel %vm790, %v3644, %v3648
        %v3680 = vunpack.c.l.b16 %v3445
        %v3681 = vunpack.c.l.b16 %v3446
        %v3682 = vunpack.c.l.b16 %v3447
        %v3683 = vunpack.c.l.b16 %v3448
        %v3684 = vunpack.c.l.b16 %v3449
        %v3685 = vunpack.c.l.b16 %v3450
        %v3686 = vunpack.c.l.b16 %v3451
        %v3687 = vunpack.c.l.b16 %v3452
        %v3688 = vunpack.c.l.b16 %v3453
        %v3689 = vunpack.c.l.b16 %v3454
        %v3690 = vunpack.c.l.b16 %v3455
        %v3691 = vunpack.c.l.b16 %v3456
        %v3692 = vunpack.c.l.b16 %v3457
        %v3693 = vunpack.c.l.b16 %v3458
        %v3694 = vunpack.c.l.b16 %v3459
        %v3695 = vunpack.c.l.b16 %v3460
        %v3696 = vpack.c.b16 %v3681, %v3680
        %v3697 = vpack.c.b16 %v3683, %v3682
        %v3698 = vpack.c.b16 %v3685, %v3684
        %v3699 = vpack.c.b16 %v3687, %v3686
        %v3700 = vpack.c.b16 %v3689, %v3688
        %v3701 = vpack.c.b16 %v3691, %v3690
        %v3702 = vpack.c.b16 %v3693, %v3692
        %v3703 = vpack.c.b16 %v3695, %v3694
        %3712 = vmatprep.subr.bf16.mxu0 0
        %3713 = vmatpush1.bf16.msra.mxu0 %v3703
        %3714 = vmatprep.subr.bf16.mxu0 0
        %3715 = vmatpush1.bf16.msra.mxu0 %v3702
        %3716 = vmatprep.subr.bf16.mxu0 0
        %3717 = vmatpush1.bf16.msra.mxu0 %v3701
        %3718 = vmatprep.subr.bf16.mxu0 0
        %3719 = vmatpush1.bf16.msra.mxu0 %v3700
        %3720 = vmatprep.subr.bf16.mxu0 0
        %3721 = vmatpush1.bf16.msra.mxu0 %v3699
        %3722 = vmatprep.subr.bf16.mxu0 0
        %3723 = vmatpush1.bf16.msra.mxu0 %v3698
        %3724 = vmatprep.subr.bf16.mxu0 0
        %3725 = vmatpush1.bf16.msra.mxu0 %v3697
        %3726 = vmatprep.subr.bf16.mxu0 0
        %3727 = vmatpush1.bf16.msra.mxu0 %v3696
        %3728 = vmatprep.subr.bf16.mxu0 0
        %3729 = vmatpush2.bf16.msra.mxu0 0
        %3730 = vmatprep.subr.bf16.mxu0 0
        %3731 = vmatpush2.bf16.msra.mxu0 0
        %3732 = vmatprep.subr.bf16.mxu0 0
        %3733 = vmatpush2.bf16.msra.mxu0 0
        %3734 = vmatprep.subr.bf16.mxu0 0
        %3735 = vmatpush2.bf16.msra.mxu0 0
        %3736 = vmatprep.subr.bf16.mxu0 0
        %3737 = vmatpush2.bf16.msra.mxu0 0
        %3738 = vmatprep.subr.bf16.mxu0 0
        %3739 = vmatpush2.bf16.msra.mxu0 0
        %3740 = vmatprep.subr.bf16.mxu0 0
        %3741 = vmatpush2.bf16.msra.mxu0 0
        %3742 = vmatprep.subr.bf16.mxu0 0
        %3743 = vmatpush2.bf16.msra.mxu0 0
        %3744 = vmatprep.mubr.bf16.mxu0 0
        %3745 = vmatmul.mubr.bf16.gmra.mxu0 %v3545
        %v3746 = vpop.f32.mrf.mxu0
        %v3747 = vadd.f32 0.0, %v3746
        %v3748 = vpop.f32.mrf.mxu0
        %v3749 = vpop.f32.mrf.mxu0
        %v3750 = vadd.f32 0.0, %v3749
        %v3751 = vpop.f32.mrf.mxu0
        %3752 = vmatprep.mubr.bf16.mxu0 0
        %3753 = vmatmul.mubr.bf16.gmra.mxu0 %v3553
        %v3754 = vpop.f32.mrf.mxu0
        %v3755 = vadd.f32 0.0, %v3754
        %v3756 = vpop.f32.mrf.mxu0
        %v3757 = vpop.f32.mrf.mxu0
        %v3758 = vadd.f32 0.0, %v3757
        %v3759 = vpop.f32.mrf.mxu0
        %3760 = vmatprep.mubr.bf16.mxu0 0
        %3761 = vmatmul.mubr.bf16.gmra.mxu0 %v3561
        %v3762 = vpop.f32.mrf.mxu0
        %v3763 = vadd.f32 0.0, %v3762
        %v3764 = vpop.f32.mrf.mxu0
        %v3765 = vpop.f32.mrf.mxu0
        %v3766 = vadd.f32 0.0, %v3765
        %v3767 = vpop.f32.mrf.mxu0
        %3768 = vmatprep.mubr.bf16.mxu0 0
        %3769 = vmatmul.mubr.bf16.gmra.mxu0 %v3569
        %v3770 = vpop.f32.mrf.mxu0
        %v3771 = vadd.f32 0.0, %v3770
        %v3772 = vpop.f32.mrf.mxu0
        %v3773 = vpop.f32.mrf.mxu0
        %v3774 = vadd.f32 0.0, %v3773
        %v3775 = vpop.f32.mrf.mxu0
        %3776 = vmatprep.mubr.bf16.mxu0 0
        %3777 = vmatmul.mubr.bf16.gmra.mxu0 %v3577
        %v3778 = vpop.f32.mrf.mxu0
        %v3779 = vadd.f32 0.0, %v3778
        %v3780 = vpop.f32.mrf.mxu0
        %v3781 = vpop.f32.mrf.mxu0
        %v3782 = vadd.f32 0.0, %v3781
        %v3783 = vpop.f32.mrf.mxu0
        %3784 = vmatprep.mubr.bf16.mxu0 0
        %3785 = vmatmul.mubr.bf16.gmra.mxu0 %v3585
        %v3786 = vpop.f32.mrf.mxu0
        %v3787 = vadd.f32 0.0, %v3786
        %v3788 = vpop.f32.mrf.mxu0
        %v3789 = vpop.f32.mrf.mxu0
        %v3790 = vadd.f32 0.0, %v3789
        %v3791 = vpop.f32.mrf.mxu0
        %3792 = vmatprep.mubr.bf16.mxu0 0
        %3793 = vmatmul.mubr.bf16.gmra.mxu0 %v3593
        %v3794 = vpop.f32.mrf.mxu0
        %v3795 = vadd.f32 0.0, %v3794
        %v3796 = vpop.f32.mrf.mxu0
        %v3797 = vpop.f32.mrf.mxu0
        %v3798 = vadd.f32 0.0, %v3797
        %v3799 = vpop.f32.mrf.mxu0
        %3800 = vmatprep.mubr.bf16.mxu0 0
        %3801 = vmatmul.mubr.bf16.gmra.mxu0 %v3601
        %v3802 = vpop.f32.mrf.mxu0
        %v3803 = vadd.f32 0.0, %v3802
        %v3804 = vpop.f32.mrf.mxu0
        %v3805 = vpop.f32.mrf.mxu0
        %v3806 = vadd.f32 0.0, %v3805
        %v3807 = vpop.f32.mrf.mxu0
        %3808 = vmatprep.mubr.bf16.mxu0 0
        %3809 = vmatmul.mubr.bf16.gmra.mxu0 %v3609
        %v3810 = vpop.f32.mrf.mxu0
        %v3811 = vadd.f32 0.0, %v3810
        %v3812 = vpop.f32.mrf.mxu0
        %v3813 = vpop.f32.mrf.mxu0
        %v3814 = vadd.f32 0.0, %v3813
        %v3815 = vpop.f32.mrf.mxu0
        %3816 = vmatprep.mubr.bf16.mxu0 0
        %3817 = vmatmul.mubr.bf16.gmra.mxu0 %v3617
        %v3818 = vpop.f32.mrf.mxu0
        %v3819 = vadd.f32 0.0, %v3818
        %v3820 = vpop.f32.mrf.mxu0
        %v3821 = vpop.f32.mrf.mxu0
        %v3822 = vadd.f32 0.0, %v3821
        %v3823 = vpop.f32.mrf.mxu0
        %3824 = vmatprep.mubr.bf16.mxu0 0
        %3825 = vmatmul.mubr.bf16.gmra.mxu0 %v3625
        %v3826 = vpop.f32.mrf.mxu0
        %v3827 = vadd.f32 0.0, %v3826
        %v3828 = vpop.f32.mrf.mxu0
        %v3829 = vpop.f32.mrf.mxu0
        %v3830 = vadd.f32 0.0, %v3829
        %v3831 = vpop.f32.mrf.mxu0
        %3832 = vmatprep.mubr.bf16.mxu0 0
        %3833 = vmatmul.mubr.bf16.gmra.mxu0 %v3633
        %v3834 = vpop.f32.mrf.mxu0
        %v3835 = vadd.f32 0.0, %v3834
        %v3836 = vpop.f32.mrf.mxu0
        %v3837 = vpop.f32.mrf.mxu0
        %v3838 = vadd.f32 0.0, %v3837
        %v3839 = vpop.f32.mrf.mxu0
        %3840 = vmatprep.mubr.bf16.mxu0 0
        %3841 = vmatmul.mubr.bf16.gmra.mxu0 %v3641
        %v3842 = vpop.f32.mrf.mxu0
        %v3843 = vadd.f32 0.0, %v3842
        %v3844 = vpop.f32.mrf.mxu0
        %v3845 = vpop.f32.mrf.mxu0
        %v3846 = vadd.f32 0.0, %v3845
        %v3847 = vpop.f32.mrf.mxu0
        %3848 = vmatprep.mubr.bf16.mxu0 0
        %3849 = vmatmul.mubr.bf16.gmra.mxu0 %v3649
        %v3850 = vpop.f32.mrf.mxu0
        %v3851 = vadd.f32 0.0, %v3850
        %v3852 = vpop.f32.mrf.mxu0
        %v3853 = vpop.f32.mrf.mxu0
        %v3854 = vadd.f32 0.0, %v3853
        %v3855 = vpop.f32.mrf.mxu0
        %3856 = vdwg.mxu0
        %v3857 = vld [vmem:[#allocation2] sm:$0xff]
        %v3858 = vld [vmem:[#allocation2 + $0x8] sm:$0xff]
        %v3859 = vld [vmem:[#allocation2 + $0x10] sm:$0xff]
        %v3860 = vld [vmem:[#allocation2 + $0x18] sm:$0xff]
        %v3861 = vld [vmem:[#allocation2 + $0x20] sm:$0xff]
        %v3862 = vld [vmem:[#allocation2 + $0x28] sm:$0xff]
        %v3863 = vld [vmem:[#allocation2 + $0x30] sm:$0xff]
        %v3864 = vld [vmem:[#allocation2 + $0x38] sm:$0xff]
        %v3865 = vld [vmem:[#allocation2 + $0x40] sm:$0xff]
        %v3866 = vld [vmem:[#allocation2 + $0x48] sm:$0xff]
        %v3867 = vld [vmem:[#allocation2 + $0x50] sm:$0xff]
        %v3868 = vld [vmem:[#allocation2 + $0x58] sm:$0xff]
        %v3869 = vld [vmem:[#allocation2 + $0x60] sm:$0xff]
        %v3870 = vld [vmem:[#allocation2 + $0x68] sm:$0xff]
        %v3871 = vld [vmem:[#allocation2 + $0x70] sm:$0xff]
        %v3872 = vld [vmem:[#allocation2 + $0x78] sm:$0xff]
        %v3873 = vld [vmem:[#allocation2 + $0x80] sm:$0xff]
        %v3874 = vld [vmem:[#allocation2 + $0x88] sm:$0xff]
        %v3875 = vld [vmem:[#allocation2 + $0x90] sm:$0xff]
        %v3876 = vld [vmem:[#allocation2 + $0x98] sm:$0xff]
        %v3877 = vld [vmem:[#allocation2 + $0xa0] sm:$0xff]
        %v3878 = vld [vmem:[#allocation2 + $0xa8] sm:$0xff]
        %v3879 = vld [vmem:[#allocation2 + $0xb0] sm:$0xff]
        %v3880 = vld [vmem:[#allocation2 + $0xb8] sm:$0xff]
        %v3881 = vld [vmem:[#allocation2 + $0xc0] sm:$0xff]
        %v3882 = vld [vmem:[#allocation2 + $0xc8] sm:$0xff]
        %v3883 = vld [vmem:[#allocation2 + $0xd0] sm:$0xff]
        %v3884 = vld [vmem:[#allocation2 + $0xd8] sm:$0xff]
        %v3885 = vadd.f32 %v3857, %v3747
        %v3886 = vadd.f32 %v3858, %v3750
        %v3887 = vadd.f32 %v3859, %v3755
        %v3888 = vadd.f32 %v3860, %v3758
        %v3889 = vadd.f32 %v3861, %v3763
        %v3890 = vadd.f32 %v3862, %v3766
        %v3891 = vadd.f32 %v3863, %v3771
        %v3892 = vadd.f32 %v3864, %v3774
        %v3893 = vadd.f32 %v3865, %v3779
        %v3894 = vadd.f32 %v3866, %v3782
        %v3895 = vadd.f32 %v3867, %v3787
        %v3896 = vadd.f32 %v3868, %v3790
        %v3897 = vadd.f32 %v3869, %v3795
        %v3898 = vadd.f32 %v3870, %v3798
        %v3899 = vadd.f32 %v3871, %v3803
        %v3900 = vadd.f32 %v3872, %v3806
        %v3901 = vadd.f32 %v3873, %v3811
        %v3902 = vadd.f32 %v3874, %v3814
        %v3903 = vadd.f32 %v3875, %v3819
        %v3904 = vadd.f32 %v3876, %v3822
        %v3905 = vadd.f32 %v3877, %v3827
        %v3906 = vadd.f32 %v3878, %v3830
        %v3907 = vadd.f32 %v3879, %v3835
        %v3908 = vadd.f32 %v3880, %v3838
        %v3909 = vadd.f32 %v3881, %v3843
        %v3910 = vadd.f32 %v3882, %v3846
        %v3911 = vadd.f32 %v3883, %v3851
        %v3912 = vadd.f32 %v3884, %v3854
        %3913 = vst [vmem:[#allocation2] sm:$0xff] %v3885
        %3914 = vst [vmem:[#allocation2 + $0x8] sm:$0xff] %v3886
        %3915 = vst [vmem:[#allocation2 + $0x10] sm:$0xff] %v3887
        %3916 = vst [vmem:[#allocation2 + $0x18] sm:$0xff] %v3888
        %3917 = vst [vmem:[#allocation2 + $0x20] sm:$0xff] %v3889
        %3918 = vst [vmem:[#allocation2 + $0x28] sm:$0xff] %v3890
        %3919 = vst [vmem:[#allocation2 + $0x30] sm:$0xff] %v3891
        %3920 = vst [vmem:[#allocation2 + $0x38] sm:$0xff] %v3892
        %3921 = vst [vmem:[#allocation2 + $0x40] sm:$0xff] %v3893
        %3922 = vst [vmem:[#allocation2 + $0x48] sm:$0xff] %v3894
        %3923 = vst [vmem:[#allocation2 + $0x50] sm:$0xff] %v3895
        %3924 = vst [vmem:[#allocation2 + $0x58] sm:$0xff] %v3896
        %3925 = vst [vmem:[#allocation2 + $0x60] sm:$0xff] %v3897
        %3926 = vst [vmem:[#allocation2 + $0x68] sm:$0xff] %v3898
        %3927 = vst [vmem:[#allocation2 + $0x70] sm:$0xff] %v3899
        %3928 = vst [vmem:[#allocation2 + $0x78] sm:$0xff] %v3900
        %3929 = vst [vmem:[#allocation2 + $0x80] sm:$0xff] %v3901
        %3930 = vst [vmem:[#allocation2 + $0x88] sm:$0xff] %v3902
        %3931 = vst [vmem:[#allocation2 + $0x90] sm:$0xff] %v3903
        %3932 = vst [vmem:[#allocation2 + $0x98] sm:$0xff] %v3904
        %3933 = vst [vmem:[#allocation2 + $0xa0] sm:$0xff] %v3905
        %3934 = vst [vmem:[#allocation2 + $0xa8] sm:$0xff] %v3906
        %3935 = vst [vmem:[#allocation2 + $0xb0] sm:$0xff] %v3907
        %3936 = vst [vmem:[#allocation2 + $0xb8] sm:$0xff] %v3908
        %3937 = vst [vmem:[#allocation2 + $0xc0] sm:$0xff] %v3909
        %3938 = vst [vmem:[#allocation2 + $0xc8] sm:$0xff] %v3910
        %3939 = vst [vmem:[#allocation2 + $0xd0] sm:$0xff] %v3911
        %3940 = vst [vmem:[#allocation2 + $0xd8] sm:$0xff] %v3912
        %v3941 = vld [vmem:[%s258 + $0x10] sm:$0xe]
        %v3942 = vld [vmem:[%s258 + $0x14] sm:$0xf]
        %v3943 = vld [vmem:[%s258 + $0x18] sm:$0xf]
        %v3944 = vld [vmem:[%s258 + $0x1c] sm:$0xf]
        %v3945 = vld [vmem:[%s258 + $0x20] sm:$0xf]
        %v3946 = vld [vmem:[%s258 + $0x24] sm:$0xf]
        %v3947 = vld [vmem:[%s258 + $0x28] sm:$0xf]
        %v3948 = vld [vmem:[%s258 + $0x2c] sm:$0xf]
        %v3949 = vld [vmem:[%s258 + $0x30] sm:$0xf]
        %v3950 = vld [vmem:[%s258 + $0x34] sm:$0xf]
        %v3951 = vld [vmem:[%s258 + $0x38] sm:$0xf]
        %v3952 = vld [vmem:[%s258 + $0x3c] sm:$0xf]
        %v3953 = vld [vmem:[%s258 + $0x40] sm:$0xf]
        %v3954 = vld [vmem:[%s258 + $0x44] sm:$0xf]
        %v3955 = vld [vmem:[%s258 + $0x48] sm:$0xf]
        %v3956 = vld [vmem:[%s258 + $0x4c] sm:$0xf]
        %v3957 = vld [vmem:[%s258 + $0x50] sm:$0xf]
        %v3958 = vld [vmem:[%s258 + $0x54] sm:$0xf]
        %v3959 = vld [vmem:[%s258 + $0x58] sm:$0xf]
        %v3960 = vld [vmem:[%s258 + $0x5c] sm:$0xf]
        %v3961 = vld [vmem:[%s258 + $0x60] sm:$0xf]
        %v3962 = vld [vmem:[%s258 + $0x64] sm:$0xf]
        %v3963 = vld [vmem:[%s258 + $0x68] sm:$0xf]
        %v3964 = vld [vmem:[%s258 + $0x6c] sm:$0xf]
        %v3965 = vld [vmem:[%s258 + $0x70] sm:$0xf]
        %v3966 = vld [vmem:[%s258 + $0x74] sm:$0xf]
        %v3967 = vld [vmem:[%s258 + $0x78] sm:$0xf]
        %v3968 = vld [vmem:[%s258 + $0x7c] sm:$0xf]
        %v3969 = vld [vmem:[%s258 + $0x80] sm:$0x1]
        %s3970 = scalar_lea.vmem %s267, 512 [#allocation6]
        %v3971 = vld [vmem:[%s3970] sm:$0xf]
        %v3972 = vld [vmem:[%s3970 + $0x4] sm:$0xf]
        %v3973 = vld [vmem:[%s3970 + $0x8] sm:$0xf]
        %v3974 = vld [vmem:[%s3970 + $0xc] sm:$0xf]
        %v3975 = vld [vmem:[%s3970 + $0x10] sm:$0xf]
        %v3976 = vld [vmem:[%s3970 + $0x14] sm:$0xf]
        %v3977 = vld [vmem:[%s3970 + $0x18] sm:$0xf]
        %v3978 = vld [vmem:[%s3970 + $0x1c] sm:$0xf]
        %v3979 = vld [vmem:[%s3970 + $0x20] sm:$0xf]
        %v3980 = vld [vmem:[%s3970 + $0x24] sm:$0xf]
        %v3981 = vld [vmem:[%s3970 + $0x28] sm:$0xf]
        %v3982 = vld [vmem:[%s3970 + $0x2c] sm:$0xf]
        %v3983 = vld [vmem:[%s3970 + $0x30] sm:$0xf]
        %v3984 = vld [vmem:[%s3970 + $0x34] sm:$0xf]
        %v3985 = vld [vmem:[%s3970 + $0x38] sm:$0xf]
        %v3986 = vld [vmem:[%s3970 + $0x3c] sm:$0xf]
        %v4016 = vunpack.c.l.b16 %v3941
        %v4017 = vunpack.c.l.b16 %v3942
        %v4018 = vunpack.c.l.b16 %v3943
        %v4019 = vunpack.c.l.b16 %v3944
        %v4020 = vunpack.c.l.b16 %v3945
        %v4021 = vunpack.c.l.b16 %v3946
        %v4022 = vunpack.c.l.b16 %v3947
        %v4023 = vunpack.c.l.b16 %v3948
        %v4024 = vunpack.c.l.b16 %v3949
        %v4025 = vunpack.c.l.b16 %v3950
        %v4026 = vunpack.c.l.b16 %v3951
        %v4027 = vunpack.c.l.b16 %v3952
        %v4028 = vunpack.c.l.b16 %v3953
        %v4029 = vunpack.c.l.b16 %v3954
        %v4030 = vunpack.c.l.b16 %v3955
        %v4031 = vunpack.c.l.b16 %v3956
        %v4032 = vunpack.c.l.b16 %v3957
        %v4033 = vunpack.c.l.b16 %v3958
        %v4034 = vunpack.c.l.b16 %v3959
        %v4035 = vunpack.c.l.b16 %v3960
        %v4036 = vunpack.c.l.b16 %v3961
        %v4037 = vunpack.c.l.b16 %v3962
        %v4038 = vunpack.c.l.b16 %v3963
        %v4039 = vunpack.c.l.b16 %v3964
        %v4040 = vunpack.c.l.b16 %v3965
        %v4041 = vunpack.c.l.b16 %v3966
        %v4042 = vunpack.c.l.b16 %v3967
        %v4043 = vunpack.c.l.b16 %v3968
        %v4044 = vunpack.c.l.b16 %v3969
        %v4045 = vpack.c.b16 %v4017, %v4016
        %v4046 = vpack.c.b16 %v4019, %v4018
        %v4047 = vpack.c.b16 %v4021, %v4020
        %v4048 = vpack.c.b16 %v4023, %v4022
        %v4049 = vpack.c.b16 %v4025, %v4024
        %v4050 = vpack.c.b16 %v4027, %v4026
        %v4051 = vpack.c.b16 %v4029, %v4028
        %v4052 = vpack.c.b16 %v4031, %v4030
        %v4053 = vpack.c.b16 %v4033, %v4032
        %v4054 = vpack.c.b16 %v4035, %v4034
        %v4055 = vpack.c.b16 %v4037, %v4036
        %v4056 = vpack.c.b16 %v4039, %v4038
        %v4057 = vpack.c.b16 %v4041, %v4040
        %v4058 = vpack.c.b16 %v4043, %v4042
        %v4059 = vpack.c.b16 %v4044, %v4044
        %v4060 = vrot.slane %v4045, 1
        %v4061 = vrot.slane %v4046, 1
        %v4062 = vsel %vm1317, %v4060, %v4061
        %v4063 = vrot.slane %v4047, 1
        %v4064 = vsel %vm1317, %v4061, %v4063
        %v4065 = vrot.slane %v4048, 1
        %v4066 = vsel %vm1317, %v4063, %v4065
        %v4067 = vrot.slane %v4049, 1
        %v4068 = vsel %vm1317, %v4065, %v4067
        %v4069 = vrot.slane %v4050, 1
        %v4070 = vsel %vm1317, %v4067, %v4069
        %v4071 = vrot.slane %v4051, 1
        %v4072 = vsel %vm1317, %v4069, %v4071
        %v4073 = vrot.slane %v4052, 1
        %v4074 = vsel %vm1317, %v4071, %v4073
        %v4075 = vrot.slane %v4053, 1
        %v4076 = vsel %vm1317, %v4073, %v4075
        %v4077 = vrot.slane %v4054, 1
        %v4078 = vsel %vm1317, %v4075, %v4077
        %v4079 = vrot.slane %v4055, 1
        %v4080 = vsel %vm1317, %v4077, %v4079
        %v4081 = vrot.slane %v4056, 1
        %v4082 = vsel %vm1317, %v4079, %v4081
        %v4083 = vrot.slane %v4057, 1
        %v4084 = vsel %vm1317, %v4081, %v4083
        %v4085 = vrot.slane %v4058, 1
        %v4086 = vsel %vm1317, %v4083, %v4085
        %v4087 = vrot.slane %v4059, 1
        %v4088 = vsel %vm1317, %v4085, %v4087
        %v4119 = vunpack.c.l.b16 %v3971
        %v4120 = vunpack.c.l.b16 %v3972
        %v4121 = vunpack.c.l.b16 %v3973
        %v4122 = vunpack.c.l.b16 %v3974
        %v4123 = vunpack.c.l.b16 %v3975
        %v4124 = vunpack.c.l.b16 %v3976
        %v4125 = vunpack.c.l.b16 %v3977
        %v4126 = vunpack.c.l.b16 %v3978
        %v4127 = vunpack.c.l.b16 %v3979
        %v4128 = vunpack.c.l.b16 %v3980
        %v4129 = vunpack.c.l.b16 %v3981
        %v4130 = vunpack.c.l.b16 %v3982
        %v4131 = vunpack.c.l.b16 %v3983
        %v4132 = vunpack.c.l.b16 %v3984
        %v4133 = vunpack.c.l.b16 %v3985
        %v4134 = vunpack.c.l.b16 %v3986
        %v4135 = vpack.c.b16 %v4120, %v4119
        %v4136 = vpack.c.b16 %v4122, %v4121
        %v4137 = vpack.c.b16 %v4124, %v4123
        %v4138 = vpack.c.b16 %v4126, %v4125
        %v4139 = vpack.c.b16 %v4128, %v4127
        %v4140 = vpack.c.b16 %v4130, %v4129
        %v4141 = vpack.c.b16 %v4132, %v4131
        %v4142 = vpack.c.b16 %v4134, %v4133
        %4151 = vmatprep.subr.bf16.mxu0 0
        %4152 = vmatpush1.bf16.msra.mxu0 %v4142
        %4153 = vmatprep.subr.bf16.mxu0 0
        %4154 = vmatpush1.bf16.msra.mxu0 %v4141
        %4155 = vmatprep.subr.bf16.mxu0 0
        %4156 = vmatpush1.bf16.msra.mxu0 %v4140
        %4157 = vmatprep.subr.bf16.mxu0 0
        %4158 = vmatpush1.bf16.msra.mxu0 %v4139
        %4159 = vmatprep.subr.bf16.mxu0 0
        %4160 = vmatpush1.bf16.msra.mxu0 %v4138
        %4161 = vmatprep.subr.bf16.mxu0 0
        %4162 = vmatpush1.bf16.msra.mxu0 %v4137
        %4163 = vmatprep.subr.bf16.mxu0 0
        %4164 = vmatpush1.bf16.msra.mxu0 %v4136
        %4165 = vmatprep.subr.bf16.mxu0 0
        %4166 = vmatpush1.bf16.msra.mxu0 %v4135
        %4167 = vmatprep.subr.bf16.mxu0 0
        %4168 = vmatpush2.bf16.msra.mxu0 0
        %4169 = vmatprep.subr.bf16.mxu0 0
        %4170 = vmatpush2.bf16.msra.mxu0 0
        %4171 = vmatprep.subr.bf16.mxu0 0
        %4172 = vmatpush2.bf16.msra.mxu0 0
        %4173 = vmatprep.subr.bf16.mxu0 0
        %4174 = vmatpush2.bf16.msra.mxu0 0
        %4175 = vmatprep.subr.bf16.mxu0 0
        %4176 = vmatpush2.bf16.msra.mxu0 0
        %4177 = vmatprep.subr.bf16.mxu0 0
        %4178 = vmatpush2.bf16.msra.mxu0 0
        %4179 = vmatprep.subr.bf16.mxu0 0
        %4180 = vmatpush2.bf16.msra.mxu0 0
        %4181 = vmatprep.subr.bf16.mxu0 0
        %4182 = vmatpush2.bf16.msra.mxu0 0
        %4183 = vmatprep.mubr.bf16.mxu0 0
        %4184 = vmatmul.mubr.bf16.gmra.mxu0 %v4062
        %v4185 = vpop.f32.mrf.mxu0
        %v4186 = vadd.f32 0.0, %v4185
        %v4187 = vpop.f32.mrf.mxu0
        %v4188 = vpop.f32.mrf.mxu0
        %v4189 = vadd.f32 0.0, %v4188
        %v4190 = vpop.f32.mrf.mxu0
        %4191 = vmatprep.mubr.bf16.mxu0 0
        %4192 = vmatmul.mubr.bf16.gmra.mxu0 %v4064
        %v4193 = vpop.f32.mrf.mxu0
        %v4194 = vadd.f32 0.0, %v4193
        %v4195 = vpop.f32.mrf.mxu0
        %v4196 = vpop.f32.mrf.mxu0
        %v4197 = vadd.f32 0.0, %v4196
        %v4198 = vpop.f32.mrf.mxu0
        %4199 = vmatprep.mubr.bf16.mxu0 0
        %4200 = vmatmul.mubr.bf16.gmra.mxu0 %v4066
        %v4201 = vpop.f32.mrf.mxu0
        %v4202 = vadd.f32 0.0, %v4201
        %v4203 = vpop.f32.mrf.mxu0
        %v4204 = vpop.f32.mrf.mxu0
        %v4205 = vadd.f32 0.0, %v4204
        %v4206 = vpop.f32.mrf.mxu0
        %4207 = vmatprep.mubr.bf16.mxu0 0
        %4208 = vmatmul.mubr.bf16.gmra.mxu0 %v4068
        %v4209 = vpop.f32.mrf.mxu0
        %v4210 = vadd.f32 0.0, %v4209
        %v4211 = vpop.f32.mrf.mxu0
        %v4212 = vpop.f32.mrf.mxu0
        %v4213 = vadd.f32 0.0, %v4212
        %v4214 = vpop.f32.mrf.mxu0
        %4215 = vmatprep.mubr.bf16.mxu0 0
        %4216 = vmatmul.mubr.bf16.gmra.mxu0 %v4070
        %v4217 = vpop.f32.mrf.mxu0
        %v4218 = vadd.f32 0.0, %v4217
        %v4219 = vpop.f32.mrf.mxu0
        %v4220 = vpop.f32.mrf.mxu0
        %v4221 = vadd.f32 0.0, %v4220
        %v4222 = vpop.f32.mrf.mxu0
        %4223 = vmatprep.mubr.bf16.mxu0 0
        %4224 = vmatmul.mubr.bf16.gmra.mxu0 %v4072
        %v4225 = vpop.f32.mrf.mxu0
        %v4226 = vadd.f32 0.0, %v4225
        %v4227 = vpop.f32.mrf.mxu0
        %v4228 = vpop.f32.mrf.mxu0
        %v4229 = vadd.f32 0.0, %v4228
        %v4230 = vpop.f32.mrf.mxu0
        %4231 = vmatprep.mubr.bf16.mxu0 0
        %4232 = vmatmul.mubr.bf16.gmra.mxu0 %v4074
        %v4233 = vpop.f32.mrf.mxu0
        %v4234 = vadd.f32 0.0, %v4233
        %v4235 = vpop.f32.mrf.mxu0
        %v4236 = vpop.f32.mrf.mxu0
        %v4237 = vadd.f32 0.0, %v4236
        %v4238 = vpop.f32.mrf.mxu0
        %4239 = vmatprep.mubr.bf16.mxu0 0
        %4240 = vmatmul.mubr.bf16.gmra.mxu0 %v4076
        %v4241 = vpop.f32.mrf.mxu0
        %v4242 = vadd.f32 0.0, %v4241
        %v4243 = vpop.f32.mrf.mxu0
        %v4244 = vpop.f32.mrf.mxu0
        %v4245 = vadd.f32 0.0, %v4244
        %v4246 = vpop.f32.mrf.mxu0
        %4247 = vmatprep.mubr.bf16.mxu0 0
        %4248 = vmatmul.mubr.bf16.gmra.mxu0 %v4078
        %v4249 = vpop.f32.mrf.mxu0
        %v4250 = vadd.f32 0.0, %v4249
        %v4251 = vpop.f32.mrf.mxu0
        %v4252 = vpop.f32.mrf.mxu0
        %v4253 = vadd.f32 0.0, %v4252
        %v4254 = vpop.f32.mrf.mxu0
        %4255 = vmatprep.mubr.bf16.mxu0 0
        %4256 = vmatmul.mubr.bf16.gmra.mxu0 %v4080
        %v4257 = vpop.f32.mrf.mxu0
        %v4258 = vadd.f32 0.0, %v4257
        %v4259 = vpop.f32.mrf.mxu0
        %v4260 = vpop.f32.mrf.mxu0
        %v4261 = vadd.f32 0.0, %v4260
        %v4262 = vpop.f32.mrf.mxu0
        %4263 = vmatprep.mubr.bf16.mxu0 0
        %4264 = vmatmul.mubr.bf16.gmra.mxu0 %v4082
        %v4265 = vpop.f32.mrf.mxu0
        %v4266 = vadd.f32 0.0, %v4265
        %v4267 = vpop.f32.mrf.mxu0
        %v4268 = vpop.f32.mrf.mxu0
        %v4269 = vadd.f32 0.0, %v4268
        %v4270 = vpop.f32.mrf.mxu0
        %4271 = vmatprep.mubr.bf16.mxu0 0
        %4272 = vmatmul.mubr.bf16.gmra.mxu0 %v4084
        %v4273 = vpop.f32.mrf.mxu0
        %v4274 = vadd.f32 0.0, %v4273
        %v4275 = vpop.f32.mrf.mxu0
        %v4276 = vpop.f32.mrf.mxu0
        %v4277 = vadd.f32 0.0, %v4276
        %v4278 = vpop.f32.mrf.mxu0
        %4279 = vmatprep.mubr.bf16.mxu0 0
        %4280 = vmatmul.mubr.bf16.gmra.mxu0 %v4086
        %v4281 = vpop.f32.mrf.mxu0
        %v4282 = vadd.f32 0.0, %v4281
        %v4283 = vpop.f32.mrf.mxu0
        %v4284 = vpop.f32.mrf.mxu0
        %v4285 = vadd.f32 0.0, %v4284
        %v4286 = vpop.f32.mrf.mxu0
        %4287 = vmatprep.mubr.bf16.mxu0 0
        %4288 = vmatmul.mubr.bf16.gmra.mxu0 %v4088
        %v4289 = vpop.f32.mrf.mxu0
        %v4290 = vadd.f32 0.0, %v4289
        %v4291 = vpop.f32.mrf.mxu0
        %v4292 = vpop.f32.mrf.mxu0
        %v4293 = vadd.f32 0.0, %v4292
        %v4294 = vpop.f32.mrf.mxu0
        %4295 = vdwg.mxu0
        %v4296 = vld [vmem:[#allocation2] sm:$0xff]
        %v4297 = vld [vmem:[#allocation2 + $0x8] sm:$0xff]
        %v4298 = vld [vmem:[#allocation2 + $0x10] sm:$0xff]
        %v4299 = vld [vmem:[#allocation2 + $0x18] sm:$0xff]
        %v4300 = vld [vmem:[#allocation2 + $0x20] sm:$0xff]
        %v4301 = vld [vmem:[#allocation2 + $0x28] sm:$0xff]
        %v4302 = vld [vmem:[#allocation2 + $0x30] sm:$0xff]
        %v4303 = vld [vmem:[#allocation2 + $0x38] sm:$0xff]
        %v4304 = vld [vmem:[#allocation2 + $0x40] sm:$0xff]
        %v4305 = vld [vmem:[#allocation2 + $0x48] sm:$0xff]
        %v4306 = vld [vmem:[#allocation2 + $0x50] sm:$0xff]
        %v4307 = vld [vmem:[#allocation2 + $0x58] sm:$0xff]
        %v4308 = vld [vmem:[#allocation2 + $0x60] sm:$0xff]
        %v4309 = vld [vmem:[#allocation2 + $0x68] sm:$0xff]
        %v4310 = vld [vmem:[#allocation2 + $0x70] sm:$0xff]
        %v4311 = vld [vmem:[#allocation2 + $0x78] sm:$0xff]
        %v4312 = vld [vmem:[#allocation2 + $0x80] sm:$0xff]
        %v4313 = vld [vmem:[#allocation2 + $0x88] sm:$0xff]
        %v4314 = vld [vmem:[#allocation2 + $0x90] sm:$0xff]
        %v4315 = vld [vmem:[#allocation2 + $0x98] sm:$0xff]
        %v4316 = vld [vmem:[#allocation2 + $0xa0] sm:$0xff]
        %v4317 = vld [vmem:[#allocation2 + $0xa8] sm:$0xff]
        %v4318 = vld [vmem:[#allocation2 + $0xb0] sm:$0xff]
        %v4319 = vld [vmem:[#allocation2 + $0xb8] sm:$0xff]
        %v4320 = vld [vmem:[#allocation2 + $0xc0] sm:$0xff]
        %v4321 = vld [vmem:[#allocation2 + $0xc8] sm:$0xff]
        %v4322 = vld [vmem:[#allocation2 + $0xd0] sm:$0xff]
        %v4323 = vld [vmem:[#allocation2 + $0xd8] sm:$0xff]
        %v4324 = vadd.f32 %v4296, %v4186
        %v4325 = vadd.f32 %v4297, %v4189
        %v4326 = vadd.f32 %v4298, %v4194
        %v4327 = vadd.f32 %v4299, %v4197
        %v4328 = vadd.f32 %v4300, %v4202
        %v4329 = vadd.f32 %v4301, %v4205
        %v4330 = vadd.f32 %v4302, %v4210
        %v4331 = vadd.f32 %v4303, %v4213
        %v4332 = vadd.f32 %v4304, %v4218
        %v4333 = vadd.f32 %v4305, %v4221
        %v4334 = vadd.f32 %v4306, %v4226
        %v4335 = vadd.f32 %v4307, %v4229
        %v4336 = vadd.f32 %v4308, %v4234
        %v4337 = vadd.f32 %v4309, %v4237
        %v4338 = vadd.f32 %v4310, %v4242
        %v4339 = vadd.f32 %v4311, %v4245
        %v4340 = vadd.f32 %v4312, %v4250
        %v4341 = vadd.f32 %v4313, %v4253
        %v4342 = vadd.f32 %v4314, %v4258
        %v4343 = vadd.f32 %v4315, %v4261
        %v4344 = vadd.f32 %v4316, %v4266
        %v4345 = vadd.f32 %v4317, %v4269
        %v4346 = vadd.f32 %v4318, %v4274
        %v4347 = vadd.f32 %v4319, %v4277
        %v4348 = vadd.f32 %v4320, %v4282
        %v4349 = vadd.f32 %v4321, %v4285
        %v4350 = vadd.f32 %v4322, %v4290
        %v4351 = vadd.f32 %v4323, %v4293
        %4352 = vst [vmem:[#allocation2] sm:$0xff] %v4324
        %4353 = vst [vmem:[#allocation2 + $0x8] sm:$0xff] %v4325
        %4354 = vst [vmem:[#allocation2 + $0x10] sm:$0xff] %v4326
        %4355 = vst [vmem:[#allocation2 + $0x18] sm:$0xff] %v4327
        %4356 = vst [vmem:[#allocation2 + $0x20] sm:$0xff] %v4328
        %4357 = vst [vmem:[#allocation2 + $0x28] sm:$0xff] %v4329
        %4358 = vst [vmem:[#allocation2 + $0x30] sm:$0xff] %v4330
        %4359 = vst [vmem:[#allocation2 + $0x38] sm:$0xff] %v4331
        %4360 = vst [vmem:[#allocation2 + $0x40] sm:$0xff] %v4332
        %4361 = vst [vmem:[#allocation2 + $0x48] sm:$0xff] %v4333
        %4362 = vst [vmem:[#allocation2 + $0x50] sm:$0xff] %v4334
        %4363 = vst [vmem:[#allocation2 + $0x58] sm:$0xff] %v4335
        %4364 = vst [vmem:[#allocation2 + $0x60] sm:$0xff] %v4336
        %4365 = vst [vmem:[#allocation2 + $0x68] sm:$0xff] %v4337
        %4366 = vst [vmem:[#allocation2 + $0x70] sm:$0xff] %v4338
        %4367 = vst [vmem:[#allocation2 + $0x78] sm:$0xff] %v4339
        %4368 = vst [vmem:[#allocation2 + $0x80] sm:$0xff] %v4340
        %4369 = vst [vmem:[#allocation2 + $0x88] sm:$0xff] %v4341
        %4370 = vst [vmem:[#allocation2 + $0x90] sm:$0xff] %v4342
        %4371 = vst [vmem:[#allocation2 + $0x98] sm:$0xff] %v4343
        %4372 = vst [vmem:[#allocation2 + $0xa0] sm:$0xff] %v4344
        %4373 = vst [vmem:[#allocation2 + $0xa8] sm:$0xff] %v4345
        %4374 = vst [vmem:[#allocation2 + $0xb0] sm:$0xff] %v4346
        %4375 = vst [vmem:[#allocation2 + $0xb8] sm:$0xff] %v4347
        %4376 = vst [vmem:[#allocation2 + $0xc0] sm:$0xff] %v4348
        %4377 = vst [vmem:[#allocation2 + $0xc8] sm:$0xff] %v4349
        %4378 = vst [vmem:[#allocation2 + $0xd0] sm:$0xff] %v4350
        %4379 = vst [vmem:[#allocation2 + $0xd8] sm:$0xff] %v4351
        %v4380 = vld [vmem:[#allocation2] sm:$0xff]
        %v4381 = vld [vmem:[#allocation2 + $0x8] sm:$0xff]
        %v4382 = vld [vmem:[#allocation2 + $0x10] sm:$0xff]
        %v4383 = vld [vmem:[#allocation2 + $0x18] sm:$0xff]
        %v4384 = vld [vmem:[#allocation2 + $0x20] sm:$0xff]
        %v4385 = vld [vmem:[#allocation2 + $0x28] sm:$0xff]
        %v4386 = vld [vmem:[#allocation2 + $0x30] sm:$0xff]
        %v4387 = vld [vmem:[#allocation2 + $0x38] sm:$0xff]
        %v4388 = vld [vmem:[#allocation2 + $0x40] sm:$0xff]
        %v4389 = vld [vmem:[#allocation2 + $0x48] sm:$0xff]
        %v4390 = vld [vmem:[#allocation2 + $0x50] sm:$0xff]
        %v4391 = vld [vmem:[#allocation2 + $0x58] sm:$0xff]
        %v4392 = vld [vmem:[#allocation2 + $0x60] sm:$0xff]
        %v4393 = vld [vmem:[#allocation2 + $0x68] sm:$0xff]
        %v4394 = vld [vmem:[#allocation2 + $0x70] sm:$0xff]
        %v4395 = vld [vmem:[#allocation2 + $0x78] sm:$0xff]
        %v4396 = vld [vmem:[#allocation2 + $0x80] sm:$0xff]
        %v4397 = vld [vmem:[#allocation2 + $0x88] sm:$0xff]
        %v4398 = vld [vmem:[#allocation2 + $0x90] sm:$0xff]
        %v4399 = vld [vmem:[#allocation2 + $0x98] sm:$0xff]
        %v4400 = vld [vmem:[#allocation2 + $0xa0] sm:$0xff]
        %v4401 = vld [vmem:[#allocation2 + $0xa8] sm:$0xff]
        %v4402 = vld [vmem:[#allocation2 + $0xb0] sm:$0xff]
        %v4403 = vld [vmem:[#allocation2 + $0xb8] sm:$0xff]
        %v4404 = vld [vmem:[#allocation2 + $0xc0] sm:$0xff]
        %v4405 = vld [vmem:[#allocation2 + $0xc8] sm:$0xff]
        %v4406 = vld [vmem:[#allocation2 + $0xd0] sm:$0xff]
        %v4407 = vld [vmem:[#allocation2 + $0xd8] sm:$0xff]
        %v4408 = vlaneseq
        %v4409 = vshrl.u32 %v4408, 7
        %v4410 = vadd.s32 %v4409, 8
        %v4411 = vadd.s32 %v4409, 16
        %v4412 = vadd.s32 %v4409, 24
        %v4413 = vadd.s32 %v4409, 32
        %v4414 = vadd.s32 %v4409, 40
        %v4415 = vadd.s32 %v4409, 48
        %v4416 = vadd.s32 %v4409, 56
        %v4417 = vadd.s32 %v4409, 64
        %v4418 = vadd.s32 %v4409, 72
        %v4419 = vadd.s32 %v4409, 80
        %v4420 = vadd.s32 %v4409, 88
        %v4421 = vadd.s32 %v4409, 96
        %v4422 = vadd.s32 %v4409, 104
        %v4423 = vadd.s32 %v4409, 112
        %v4424 = vadd.s32 %v4409, 120
        %v4425 = vadd.s32 %v4409, 128
        %v4426 = vadd.s32 %v4409, 136
        %v4427 = vadd.s32 %v4409, 144
        %v4428 = vadd.s32 %v4409, 152
        %v4429 = vadd.s32 %v4409, 160
        %v4430 = vadd.s32 %v4409, 168
        %v4431 = vadd.s32 %v4409, 176
        %v4432 = vadd.s32 %v4409, 184
        %v4433 = vadd.s32 %v4409, 192
        %v4434 = vadd.s32 %v4409, 200
        %v4435 = vadd.s32 %v4409, 208
        %v4436 = vadd.s32 %v4409, 216
        %vm4437 = vcmp.lt.s32.totalorder %v4409, 0
        %v4438 = vsub.s32 0, %v4409
        %v4439 = vsel %vm4437, %v4438, %v4409
        %v4440 = vshrl.u32 %v4439, 4
        %v4441 = vand.u32 %v4439, 15
        %v4442 = vsub.s32 0, %v4441
        %v4443 = vsel %vm4437, %v4442, %v4441
        %vm4444 = vcmp.lt.s32.totalorder %v4410, 0
        %v4445 = vsub.s32 0, %v4410
        %v4446 = vsel %vm4444, %v4445, %v4410
        %v4447 = vshrl.u32 %v4446, 4
        %v4448 = vand.u32 %v4446, 15
        %v4449 = vsub.s32 0, %v4448
        %v4450 = vsel %vm4444, %v4449, %v4448
        %vm4451 = vcmp.lt.s32.totalorder %v4411, 0
        %v4452 = vsub.s32 0, %v4411
        %v4453 = vsel %vm4451, %v4452, %v4411
        %v4454 = vshrl.u32 %v4453, 4
        %v4455 = vand.u32 %v4453, 15
        %v4456 = vsub.s32 0, %v4455
        %v4457 = vsel %vm4451, %v4456, %v4455
        %vm4458 = vcmp.lt.s32.totalorder %v4412, 0
        %v4459 = vsub.s32 0, %v4412
        %v4460 = vsel %vm4458, %v4459, %v4412
        %v4461 = vshrl.u32 %v4460, 4
        %v4462 = vand.u32 %v4460, 15
        %v4463 = vsub.s32 0, %v4462
        %v4464 = vsel %vm4458, %v4463, %v4462
        %vm4465 = vcmp.lt.s32.totalorder %v4413, 0
        %v4466 = vsub.s32 0, %v4413
        %v4467 = vsel %vm4465, %v4466, %v4413
        %v4468 = vshrl.u32 %v4467, 4
        %v4469 = vand.u32 %v4467, 15
        %v4470 = vsub.s32 0, %v4469
        %v4471 = vsel %vm4465, %v4470, %v4469
        %vm4472 = vcmp.lt.s32.totalorder %v4414, 0
        %v4473 = vsub.s32 0, %v4414
        %v4474 = vsel %vm4472, %v4473, %v4414
        %v4475 = vshrl.u32 %v4474, 4
        %v4476 = vand.u32 %v4474, 15
        %v4477 = vsub.s32 0, %v4476
        %v4478 = vsel %vm4472, %v4477, %v4476
        %vm4479 = vcmp.lt.s32.totalorder %v4415, 0
        %v4480 = vsub.s32 0, %v4415
        %v4481 = vsel %vm4479, %v4480, %v4415
        %v4482 = vshrl.u32 %v4481, 4
        %v4483 = vand.u32 %v4481, 15
        %v4484 = vsub.s32 0, %v4483
        %v4485 = vsel %vm4479, %v4484, %v4483
        %vm4486 = vcmp.lt.s32.totalorder %v4416, 0
        %v4487 = vsub.s32 0, %v4416
        %v4488 = vsel %vm4486, %v4487, %v4416
        %v4489 = vshrl.u32 %v4488, 4
        %v4490 = vand.u32 %v4488, 15
        %v4491 = vsub.s32 0, %v4490
        %v4492 = vsel %vm4486, %v4491, %v4490
        %vm4493 = vcmp.lt.s32.totalorder %v4417, 0
        %v4494 = vsub.s32 0, %v4417
        %v4495 = vsel %vm4493, %v4494, %v4417
        %v4496 = vshrl.u32 %v4495, 4
        %v4497 = vand.u32 %v4495, 15
        %v4498 = vsub.s32 0, %v4497
        %v4499 = vsel %vm4493, %v4498, %v4497
        %vm4500 = vcmp.lt.s32.totalorder %v4418, 0
        %v4501 = vsub.s32 0, %v4418
        %v4502 = vsel %vm4500, %v4501, %v4418
        %v4503 = vshrl.u32 %v4502, 4
        %v4504 = vand.u32 %v4502, 15
        %v4505 = vsub.s32 0, %v4504
        %v4506 = vsel %vm4500, %v4505, %v4504
        %vm4507 = vcmp.lt.s32.totalorder %v4419, 0
        %v4508 = vsub.s32 0, %v4419
        %v4509 = vsel %vm4507, %v4508, %v4419
        %v4510 = vshrl.u32 %v4509, 4
        %v4511 = vand.u32 %v4509, 15
        %v4512 = vsub.s32 0, %v4511
        %v4513 = vsel %vm4507, %v4512, %v4511
        %vm4514 = vcmp.lt.s32.totalorder %v4420, 0
        %v4515 = vsub.s32 0, %v4420
        %v4516 = vsel %vm4514, %v4515, %v4420
        %v4517 = vshrl.u32 %v4516, 4
        %v4518 = vand.u32 %v4516, 15
        %v4519 = vsub.s32 0, %v4518
        %v4520 = vsel %vm4514, %v4519, %v4518
        %vm4521 = vcmp.lt.s32.totalorder %v4421, 0
        %v4522 = vsub.s32 0, %v4421
        %v4523 = vsel %vm4521, %v4522, %v4421
        %v4524 = vshrl.u32 %v4523, 4
        %v4525 = vand.u32 %v4523, 15
        %v4526 = vsub.s32 0, %v4525
        %v4527 = vsel %vm4521, %v4526, %v4525
        %vm4528 = vcmp.lt.s32.totalorder %v4422, 0
        %v4529 = vsub.s32 0, %v4422
        %v4530 = vsel %vm4528, %v4529, %v4422
        %v4531 = vshrl.u32 %v4530, 4
        %v4532 = vand.u32 %v4530, 15
        %v4533 = vsub.s32 0, %v4532
        %v4534 = vsel %vm4528, %v4533, %v4532
        %vm4535 = vcmp.lt.s32.totalorder %v4423, 0
        %v4536 = vsub.s32 0, %v4423
        %v4537 = vsel %vm4535, %v4536, %v4423
        %v4538 = vshrl.u32 %v4537, 4
        %v4539 = vand.u32 %v4537, 15
        %v4540 = vsub.s32 0, %v4539
        %v4541 = vsel %vm4535, %v4540, %v4539
        %vm4542 = vcmp.lt.s32.totalorder %v4424, 0
        %v4543 = vsub.s32 0, %v4424
        %v4544 = vsel %vm4542, %v4543, %v4424
        %v4545 = vshrl.u32 %v4544, 4
        %v4546 = vand.u32 %v4544, 15
        %v4547 = vsub.s32 0, %v4546
        %v4548 = vsel %vm4542, %v4547, %v4546
        %vm4549 = vcmp.lt.s32.totalorder %v4425, 0
        %v4550 = vsub.s32 0, %v4425
        %v4551 = vsel %vm4549, %v4550, %v4425
        %v4552 = vshrl.u32 %v4551, 4
        %v4553 = vand.u32 %v4551, 15
        %v4554 = vsub.s32 0, %v4553
        %v4555 = vsel %vm4549, %v4554, %v4553
        %vm4556 = vcmp.lt.s32.totalorder %v4426, 0
        %v4557 = vsub.s32 0, %v4426
        %v4558 = vsel %vm4556, %v4557, %v4426
        %v4559 = vshrl.u32 %v4558, 4
        %v4560 = vand.u32 %v4558, 15
        %v4561 = vsub.s32 0, %v4560
        %v4562 = vsel %vm4556, %v4561, %v4560
        %vm4563 = vcmp.lt.s32.totalorder %v4427, 0
        %v4564 = vsub.s32 0, %v4427
        %v4565 = vsel %vm4563, %v4564, %v4427
        %v4566 = vshrl.u32 %v4565, 4
        %v4567 = vand.u32 %v4565, 15
        %v4568 = vsub.s32 0, %v4567
        %v4569 = vsel %vm4563, %v4568, %v4567
        %vm4570 = vcmp.lt.s32.totalorder %v4428, 0
        %v4571 = vsub.s32 0, %v4428
        %v4572 = vsel %vm4570, %v4571, %v4428
        %v4573 = vshrl.u32 %v4572, 4
        %v4574 = vand.u32 %v4572, 15
        %v4575 = vsub.s32 0, %v4574
        %v4576 = vsel %vm4570, %v4575, %v4574
        %vm4577 = vcmp.lt.s32.totalorder %v4429, 0
        %v4578 = vsub.s32 0, %v4429
        %v4579 = vsel %vm4577, %v4578, %v4429
        %v4580 = vshrl.u32 %v4579, 4
        %v4581 = vand.u32 %v4579, 15
        %v4582 = vsub.s32 0, %v4581
        %v4583 = vsel %vm4577, %v4582, %v4581
        %vm4584 = vcmp.lt.s32.totalorder %v4430, 0
        %v4585 = vsub.s32 0, %v4430
        %v4586 = vsel %vm4584, %v4585, %v4430
        %v4587 = vshrl.u32 %v4586, 4
        %v4588 = vand.u32 %v4586, 15
        %v4589 = vsub.s32 0, %v4588
        %v4590 = vsel %vm4584, %v4589, %v4588
        %vm4591 = vcmp.lt.s32.totalorder %v4431, 0
        %v4592 = vsub.s32 0, %v4431
        %v4593 = vsel %vm4591, %v4592, %v4431
        %v4594 = vshrl.u32 %v4593, 4
        %v4595 = vand.u32 %v4593, 15
        %v4596 = vsub.s32 0, %v4595
        %v4597 = vsel %vm4591, %v4596, %v4595
        %vm4598 = vcmp.lt.s32.totalorder %v4432, 0
        %v4599 = vsub.s32 0, %v4432
        %v4600 = vsel %vm4598, %v4599, %v4432
        %v4601 = vshrl.u32 %v4600, 4
        %v4602 = vand.u32 %v4600, 15
        %v4603 = vsub.s32 0, %v4602
        %v4604 = vsel %vm4598, %v4603, %v4602
        %vm4605 = vcmp.lt.s32.totalorder %v4433, 0
        %v4606 = vsub.s32 0, %v4433
        %v4607 = vsel %vm4605, %v4606, %v4433
        %v4608 = vshrl.u32 %v4607, 4
        %v4609 = vand.u32 %v4607, 15
        %v4610 = vsub.s32 0, %v4609
        %v4611 = vsel %vm4605, %v4610, %v4609
        %vm4612 = vcmp.lt.s32.totalorder %v4434, 0
        %v4613 = vsub.s32 0, %v4434
        %v4614 = vsel %vm4612, %v4613, %v4434
        %v4615 = vshrl.u32 %v4614, 4
        %v4616 = vand.u32 %v4614, 15
        %v4617 = vsub.s32 0, %v4616
        %v4618 = vsel %vm4612, %v4617, %v4616
        %vm4619 = vcmp.lt.s32.totalorder %v4435, 0
        %v4620 = vsub.s32 0, %v4435
        %v4621 = vsel %vm4619, %v4620, %v4435
        %v4622 = vshrl.u32 %v4621, 4
        %v4623 = vand.u32 %v4621, 15
        %v4624 = vsub.s32 0, %v4623
        %v4625 = vsel %vm4619, %v4624, %v4623
        %vm4626 = vcmp.lt.s32.totalorder %v4436, 0
        %v4627 = vsub.s32 0, %v4436
        %v4628 = vsel %vm4626, %v4627, %v4436
        %v4629 = vshrl.u32 %v4628, 4
        %v4630 = vand.u32 %v4628, 15
        %v4631 = vsub.s32 0, %v4630
        %v4632 = vsel %vm4626, %v4631, %v4630
        %vm4633 = vcmp.ne.s32.totalorder %v4443, 0
        %vm4634 = vcmp.ne.s32.totalorder %v4450, 0
        %vm4635 = vcmp.ne.s32.totalorder %v4457, 0
        %vm4636 = vcmp.ne.s32.totalorder %v4464, 0
        %vm4637 = vcmp.ne.s32.totalorder %v4471, 0
        %vm4638 = vcmp.ne.s32.totalorder %v4478, 0
        %vm4639 = vcmp.ne.s32.totalorder %v4485, 0
        %vm4640 = vcmp.ne.s32.totalorder %v4492, 0
        %vm4641 = vcmp.ne.s32.totalorder %v4499, 0
        %vm4642 = vcmp.ne.s32.totalorder %v4506, 0
        %vm4643 = vcmp.ne.s32.totalorder %v4513, 0
        %vm4644 = vcmp.ne.s32.totalorder %v4520, 0
        %vm4645 = vcmp.ne.s32.totalorder %v4527, 0
        %vm4646 = vcmp.ne.s32.totalorder %v4534, 0
        %vm4647 = vcmp.ne.s32.totalorder %v4541, 0
        %vm4648 = vcmp.ne.s32.totalorder %v4548, 0
        %vm4649 = vcmp.ne.s32.totalorder %v4555, 0
        %vm4650 = vcmp.ne.s32.totalorder %v4562, 0
        %vm4651 = vcmp.ne.s32.totalorder %v4569, 0
        %vm4652 = vcmp.ne.s32.totalorder %v4576, 0
        %vm4653 = vcmp.ne.s32.totalorder %v4583, 0
        %vm4654 = vcmp.ne.s32.totalorder %v4590, 0
        %vm4655 = vcmp.ne.s32.totalorder %v4597, 0
        %vm4656 = vcmp.ne.s32.totalorder %v4604, 0
        %vm4657 = vcmp.ne.s32.totalorder %v4611, 0
        %vm4658 = vcmp.ne.s32.totalorder %v4618, 0
        %vm4659 = vcmp.ne.s32.totalorder %v4625, 0
        %vm4660 = vcmp.ne.s32.totalorder %v4632, 0
        %vm4661 = vcmp.lt.s32.totalorder %v4443, 0
        %vm4662 = vcmp.lt.s32.totalorder %v4450, 0
        %vm4663 = vcmp.lt.s32.totalorder %v4457, 0
        %vm4664 = vcmp.lt.s32.totalorder %v4464, 0
        %vm4665 = vcmp.lt.s32.totalorder %v4471, 0
        %vm4666 = vcmp.lt.s32.totalorder %v4478, 0
        %vm4667 = vcmp.lt.s32.totalorder %v4485, 0
        %vm4668 = vcmp.lt.s32.totalorder %v4492, 0
        %vm4669 = vcmp.lt.s32.totalorder %v4499, 0
        %vm4670 = vcmp.lt.s32.totalorder %v4506, 0
        %vm4671 = vcmp.lt.s32.totalorder %v4513, 0
        %vm4672 = vcmp.lt.s32.totalorder %v4520, 0
        %vm4673 = vcmp.lt.s32.totalorder %v4527, 0
        %vm4674 = vcmp.lt.s32.totalorder %v4534, 0
        %vm4675 = vcmp.lt.s32.totalorder %v4541, 0
        %vm4676 = vcmp.lt.s32.totalorder %v4548, 0
        %vm4677 = vcmp.lt.s32.totalorder %v4555, 0
        %vm4678 = vcmp.lt.s32.totalorder %v4562, 0
        %vm4679 = vcmp.lt.s32.totalorder %v4569, 0
        %vm4680 = vcmp.lt.s32.totalorder %v4576, 0
        %vm4681 = vcmp.lt.s32.totalorder %v4583, 0
        %vm4682 = vcmp.lt.s32.totalorder %v4590, 0
        %vm4683 = vcmp.lt.s32.totalorder %v4597, 0
        %vm4684 = vcmp.lt.s32.totalorder %v4604, 0
        %vm4685 = vcmp.lt.s32.totalorder %v4611, 0
        %vm4686 = vcmp.lt.s32.totalorder %v4618, 0
        %vm4687 = vcmp.lt.s32.totalorder %v4625, 0
        %vm4688 = vcmp.lt.s32.totalorder %v4632, 0
        %vm4689 = vmand %vm4661, %vm4633
        %vm4690 = vmand %vm4662, %vm4634
        %vm4691 = vmand %vm4663, %vm4635
        %vm4692 = vmand %vm4664, %vm4636
        %vm4693 = vmand %vm4665, %vm4637
        %vm4694 = vmand %vm4666, %vm4638
        %vm4695 = vmand %vm4667, %vm4639
        %vm4696 = vmand %vm4668, %vm4640
        %vm4697 = vmand %vm4669, %vm4641
        %vm4698 = vmand %vm4670, %vm4642
        %vm4699 = vmand %vm4671, %vm4643
        %vm4700 = vmand %vm4672, %vm4644
        %vm4701 = vmand %vm4673, %vm4645
        %vm4702 = vmand %vm4674, %vm4646
        %vm4703 = vmand %vm4675, %vm4647
        %vm4704 = vmand %vm4676, %vm4648
        %vm4705 = vmand %vm4677, %vm4649
        %vm4706 = vmand %vm4678, %vm4650
        %vm4707 = vmand %vm4679, %vm4651
        %vm4708 = vmand %vm4680, %vm4652
        %vm4709 = vmand %vm4681, %vm4653
        %vm4710 = vmand %vm4682, %vm4654
        %vm4711 = vmand %vm4683, %vm4655
        %vm4712 = vmand %vm4684, %vm4656
        %vm4713 = vmand %vm4685, %vm4657
        %vm4714 = vmand %vm4686, %vm4658
        %vm4715 = vmand %vm4687, %vm4659
        %vm4716 = vmand %vm4688, %vm4660
        %v4717 = vadd.s32 %v4443, 16
        %v4718 = vadd.s32 %v4450, 16
        %v4719 = vadd.s32 %v4457, 16
        %v4720 = vadd.s32 %v4464, 16
        %v4721 = vadd.s32 %v4471, 16
        %v4722 = vadd.s32 %v4478, 16
        %v4723 = vadd.s32 %v4485, 16
        %v4724 = vadd.s32 %v4492, 16
        %v4725 = vadd.s32 %v4499, 16
        %v4726 = vadd.s32 %v4506, 16
        %v4727 = vadd.s32 %v4513, 16
        %v4728 = vadd.s32 %v4520, 16
        %v4729 = vadd.s32 %v4527, 16
        %v4730 = vadd.s32 %v4534, 16
        %v4731 = vadd.s32 %v4541, 16
        %v4732 = vadd.s32 %v4548, 16
        %v4733 = vadd.s32 %v4555, 16
        %v4734 = vadd.s32 %v4562, 16
        %v4735 = vadd.s32 %v4569, 16
        %v4736 = vadd.s32 %v4576, 16
        %v4737 = vadd.s32 %v4583, 16
        %v4738 = vadd.s32 %v4590, 16
        %v4739 = vadd.s32 %v4597, 16
        %v4740 = vadd.s32 %v4604, 16
        %v4741 = vadd.s32 %v4611, 16
        %v4742 = vadd.s32 %v4618, 16
        %v4743 = vadd.s32 %v4625, 16
        %v4744 = vadd.s32 %v4632, 16
        %v4745 = vsel %vm4689, %v4717, %v4443
        %v4746 = vsel %vm4690, %v4718, %v4450
        %v4747 = vsel %vm4691, %v4719, %v4457
        %v4748 = vsel %vm4692, %v4720, %v4464
        %v4749 = vsel %vm4693, %v4721, %v4471
        %v4750 = vsel %vm4694, %v4722, %v4478
        %v4751 = vsel %vm4695, %v4723, %v4485
        %v4752 = vsel %vm4696, %v4724, %v4492
        %v4753 = vsel %vm4697, %v4725, %v4499
        %v4754 = vsel %vm4698, %v4726, %v4506
        %v4755 = vsel %vm4699, %v4727, %v4513
        %v4756 = vsel %vm4700, %v4728, %v4520
        %v4757 = vsel %vm4701, %v4729, %v4527
        %v4758 = vsel %vm4702, %v4730, %v4534
        %v4759 = vsel %vm4703, %v4731, %v4541
        %v4760 = vsel %vm4704, %v4732, %v4548
        %v4761 = vsel %vm4705, %v4733, %v4555
        %v4762 = vsel %vm4706, %v4734, %v4562
        %v4763 = vsel %vm4707, %v4735, %v4569
        %v4764 = vsel %vm4708, %v4736, %v4576
        %v4765 = vsel %vm4709, %v4737, %v4583
        %v4766 = vsel %vm4710, %v4738, %v4590
        %v4767 = vsel %vm4711, %v4739, %v4597
        %v4768 = vsel %vm4712, %v4740, %v4604
        %v4769 = vsel %vm4713, %v4741, %v4611
        %v4770 = vsel %vm4714, %v4742, %v4618
        %v4771 = vsel %vm4715, %v4743, %v4625
        %v4772 = vsel %vm4716, %v4744, %v4632
        %vm4773 = vcmp.lt.s32.totalorder %v4745, 14
        %vm4774 = vcmp.lt.s32.totalorder %v4746, 14
        %vm4775 = vcmp.lt.s32.totalorder %v4747, 14
        %vm4776 = vcmp.lt.s32.totalorder %v4748, 14
        %vm4777 = vcmp.lt.s32.totalorder %v4749, 14
        %vm4778 = vcmp.lt.s32.totalorder %v4750, 14
        %vm4779 = vcmp.lt.s32.totalorder %v4751, 14
        %vm4780 = vcmp.lt.s32.totalorder %v4752, 14
        %vm4781 = vcmp.lt.s32.totalorder %v4753, 14
        %vm4782 = vcmp.lt.s32.totalorder %v4754, 14
        %vm4783 = vcmp.lt.s32.totalorder %v4755, 14
        %vm4784 = vcmp.lt.s32.totalorder %v4756, 14
        %vm4785 = vcmp.lt.s32.totalorder %v4757, 14
        %vm4786 = vcmp.lt.s32.totalorder %v4758, 14
        %vm4787 = vcmp.lt.s32.totalorder %v4759, 14
        %vm4788 = vcmp.lt.s32.totalorder %v4760, 14
        %vm4789 = vcmp.lt.s32.totalorder %v4761, 14
        %vm4790 = vcmp.lt.s32.totalorder %v4762, 14
        %vm4791 = vcmp.lt.s32.totalorder %v4763, 14
        %vm4792 = vcmp.lt.s32.totalorder %v4764, 14
        %vm4793 = vcmp.lt.s32.totalorder %v4765, 14
        %vm4794 = vcmp.lt.s32.totalorder %v4766, 14
        %vm4795 = vcmp.lt.s32.totalorder %v4767, 14
        %vm4796 = vcmp.lt.s32.totalorder %v4768, 14
        %vm4797 = vcmp.lt.s32.totalorder %v4769, 14
        %vm4798 = vcmp.lt.s32.totalorder %v4770, 14
        %vm4799 = vcmp.lt.s32.totalorder %v4771, 14
        %vm4800 = vcmp.lt.s32.totalorder %v4772, 14
        %v4801 = vsel %vm4773, 1, 0
        %v4802 = vsel %vm4774, 1, 0
        %v4803 = vsel %vm4775, 1, 0
        %v4804 = vsel %vm4776, 1, 0
        %v4805 = vsel %vm4777, 1, 0
        %v4806 = vsel %vm4778, 1, 0
        %v4807 = vsel %vm4779, 1, 0
        %v4808 = vsel %vm4780, 1, 0
        %v4809 = vsel %vm4781, 1, 0
        %v4810 = vsel %vm4782, 1, 0
        %v4811 = vsel %vm4783, 1, 0
        %v4812 = vsel %vm4784, 1, 0
        %v4813 = vsel %vm4785, 1, 0
        %v4814 = vsel %vm4786, 1, 0
        %v4815 = vsel %vm4787, 1, 0
        %v4816 = vsel %vm4788, 1, 0
        %v4817 = vsel %vm4789, 1, 0
        %v4818 = vsel %vm4790, 1, 0
        %v4819 = vsel %vm4791, 1, 0
        %v4820 = vsel %vm4792, 1, 0
        %v4821 = vsel %vm4793, 1, 0
        %v4822 = vsel %vm4794, 1, 0
        %v4823 = vsel %vm4795, 1, 0
        %v4824 = vsel %vm4796, 1, 0
        %v4825 = vsel %vm4797, 1, 0
        %v4826 = vsel %vm4798, 1, 0
        %v4827 = vsel %vm4799, 1, 0
        %v4828 = vsel %vm4800, 1, 0
        %vm4829 = vcmp.eq.s32.totalorder %v4801, 1
        %vm4830 = vcmp.eq.s32.totalorder %v4802, 1
        %vm4831 = vcmp.eq.s32.totalorder %v4803, 1
        %vm4832 = vcmp.eq.s32.totalorder %v4804, 1
        %vm4833 = vcmp.eq.s32.totalorder %v4805, 1
        %vm4834 = vcmp.eq.s32.totalorder %v4806, 1
        %vm4835 = vcmp.eq.s32.totalorder %v4807, 1
        %vm4836 = vcmp.eq.s32.totalorder %v4808, 1
        %vm4837 = vcmp.eq.s32.totalorder %v4809, 1
        %vm4838 = vcmp.eq.s32.totalorder %v4810, 1
        %vm4839 = vcmp.eq.s32.totalorder %v4811, 1
        %vm4840 = vcmp.eq.s32.totalorder %v4812, 1
        %vm4841 = vcmp.eq.s32.totalorder %v4813, 1
        %vm4842 = vcmp.eq.s32.totalorder %v4814, 1
        %vm4843 = vcmp.eq.s32.totalorder %v4815, 1
        %vm4844 = vcmp.eq.s32.totalorder %v4816, 1
        %vm4845 = vcmp.eq.s32.totalorder %v4817, 1
        %vm4846 = vcmp.eq.s32.totalorder %v4818, 1
        %vm4847 = vcmp.eq.s32.totalorder %v4819, 1
        %vm4848 = vcmp.eq.s32.totalorder %v4820, 1
        %vm4849 = vcmp.eq.s32.totalorder %v4821, 1
        %vm4850 = vcmp.eq.s32.totalorder %v4822, 1
        %vm4851 = vcmp.eq.s32.totalorder %v4823, 1
        %vm4852 = vcmp.eq.s32.totalorder %v4824, 1
        %vm4853 = vcmp.eq.s32.totalorder %v4825, 1
        %vm4854 = vcmp.eq.s32.totalorder %v4826, 1
        %vm4855 = vcmp.eq.s32.totalorder %v4827, 1
        %vm4856 = vcmp.eq.s32.totalorder %v4828, 1
        %v4857 = vsel %vm4829, %v4380, 0.0
        %v4858 = vsel %vm4830, %v4381, 0.0
        %v4859 = vsel %vm4831, %v4382, 0.0
        %v4860 = vsel %vm4832, %v4383, 0.0
        %v4861 = vsel %vm4833, %v4384, 0.0
        %v4862 = vsel %vm4834, %v4385, 0.0
        %v4863 = vsel %vm4835, %v4386, 0.0
        %v4864 = vsel %vm4836, %v4387, 0.0
        %v4865 = vsel %vm4837, %v4388, 0.0
        %v4866 = vsel %vm4838, %v4389, 0.0
        %v4867 = vsel %vm4839, %v4390, 0.0
        %v4868 = vsel %vm4840, %v4391, 0.0
        %v4869 = vsel %vm4841, %v4392, 0.0
        %v4870 = vsel %vm4842, %v4393, 0.0
        %v4871 = vsel %vm4843, %v4394, 0.0
        %v4872 = vsel %vm4844, %v4395, 0.0
        %v4873 = vsel %vm4845, %v4396, 0.0
        %v4874 = vsel %vm4846, %v4397, 0.0
        %v4875 = vsel %vm4847, %v4398, 0.0
        %v4876 = vsel %vm4848, %v4399, 0.0
        %v4877 = vsel %vm4849, %v4400, 0.0
        %v4878 = vsel %vm4850, %v4401, 0.0
        %v4879 = vsel %vm4851, %v4402, 0.0
        %v4880 = vsel %vm4852, %v4403, 0.0
        %v4881 = vsel %vm4853, %v4404, 0.0
        %v4882 = vsel %vm4854, %v4405, 0.0
        %v4883 = vsel %vm4855, %v4406, 0.0
        %v4884 = vsel %vm4856, %v4407, 0.0
        %v4885 = vadd.f32 %v4857, %v4858
        %v4886 = vadd.f32 %v4885, %v4859
        %v4887 = vadd.f32 %v4886, %v4860
        %v4888 = vadd.f32 %v4887, %v4861
        %v4889 = vadd.f32 %v4888, %v4862
        %v4890 = vadd.f32 %v4889, %v4863
        %v4891 = vadd.f32 %v4890, %v4864
        %v4892 = vadd.f32 %v4891, %v4865
        %v4893 = vadd.f32 %v4892, %v4866
        %v4894 = vadd.f32 %v4893, %v4867
        %v4895 = vadd.f32 %v4894, %v4868
        %v4896 = vadd.f32 %v4895, %v4869
        %v4897 = vadd.f32 %v4896, %v4870
        %v4898 = vadd.f32 %v4897, %v4871
        %v4899 = vadd.f32 %v4898, %v4872
        %v4900 = vadd.f32 %v4899, %v4873
        %v4901 = vadd.f32 %v4900, %v4874
        %v4902 = vadd.f32 %v4901, %v4875
        %v4903 = vadd.f32 %v4902, %v4876
        %v4904 = vadd.f32 %v4903, %v4877
        %v4905 = vadd.f32 %v4904, %v4878
        %v4906 = vadd.f32 %v4905, %v4879
        %v4907 = vadd.f32 %v4906, %v4880
        %v4908 = vadd.f32 %v4907, %v4881
        %v4909 = vadd.f32 %v4908, %v4882
        %v4910 = vadd.f32 %v4909, %v4883
        %v4911 = vadd.f32 %v4910, %v4884
        %v4912 = vrot.slane %v4911, 4
        %v4913 = vadd.f32 %v4911, %v4912
        %v4914 = vrot.slane %v4913, 2
        %v4915 = vadd.f32 %v4913, %v4914
        %v4916 = vrot.slane %v4915, 1
        %v4917 = vadd.f32 %v4915, %v4916
        %v4918 = vmul.f32 %v4857, %v4380
        %v4919 = vmul.f32 %v4858, %v4381
        %v4920 = vmul.f32 %v4859, %v4382
        %v4921 = vmul.f32 %v4860, %v4383
        %v4922 = vmul.f32 %v4861, %v4384
        %v4923 = vmul.f32 %v4862, %v4385
        %v4924 = vmul.f32 %v4863, %v4386
        %v4925 = vmul.f32 %v4864, %v4387
        %v4926 = vmul.f32 %v4865, %v4388
        %v4927 = vmul.f32 %v4866, %v4389
        %v4928 = vmul.f32 %v4867, %v4390
        %v4929 = vmul.f32 %v4868, %v4391
        %v4930 = vmul.f32 %v4869, %v4392
        %v4931 = vmul.f32 %v4870, %v4393
        %v4932 = vmul.f32 %v4871, %v4394
        %v4933 = vmul.f32 %v4872, %v4395
        %v4934 = vmul.f32 %v4873, %v4396
        %v4935 = vmul.f32 %v4874, %v4397
        %v4936 = vmul.f32 %v4875, %v4398
        %v4937 = vmul.f32 %v4876, %v4399
        %v4938 = vmul.f32 %v4877, %v4400
        %v4939 = vmul.f32 %v4878, %v4401
        %v4940 = vmul.f32 %v4879, %v4402
        %v4941 = vmul.f32 %v4880, %v4403
        %v4942 = vmul.f32 %v4881, %v4404
        %v4943 = vmul.f32 %v4882, %v4405
        %v4944 = vmul.f32 %v4883, %v4406
        %v4945 = vmul.f32 %v4884, %v4407
        %v4946 = vadd.f32 %v4918, %v4919
        %v4947 = vadd.f32 %v4946, %v4920
        %v4948 = vadd.f32 %v4947, %v4921
        %v4949 = vadd.f32 %v4948, %v4922
        %v4950 = vadd.f32 %v4949, %v4923
        %v4951 = vadd.f32 %v4950, %v4924
        %v4952 = vadd.f32 %v4951, %v4925
        %v4953 = vadd.f32 %v4952, %v4926
        %v4954 = vadd.f32 %v4953, %v4927
        %v4955 = vadd.f32 %v4954, %v4928
        %v4956 = vadd.f32 %v4955, %v4929
        %v4957 = vadd.f32 %v4956, %v4930
        %v4958 = vadd.f32 %v4957, %v4931
        %v4959 = vadd.f32 %v4958, %v4932
        %v4960 = vadd.f32 %v4959, %v4933
        %v4961 = vadd.f32 %v4960, %v4934
        %v4962 = vadd.f32 %v4961, %v4935
        %v4963 = vadd.f32 %v4962, %v4936
        %v4964 = vadd.f32 %v4963, %v4937
        %v4965 = vadd.f32 %v4964, %v4938
        %v4966 = vadd.f32 %v4965, %v4939
        %v4967 = vadd.f32 %v4966, %v4940
        %v4968 = vadd.f32 %v4967, %v4941
        %v4969 = vadd.f32 %v4968, %v4942
        %v4970 = vadd.f32 %v4969, %v4943
        %v4971 = vadd.f32 %v4970, %v4944
        %v4972 = vadd.f32 %v4971, %v4945
        %v4973 = vrot.slane %v4972, 4
        %v4974 = vadd.f32 %v4972, %v4973
        %v4975 = vrot.slane %v4974, 2
        %v4976 = vadd.f32 %v4974, %v4975
        %v4977 = vrot.slane %v4976, 1
        %v4978 = vadd.f32 %v4976, %v4977
        %v4979 = vmul.f32 %v4917, 0.0051020407
        %v4980 = vmul.f32 %v4978, 0.0051020407
        %v4981 = vmul.f32 %v4979, %v4979
        %v4982 = vsub.f32 %v4980, %v4981
        %v4983 = vmax.f32 %v4982, 0.0
        %v4984 = vadd.f32 %v4983, 1e-05
        %v4985 = vrsqrt.pop %v4984
        %v4986 = vld [vmem:[%s275] sm:$0x1]
        %v4987 = vmul.f32 %v4986, %v4985
        %v4988 = vld [vmem:[%s283] sm:$0x1]
        %v4989 = vmul.f32 %v4979, %v4987
        %v4990 = vsub.f32 %v4988, %v4989
        %v4992 = vlaneseq
        %v4993 = vshrl.u32 %v4992, 7
        %v4994 = vsub.s32 0, %v4993
        %v4995 = vrot.slane %v4987, %v4994
        %v4997 = vmul.f32 %v4380, %v4995
        %v4998 = vmul.f32 %v4381, %v4995
        %v4999 = vmul.f32 %v4382, %v4995
        %v5000 = vmul.f32 %v4383, %v4995
        %v5001 = vmul.f32 %v4384, %v4995
        %v5002 = vmul.f32 %v4385, %v4995
        %v5003 = vmul.f32 %v4386, %v4995
        %v5004 = vmul.f32 %v4387, %v4995
        %v5005 = vmul.f32 %v4388, %v4995
        %v5006 = vmul.f32 %v4389, %v4995
        %v5007 = vmul.f32 %v4390, %v4995
        %v5008 = vmul.f32 %v4391, %v4995
        %v5009 = vmul.f32 %v4392, %v4995
        %v5010 = vmul.f32 %v4393, %v4995
        %v5011 = vmul.f32 %v4394, %v4995
        %v5012 = vmul.f32 %v4395, %v4995
        %v5013 = vmul.f32 %v4396, %v4995
        %v5014 = vmul.f32 %v4397, %v4995
        %v5015 = vmul.f32 %v4398, %v4995
        %v5016 = vmul.f32 %v4399, %v4995
        %v5017 = vmul.f32 %v4400, %v4995
        %v5018 = vmul.f32 %v4401, %v4995
        %v5019 = vmul.f32 %v4402, %v4995
        %v5020 = vmul.f32 %v4403, %v4995
        %v5021 = vmul.f32 %v4404, %v4995
        %v5022 = vmul.f32 %v4405, %v4995
        %v5023 = vmul.f32 %v4406, %v4995
        %v5024 = vmul.f32 %v4407, %v4995
        %v5026 = vlaneseq
        %v5027 = vshrl.u32 %v5026, 7
        %v5028 = vsub.s32 0, %v5027
        %v5029 = vrot.slane %v4990, %v5028
        %v5031 = vadd.f32 %v4997, %v5029
        %v5032 = vadd.f32 %v4998, %v5029
        %v5033 = vadd.f32 %v4999, %v5029
        %v5034 = vadd.f32 %v5000, %v5029
        %v5035 = vadd.f32 %v5001, %v5029
        %v5036 = vadd.f32 %v5002, %v5029
        %v5037 = vadd.f32 %v5003, %v5029
        %v5038 = vadd.f32 %v5004, %v5029
        %v5039 = vadd.f32 %v5005, %v5029
        %v5040 = vadd.f32 %v5006, %v5029
        %v5041 = vadd.f32 %v5007, %v5029
        %v5042 = vadd.f32 %v5008, %v5029
        %v5043 = vadd.f32 %v5009, %v5029
        %v5044 = vadd.f32 %v5010, %v5029
        %v5045 = vadd.f32 %v5011, %v5029
        %v5046 = vadd.f32 %v5012, %v5029
        %v5047 = vadd.f32 %v5013, %v5029
        %v5048 = vadd.f32 %v5014, %v5029
        %v5049 = vadd.f32 %v5015, %v5029
        %v5050 = vadd.f32 %v5016, %v5029
        %v5051 = vadd.f32 %v5017, %v5029
        %v5052 = vadd.f32 %v5018, %v5029
        %v5053 = vadd.f32 %v5019, %v5029
        %v5054 = vadd.f32 %v5020, %v5029
        %v5055 = vadd.f32 %v5021, %v5029
        %v5056 = vadd.f32 %v5022, %v5029
        %v5057 = vadd.f32 %v5023, %v5029
        %v5058 = vadd.f32 %v5024, %v5029
        %v5059 = vmax.f32 %v5031, 0.0
        %v5060 = vmax.f32 %v5032, 0.0
        %v5061 = vmax.f32 %v5033, 0.0
        %v5062 = vmax.f32 %v5034, 0.0
        %v5063 = vmax.f32 %v5035, 0.0
        %v5064 = vmax.f32 %v5036, 0.0
        %v5065 = vmax.f32 %v5037, 0.0
        %v5066 = vmax.f32 %v5038, 0.0
        %v5067 = vmax.f32 %v5039, 0.0
        %v5068 = vmax.f32 %v5040, 0.0
        %v5069 = vmax.f32 %v5041, 0.0
        %v5070 = vmax.f32 %v5042, 0.0
        %v5071 = vmax.f32 %v5043, 0.0
        %v5072 = vmax.f32 %v5044, 0.0
        %v5073 = vmax.f32 %v5045, 0.0
        %v5074 = vmax.f32 %v5046, 0.0
        %v5075 = vmax.f32 %v5047, 0.0
        %v5076 = vmax.f32 %v5048, 0.0
        %v5077 = vmax.f32 %v5049, 0.0
        %v5078 = vmax.f32 %v5050, 0.0
        %v5079 = vmax.f32 %v5051, 0.0
        %v5080 = vmax.f32 %v5052, 0.0
        %v5081 = vmax.f32 %v5053, 0.0
        %v5082 = vmax.f32 %v5054, 0.0
        %v5083 = vmax.f32 %v5055, 0.0
        %v5084 = vmax.f32 %v5056, 0.0
        %v5085 = vmax.f32 %v5057, 0.0
        %v5086 = vmax.f32 %v5058, 0.0
        %5087 = vst [vmem:[%s320] sm:$0xff] %v5059
        %5088 = vst [vmem:[%s320 + $0x8] sm:$0xff] %v5060
        %5089 = vst [vmem:[%s320 + $0x10] sm:$0xff] %v5061
        %5090 = vst [vmem:[%s320 + $0x18] sm:$0xff] %v5062
        %5091 = vst [vmem:[%s320 + $0x20] sm:$0xff] %v5063
        %5092 = vst [vmem:[%s320 + $0x28] sm:$0xff] %v5064
        %5093 = vst [vmem:[%s320 + $0x30] sm:$0xff] %v5065
        %5094 = vst [vmem:[%s320 + $0x38] sm:$0xff] %v5066
        %5095 = vst [vmem:[%s320 + $0x40] sm:$0xff] %v5067
        %5096 = vst [vmem:[%s320 + $0x48] sm:$0xff] %v5068
        %5097 = vst [vmem:[%s320 + $0x50] sm:$0xff] %v5069
        %5098 = vst [vmem:[%s320 + $0x58] sm:$0xff] %v5070
        %5099 = vst [vmem:[%s320 + $0x60] sm:$0xff] %v5071
        %5100 = vst [vmem:[%s320 + $0x68] sm:$0xff] %v5072
        %5101 = vst [vmem:[%s320 + $0x70] sm:$0xff] %v5073
        %5102 = vst [vmem:[%s320 + $0x78] sm:$0xff] %v5074
        %5103 = vst [vmem:[%s320 + $0x80] sm:$0xff] %v5075
        %5104 = vst [vmem:[%s320 + $0x88] sm:$0xff] %v5076
        %5105 = vst [vmem:[%s320 + $0x90] sm:$0xff] %v5077
        %5106 = vst [vmem:[%s320 + $0x98] sm:$0xff] %v5078
        %5107 = vst [vmem:[%s320 + $0xa0] sm:$0xff] %v5079
        %5108 = vst [vmem:[%s320 + $0xa8] sm:$0xff] %v5080
        %5109 = vst [vmem:[%s320 + $0xb0] sm:$0xff] %v5081
        %5110 = vst [vmem:[%s320 + $0xb8] sm:$0xff] %v5082
        %5111 = vst [vmem:[%s320 + $0xc0] sm:$0xff] %v5083
        %5112 = vst [vmem:[%s320 + $0xc8] sm:$0xff] %v5084
        %5113 = vst [vmem:[%s320 + $0xd0] sm:$0xff] %v5085
        %5114 = vst [vmem:[%s320 + $0xd8] sm:$0xff] %v5086
        %s5115 = sand.u32 %s139, 1
        %s5116 = scalar_lea.sflag [#allocation5], %s5115
        %s5117 = sand.u32 %s139, 1
        %s5118 = smul.addr %s5117, 224
        %s5119 = scalar_lea.vmem [#allocation11], %s5118
        // Predicated region
        $region53: #{tpu_custom_call.1} parent=35 // pred_check
          %p5120 = pneg %p149
        $region54: #{tpu_custom_call.1} parent=35 // pred_check_branch
          %5122 = sbr.rel (%p5120) target = $region56
        $region55: #{tpu_custom_call.1} parent=35 // pred_region
          %s5124 = ssub.s32 3584, 3584
          %5125 = vsyncadd %s5116, %s5124
          %s5126 = smul.addr %s27, 28
          %s5127 = smul.addr %s5126, 128
          %s5128 = scalar_lea.hbm %s4, %s5127
          %s5129 = sshll.u32 %s5119, 4
          %s5130 = int_to_ptr.vmem [resolvable:$true] %s5129
          %5135 = dma.vmem_to_hbm [thread:$0]  %s5130, 3584, %s5128, %s5116, 128, 128, 8
        $region56: #{tpu_custom_call.1} parent=35 // pred_fallthru
          _
      $region36: #{tpu_custom_call.1} parent=5 // pred_fallthru
        _
      %p5136 = scmp.le.s32.totalorder 2, %s22
      // Predicated region
      $region57: #{tpu_custom_call.1} parent=5 // pred_check
        %p5137 = pneg %p5136
      $region58: #{tpu_custom_call.1} parent=5 // pred_check_branch
        %5139 = sbr.rel (%p5137) target = $region60
      $region59: #{tpu_custom_call.1} parent=5 // pred_region
        %s5140 = ssub.s32 %s22, 2
        // Predicated region
        $region61: #{tpu_custom_call.1} parent=59 // pred_check
          %p5141 = pneg %p155
        $region62: #{tpu_custom_call.1} parent=59 // pred_check_branch
          %5143 = sbr.rel (%p5141) target = $region64
        $region63: #{tpu_custom_call.1} parent=59 // pred_region
          %s5144 = sand.u32 %s140, 1
          %s5145 = scalar_lea.sflag [#allocation5], %s5144
          %s5146 = sand.u32 %s140, 1
          %s5147 = smul.addr %s5146, 224
          %s5148 = scalar_lea.vmem [#allocation11], %s5147
          %5149 = dma.done %s5145, 3584
        $region64: #{tpu_custom_call.1} parent=59 // pred_fallthru
          _
      $region60: #{tpu_custom_call.1} parent=5 // pred_fallthru
        _
    $region6: #{tpu_custom_call.1} parent=1 // loop_footer
      %s26 = sadd.s32 1, %s22
    $region7: #{tpu_custom_call.1} parent=1 // loop_footer_branch
      %21 = sbr.rel target = $region3
    $region8: #{tpu_custom_call.1} parent=1 // loop_exit
      _
    %5150 = vsyncpa [#allocation4], 1
    %s5151 = scalar_lea.sflag [#allocation4], 1
    %5152 = vsyncpa %s5151, 1
    %5153 = vsyncpa [#allocation7], 1
    %s5154 = scalar_lea.sflag [#allocation7], 1
    %5155 = vsyncpa %s5154, 1
    %5156 = vsyncpa [#allocation10], 1
    %s5157 = scalar_lea.sflag [#allocation10], 1
    %5158 = vsyncpa %s5157, 1
    %5159 = vsyncpa [#allocation5], 1
    %s5160 = scalar_lea.sflag [#allocation5], 1
    %5161 = vsyncpa %s5160, 1

</llo_original>
